<compile_context>
chip_gen: v6e
topology: v6e:2x2x1
jax: 0.10.0
libtpu: 0.0.40
codegen_flags: <defaults>
</compile_context>

<pallas_src>
import jax
import jax.numpy as jnp
from jax.experimental import pallas as pl
from jax.experimental.pallas import tpu as pltpu

LEAKY_SLOPE = 0.01   # PyTorch nn.LeakyReLU default negative_slope
BN_EPS = 1e-5        # PyTorch nn.BatchNorm1d default eps
LANE = 128           # TPU lane width; classifier output padded to this for dense stores
NEG_PAD = -1e30      # logit bias for padded class lanes -> exp() underflows to exactly 0


def _round_up(n, m=LANE):
    return ((n + m - 1) // m) * m


def _encoder_block(h, w, gamma, beta, inv_b):
    """Linear (bias-free, bf16 operands) -> BatchNorm1d(train) -> LeakyReLU.

    BatchNorm is folded into a single per-feature scale/shift and its statistics are
    computed in one pass.  Padded feature lanes have gamma = beta = 0, so their output
    is exactly 0 (and they contribute nothing to the next stage's zero-padded weights).
    The PyTorch Linear bias is intentionally omitted: training-mode BatchNorm subtracts
    the batch mean of (h @ W + b), so the bias cancels exactly.
    """
    z = jnp.dot(h.astype(jnp.bfloat16), w, preferred_element_type=jnp.float32)
    mean = jnp.sum(z, axis=0, keepdims=True) * inv_b
    var = jnp.sum(z * z, axis=0, keepdims=True) * inv_b - mean * mean  # biased batch var
    scale = gamma * jax.lax.rsqrt(var + BN_EPS)        # gamma / sqrt(var + eps)
    shift = beta - mean * scale                        # beta - mean * scale
    zn = z * scale + shift
    return jnp.maximum(zn, LEAKY_SLOPE * zn)           # LeakyReLU, slope in (0, 1)


def sae_kernel(x_ref, w1_ref, gb_ref,                  # auto-copied to VMEM
               w2_hbm, w3_hbm, wc_hbm,                 # left in HBM, manual DMA
               out_ref,
               w2_vmem, w3_vmem, wc_vmem, dma_sem):
    # Kick off the later-stage weight copies immediately so they overlap with the
    # stage-1 / stage-2 matmuls.
    cp2 = pltpu.make_async_copy(w2_hbm, w2_vmem, dma_sem.at[0])
    cp3 = pltpu.make_async_copy(w3_hbm, w3_vmem, dma_sem.at[1])
    cpc = pltpu.make_async_copy(wc_hbm, wc_vmem, dma_sem.at[2])
    cp2.start()
    cp3.start()
    cpc.start()

    inv_b = 1.0 / x_ref.shape[0]                       # static batch size
    n1 = w1_ref.shape[1]
    n2 = w2_vmem.shape[1]
    n3 = w3_vmem.shape[1]
    nc = wc_vmem.shape[1]

    h = _encoder_block(x_ref[...], w1_ref[...],
                       gb_ref[0:1, :n1], gb_ref[1:2, :n1], inv_b)
    cp2.wait()
    h = _encoder_block(h, w2_vmem[...],
                       gb_ref[2:3, :n2], gb_ref[3:4, :n2], inv_b)
    cp3.wait()
    h = _encoder_block(h, w3_vmem[...],
                       gb_ref[4:5, :n3], gb_ref[5:6, :n3], inv_b)
    cpc.wait()

    # Classifier: Linear -> Softmax over the lane-padded class axis.  Padded lanes carry
    # a -1e30 bias so their probability is exactly 0 after exp().
    logits = jnp.dot(h.astype(jnp.bfloat16), wc_vmem[...],
                     preferred_element_type=jnp.float32) + gb_ref[6:7, :nc]
    m = jnp.max(logits, axis=1, keepdims=True)
    e = jnp.exp(logits - m)
    denom = jnp.sum(e, axis=1, keepdims=True)
    # Exact reciprocal: negligible cost on a (B, 1) vector and keeps softmax rows summing
    # to 1 within f32 rounding; switch to pl.reciprocal(denom, approx=True) (EUP vrcp) if
    # ~1e-3 relative error on the probabilities is acceptable.
    out_ref[...] = e * pl.reciprocal(denom)


def _pad2(a, rows, cols, dtype):
    out = jnp.zeros((rows, cols), dtype)
    return out.at[:a.shape[0], :a.shape[1]].set(a.astype(dtype))


def stacked_autoencoder_forward(x, params):
    """Fused SAE forward.

    `params` uses natural shapes: w*: (in, out), b*: (out,), gamma/beta: (out,),
    wc: (hid3, C), bc: (C,).  Stage Linear biases are accepted but never sent to the
    kernel (training-mode BatchNorm cancels them exactly).
    """
    (w1, _b1, g1, be1,
     w2, _b2, g2, be2,
     w3, _b3, g3, be3,
     wc, bc) = params

    B, d_in = x.shape
    h1, h2, h3 = w1.shape[1], w2.shape[1], w3.shape[1]
    num_classes = wc.shape[1]
    assert num_classes <= LANE

    # Pad every feature dim to a multiple of 128 and ship the weights in bf16 (the kernel
    # is weight-DMA bound; accumulation and BN/softmax math stay in f32 inside the kernel).
    dp = _round_up(d_in)
    p1 = _round_up(h1)
    p2 = _round_up(h2)
    p3 = _round_up(h3)
    x_p = _pad2(x, B, dp, jnp.bfloat16)
    w1_p = _pad2(w1, dp, p1, jnp.bfloat16)
    w2_p = _pad2(w2, p1, p2, jnp.bfloat16)
    w3_p = _pad2(w3, p2, p3, jnp.bfloat16)
    wc_p = _pad2(wc, p3, LANE, jnp.bfloat16)

    # One (8, p1) f32 table, a single DMA: rows 0..5 = gamma/beta of stages 1..3 (zero in
    # the pad lanes, so padded activations stay exactly 0), row 6 = lane-padded classifier
    # bias (-1e30 in padded class lanes -> softmax prob 0), row 7 unused (sublane pad).
    gb = jnp.zeros((8, p1), jnp.float32)
    gb = gb.at[0, :h1].set(g1).at[1, :h1].set(be1)
    gb = gb.at[2, :h2].set(g2).at[3, :h2].set(be2)
    gb = gb.at[4, :h3].set(g3).at[5, :h3].set(be3)
    gb = gb.at[6, :LANE].set(NEG_PAD).at[6, :num_classes].set(bc)

    out_pad = pl.pallas_call(
        sae_kernel,
        out_shape=jax.ShapeDtypeStruct((B, LANE), jnp.float32),
        in_specs=[
            pl.BlockSpec(memory_space=pltpu.MemorySpace.VMEM),  # x
            pl.BlockSpec(memory_space=pltpu.MemorySpace.VMEM),  # w1
            pl.BlockSpec(memory_space=pltpu.MemorySpace.VMEM),  # gamma/beta/bias table
            pl.BlockSpec(memory_space=pl.ANY),                  # w2 (manual DMA)
            pl.BlockSpec(memory_space=pl.ANY),                  # w3 (manual DMA)
            pl.BlockSpec(memory_space=pl.ANY),                  # wc (manual DMA)
        ],
        out_specs=pl.BlockSpec(memory_space=pltpu.MemorySpace.VMEM),
        scratch_shapes=[
            pltpu.VMEM((p1, p2), jnp.bfloat16),
            pltpu.VMEM((p2, p3), jnp.bfloat16),
            pltpu.VMEM((p3, LANE), jnp.bfloat16),
            pltpu.SemaphoreType.DMA((3,)),
        ],
    )(x_p, w1_p, gb, w2_p, w3_p, wc_p)
    return out_pad[:, :num_classes]


def init_params(key, input_size, hidden_sizes, num_classes):
    """Deterministic synthetic parameters.  Linear weights stored as (in, out)."""
    sizes = [input_size] + list(hidden_sizes)
    keys = jax.random.split(key, 14)
    ki = 0
    params = []
    for li in range(3):
        fan_in, fan_out = sizes[li], sizes[li + 1]
        bound = 1.0 / jnp.sqrt(fan_in)
        w = jax.random.uniform(keys[ki], (fan_in, fan_out), jnp.float32, -bound, bound); ki += 1
        b = jax.random.uniform(keys[ki], (fan_out,), jnp.float32, -bound, bound); ki += 1
        # PyTorch inits gamma=1 / beta=0; perturb so the folded BN affine is exercised.
        gamma = 1.0 + 0.1 * jax.random.normal(keys[ki], (fan_out,), jnp.float32); ki += 1
        beta = 0.1 * jax.random.normal(keys[ki], (fan_out,), jnp.float32); ki += 1
        params += [w, b, gamma, beta]
    fan_in = hidden_sizes[-1]
    bound = 1.0 / jnp.sqrt(fan_in)
    wc = jax.random.uniform(keys[ki], (fan_in, num_classes), jnp.float32, -bound, bound); ki += 1
    bc = jax.random.uniform(keys[ki], (num_classes,), jnp.float32, -bound, bound); ki += 1
    params += [wc, bc]
    return tuple(params)


def reference_forward(x, params, low_precision=False):
    """Pure-JAX reference with the full PyTorch math (including stage Linear biases).
    low_precision=True mirrors the kernel's mixed precision (bf16 dot operands, f32
    accumulation / BN / softmax) so the kernel can be checked with a tight tolerance."""
    (w1, b1, g1, be1, w2, b2, g2, be2, w3, b3, g3, be3, wc, bc) = params

    def dot(a, b):
        if low_precision:
            a, b = a.astype(jnp.bfloat16), b.astype(jnp.bfloat16)
        return jnp.dot(a, b, preferred_element_type=jnp.float32)

    def enc(h, w, b, g, be):
        z = dot(h, w) + b
        mean = jnp.mean(z, axis=0, keepdims=True)
        var = jnp.mean((z - mean) ** 2, axis=0, keepdims=True)
        zn = (z - mean) / jnp.sqrt(var + BN_EPS) * g + be
        return jnp.where(zn >= 0, zn, LEAKY_SLOPE * zn)

    h = enc(x, w1, b1, g1, be1)
    h = enc(h, w2, b2, g2, be2)
    h = enc(h, w3, b3, g3, be3)
    logits = dot(h, wc) + bc
    return jax.nn.softmax(logits, axis=1)


if __name__ == "__main__":
    # Shapes from the module spec: input_size=500, hidden_sizes=[1000, 500, 100], 10 classes.
    batch = 16          # BatchNorm1d (training mode) needs batch >= 2; 16 keeps it small.
    input_size = 500
    hidden_sizes = [1000, 500, 100]
    num_classes = 10

    key = jax.random.PRNGKey(0)
    kx, kp = jax.random.split(key)
    x = jax.random.normal(kx, (batch, input_size), jnp.float32)
    params = init_params(kp, input_size, hidden_sizes, num_classes)

    out = jax.block_until_ready(stacked_autoencoder_forward(x, params))
    assert out.shape == (batch, num_classes)

    # Primary check: matched-precision reference (bf16 dot operands, full PyTorch math
    # incl. stage biases, two-pass BN).  Remaining deltas are accumulation order, the BN
    # scale/shift fold and the bias cancellation -> tight tolerance.
    ref_lp = reference_forward(x, params, low_precision=True)
    assert jnp.allclose(out, ref_lp, atol=2e-3, rtol=2e-3), "mismatch vs matched-precision reference"

    # Secondary sanity check: full-f32 reference.  Gap is bf16 weight/activation
    # quantization through K<=1024 matmuls and 3 BN stages (outputs are probabilities).
    ref_f32 = reference_forward(x, params, low_precision=False)
    assert float(jnp.max(jnp.abs(out - ref_f32))) < 5e-2, "bf16 quantization error too large"

    assert jnp.allclose(jnp.sum(out, axis=1), 1.0, atol=1e-4), "softmax rows must sum to 1"

    print("KERNEL_OK")
</pallas_src>

<mosaic_0001>
module attributes {stable_mosaic.version = 11 : i64} {
  func.func @sae_kernel(%arg0: memref<16x512xbf16, #tpu.memory_space<vmem>>, %arg1: memref<512x1024xbf16, #tpu.memory_space<vmem>>, %arg2: memref<8x1024xf32, #tpu.memory_space<vmem>>, %arg3: memref<1024x512xbf16, #tpu.memory_space<any>>, %arg4: memref<512x128xbf16, #tpu.memory_space<any>>, %arg5: memref<128x128xbf16, #tpu.memory_space<any>>, %arg6: memref<16x128xf32, #tpu.memory_space<vmem>>, %arg7: memref<1024x512xbf16, #tpu.memory_space<vmem>>, %arg8: memref<512x128xbf16, #tpu.memory_space<vmem>>, %arg9: memref<128x128xbf16, #tpu.memory_space<vmem>>, %arg10: memref<3x!tpu.dma_semaphore, #tpu.memory_space<semaphore_mem>>) attributes {dimension_semantics = [], scalar_prefetch = 0 : i64, scratch_operands = 4 : i64, tpu.core_type = #tpu.core_type<tc>} {
    %c0_i32 = arith.constant 0 : i32
    %0 = tpu.memref_slice %arg10[%c0_i32] : memref<3x!tpu.dma_semaphore, #tpu.memory_space<semaphore_mem>> -> memref<1x!tpu.dma_semaphore, #tpu.memory_space<semaphore_mem>>
    %1 = tpu.memref_squeeze %0 : memref<1x!tpu.dma_semaphore, #tpu.memory_space<semaphore_mem>> -> memref<!tpu.dma_semaphore, #tpu.memory_space<semaphore_mem>>
    tpu.enqueue_dma source(%arg3 : memref<1024x512xbf16, #tpu.memory_space<any>>) target(%arg7 : memref<1024x512xbf16, #tpu.memory_space<vmem>>) target_semaphore(%1 : memref<!tpu.dma_semaphore, #tpu.memory_space<semaphore_mem>>)
    %c1_i32 = arith.constant 1 : i32
    %2 = tpu.memref_slice %arg10[%c1_i32] : memref<3x!tpu.dma_semaphore, #tpu.memory_space<semaphore_mem>> -> memref<1x!tpu.dma_semaphore, #tpu.memory_space<semaphore_mem>>
    %3 = tpu.memref_squeeze %2 : memref<1x!tpu.dma_semaphore, #tpu.memory_space<semaphore_mem>> -> memref<!tpu.dma_semaphore, #tpu.memory_space<semaphore_mem>>
    tpu.enqueue_dma source(%arg4 : memref<512x128xbf16, #tpu.memory_space<any>>) target(%arg8 : memref<512x128xbf16, #tpu.memory_space<vmem>>) target_semaphore(%3 : memref<!tpu.dma_semaphore, #tpu.memory_space<semaphore_mem>>)
    %c2_i32 = arith.constant 2 : i32
    %4 = tpu.memref_slice %arg10[%c2_i32] : memref<3x!tpu.dma_semaphore, #tpu.memory_space<semaphore_mem>> -> memref<1x!tpu.dma_semaphore, #tpu.memory_space<semaphore_mem>>
    %5 = tpu.memref_squeeze %4 : memref<1x!tpu.dma_semaphore, #tpu.memory_space<semaphore_mem>> -> memref<!tpu.dma_semaphore, #tpu.memory_space<semaphore_mem>>
    tpu.enqueue_dma source(%arg5 : memref<128x128xbf16, #tpu.memory_space<any>>) target(%arg9 : memref<128x128xbf16, #tpu.memory_space<vmem>>) target_semaphore(%5 : memref<!tpu.dma_semaphore, #tpu.memory_space<semaphore_mem>>)
    %c0 = arith.constant 0 : index
    %c0_0 = arith.constant 0 : index
    %6 = vector.load %arg0[%c0, %c0_0] : memref<16x512xbf16, #tpu.memory_space<vmem>>, vector<16x512xbf16>
    %c0_1 = arith.constant 0 : index
    %c0_2 = arith.constant 0 : index
    %7 = vector.load %arg1[%c0_1, %c0_2] : memref<512x1024xbf16, #tpu.memory_space<vmem>>, vector<512x1024xbf16>
    %c0_3 = arith.constant 0 : index
    %c0_4 = arith.constant 0 : index
    %8 = vector.load %arg2[%c0_3, %c0_4] : memref<8x1024xf32, #tpu.memory_space<vmem>>, vector<1x1024xf32>
    %c1 = arith.constant 1 : index
    %c0_5 = arith.constant 0 : index
    %9 = vector.load %arg2[%c1, %c0_5] : memref<8x1024xf32, #tpu.memory_space<vmem>>, vector<1x1024xf32>
    %cst = arith.constant dense<0.000000e+00> : vector<16x1024xf32>
    %10 = tpu.matmul %6, %7, %cst {dimension_numbers = #tpu.dot_dimension_numbers<[1], [0], [0], [1], [0, 0, 1, 1], [], []>} : vector<16x512xbf16>, vector<512x1024xbf16>, vector<16x1024xf32> -> vector<16x1024xf32>
    %cst_6 = arith.constant dense<0.000000e+00> : vector<1024xf32>
    %11 = vector.multi_reduction <add>, %10, %cst_6 [0] : vector<16x1024xf32> to vector<1024xf32>
    %12 = vector.shape_cast %11 : vector<1024xf32> to vector<1x1024xf32>
    %cst_7 = arith.constant 6.250000e-02 : f32
    %13 = vector.broadcast %cst_7 : f32 to vector<1x1024xf32>
    %14 = arith.mulf %12, %13 : vector<1x1024xf32>
    %15 = arith.mulf %10, %10 : vector<16x1024xf32>
    %cst_8 = arith.constant dense<0.000000e+00> : vector<1024xf32>
    %16 = vector.multi_reduction <add>, %15, %cst_8 [0] : vector<16x1024xf32> to vector<1024xf32>
    %17 = vector.shape_cast %16 : vector<1024xf32> to vector<1x1024xf32>
    %cst_9 = arith.constant 6.250000e-02 : f32
    %18 = vector.broadcast %cst_9 : f32 to vector<1x1024xf32>
    %19 = arith.mulf %17, %18 : vector<1x1024xf32>
    %20 = arith.mulf %14, %14 : vector<1x1024xf32>
    %21 = arith.subf %19, %20 : vector<1x1024xf32>
    %cst_10 = arith.constant 9.99999974E-6 : f32
    %22 = vector.broadcast %cst_10 : f32 to vector<1x1024xf32>
    %23 = arith.addf %21, %22 : vector<1x1024xf32>
    %24 = math.rsqrt %23 : vector<1x1024xf32>
    %25 = arith.mulf %8, %24 : vector<1x1024xf32>
    %26 = arith.mulf %14, %25 : vector<1x1024xf32>
    %27 = arith.subf %9, %26 : vector<1x1024xf32>
    %28 = vector.broadcast %25 : vector<1x1024xf32> to vector<16x1024xf32>
    %29 = arith.mulf %10, %28 : vector<16x1024xf32>
    %30 = vector.broadcast %27 : vector<1x1024xf32> to vector<16x1024xf32>
    %31 = arith.addf %29, %30 : vector<16x1024xf32>
    %cst_11 = arith.constant 0.00999999977 : f32
    %32 = vector.broadcast %cst_11 : f32 to vector<16x1024xf32>
    %33 = arith.mulf %32, %31 : vector<16x1024xf32>
    %34 = arith.maximumf %31, %33 : vector<16x1024xf32>
    %c0_i32_12 = arith.constant 0 : i32
    %35 = tpu.memref_slice %arg10[%c0_i32_12] : memref<3x!tpu.dma_semaphore, #tpu.memory_space<semaphore_mem>> -> memref<1x!tpu.dma_semaphore, #tpu.memory_space<semaphore_mem>>
    %36 = tpu.memref_squeeze %35 : memref<1x!tpu.dma_semaphore, #tpu.memory_space<semaphore_mem>> -> memref<!tpu.dma_semaphore, #tpu.memory_space<semaphore_mem>>
    tpu.wait_dma2 semaphore(%36 : memref<!tpu.dma_semaphore, #tpu.memory_space<semaphore_mem>>) src(%arg3 : memref<1024x512xbf16, #tpu.memory_space<any>>) dst(%arg7 : memref<1024x512xbf16, #tpu.memory_space<vmem>>)
    %c0_13 = arith.constant 0 : index
    %c0_14 = arith.constant 0 : index
    %37 = vector.load %arg7[%c0_13, %c0_14] : memref<1024x512xbf16, #tpu.memory_space<vmem>>, vector<1024x512xbf16>
    %c2 = arith.constant 2 : index
    %c0_15 = arith.constant 0 : index
    %38 = vector.load %arg2[%c2, %c0_15] : memref<8x1024xf32, #tpu.memory_space<vmem>>, vector<1x512xf32>
    %c3 = arith.constant 3 : index
    %c0_16 = arith.constant 0 : index
    %39 = vector.load %arg2[%c3, %c0_16] : memref<8x1024xf32, #tpu.memory_space<vmem>>, vector<1x512xf32>
    %40 = arith.truncf %34 : vector<16x1024xf32> to vector<16x1024xbf16>
    %cst_17 = arith.constant dense<0.000000e+00> : vector<16x512xf32>
    %41 = tpu.matmul %40, %37, %cst_17 {dimension_numbers = #tpu.dot_dimension_numbers<[1], [0], [0], [1], [0, 0, 1, 1], [], []>} : vector<16x1024xbf16>, vector<1024x512xbf16>, vector<16x512xf32> -> vector<16x512xf32>
    %cst_18 = arith.constant dense<0.000000e+00> : vector<512xf32>
    %42 = vector.multi_reduction <add>, %41, %cst_18 [0] : vector<16x512xf32> to vector<512xf32>
    %43 = vector.shape_cast %42 : vector<512xf32> to vector<1x512xf32>
    %cst_19 = arith.constant 6.250000e-02 : f32
    %44 = vector.broadcast %cst_19 : f32 to vector<1x512xf32>
    %45 = arith.mulf %43, %44 : vector<1x512xf32>
    %46 = arith.mulf %41, %41 : vector<16x512xf32>
    %cst_20 = arith.constant dense<0.000000e+00> : vector<512xf32>
    %47 = vector.multi_reduction <add>, %46, %cst_20 [0] : vector<16x512xf32> to vector<512xf32>
    %48 = vector.shape_cast %47 : vector<512xf32> to vector<1x512xf32>
    %cst_21 = arith.constant 6.250000e-02 : f32
    %49 = vector.broadcast %cst_21 : f32 to vector<1x512xf32>
    %50 = arith.mulf %48, %49 : vector<1x512xf32>
    %51 = arith.mulf %45, %45 : vector<1x512xf32>
    %52 = arith.subf %50, %51 : vector<1x512xf32>
    %cst_22 = arith.constant 9.99999974E-6 : f32
    %53 = vector.broadcast %cst_22 : f32 to vector<1x512xf32>
    %54 = arith.addf %52, %53 : vector<1x512xf32>
    %55 = math.rsqrt %54 : vector<1x512xf32>
    %56 = arith.mulf %38, %55 : vector<1x512xf32>
    %57 = arith.mulf %45, %56 : vector<1x512xf32>
    %58 = arith.subf %39, %57 : vector<1x512xf32>
    %59 = vector.broadcast %56 : vector<1x512xf32> to vector<16x512xf32>
    %60 = arith.mulf %41, %59 : vector<16x512xf32>
    %61 = vector.broadcast %58 : vector<1x512xf32> to vector<16x512xf32>
    %62 = arith.addf %60, %61 : vector<16x512xf32>
    %cst_23 = arith.constant 0.00999999977 : f32
    %63 = vector.broadcast %cst_23 : f32 to vector<16x512xf32>
    %64 = arith.mulf %63, %62 : vector<16x512xf32>
    %65 = arith.maximumf %62, %64 : vector<16x512xf32>
    %c1_i32_24 = arith.constant 1 : i32
    %66 = tpu.memref_slice %arg10[%c1_i32_24] : memref<3x!tpu.dma_semaphore, #tpu.memory_space<semaphore_mem>> -> memref<1x!tpu.dma_semaphore, #tpu.memory_space<semaphore_mem>>
    %67 = tpu.memref_squeeze %66 : memref<1x!tpu.dma_semaphore, #tpu.memory_space<semaphore_mem>> -> memref<!tpu.dma_semaphore, #tpu.memory_space<semaphore_mem>>
    tpu.wait_dma2 semaphore(%67 : memref<!tpu.dma_semaphore, #tpu.memory_space<semaphore_mem>>) src(%arg4 : memref<512x128xbf16, #tpu.memory_space<any>>) dst(%arg8 : memref<512x128xbf16, #tpu.memory_space<vmem>>)
    %c0_25 = arith.constant 0 : index
    %c0_26 = arith.constant 0 : index
    %68 = vector.load %arg8[%c0_25, %c0_26] : memref<512x128xbf16, #tpu.memory_space<vmem>>, vector<512x128xbf16>
    %c4 = arith.constant 4 : index
    %c0_27 = arith.constant 0 : index
    %69 = vector.load %arg2[%c4, %c0_27] : memref<8x1024xf32, #tpu.memory_space<vmem>>, vector<1x128xf32>
    %c5 = arith.constant 5 : index
    %c0_28 = arith.constant 0 : index
    %70 = vector.load %arg2[%c5, %c0_28] : memref<8x1024xf32, #tpu.memory_space<vmem>>, vector<1x128xf32>
    %71 = arith.truncf %65 : vector<16x512xf32> to vector<16x512xbf16>
    %cst_29 = arith.constant dense<0.000000e+00> : vector<16x128xf32>
    %72 = tpu.matmul %71, %68, %cst_29 {dimension_numbers = #tpu.dot_dimension_numbers<[1], [0], [0], [1], [0, 0, 1, 1], [], []>} : vector<16x512xbf16>, vector<512x128xbf16>, vector<16x128xf32> -> vector<16x128xf32>
    %cst_30 = arith.constant dense<0.000000e+00> : vector<128xf32>
    %73 = vector.multi_reduction <add>, %72, %cst_30 [0] : vector<16x128xf32> to vector<128xf32>
    %74 = vector.shape_cast %73 : vector<128xf32> to vector<1x128xf32>
    %cst_31 = arith.constant 6.250000e-02 : f32
    %75 = vector.broadcast %cst_31 : f32 to vector<1x128xf32>
    %76 = arith.mulf %74, %75 : vector<1x128xf32>
    %77 = arith.mulf %72, %72 : vector<16x128xf32>
    %cst_32 = arith.constant dense<0.000000e+00> : vector<128xf32>
    %78 = vector.multi_reduction <add>, %77, %cst_32 [0] : vector<16x128xf32> to vector<128xf32>
    %79 = vector.shape_cast %78 : vector<128xf32> to vector<1x128xf32>
    %cst_33 = arith.constant 6.250000e-02 : f32
    %80 = vector.broadcast %cst_33 : f32 to vector<1x128xf32>
    %81 = arith.mulf %79, %80 : vector<1x128xf32>
    %82 = arith.mulf %76, %76 : vector<1x128xf32>
    %83 = arith.subf %81, %82 : vector<1x128xf32>
    %cst_34 = arith.constant 9.99999974E-6 : f32
    %84 = vector.broadcast %cst_34 : f32 to vector<1x128xf32>
    %85 = arith.addf %83, %84 : vector<1x128xf32>
    %86 = math.rsqrt %85 : vector<1x128xf32>
    %87 = arith.mulf %69, %86 : vector<1x128xf32>
    %88 = arith.mulf %76, %87 : vector<1x128xf32>
    %89 = arith.subf %70, %88 : vector<1x128xf32>
    %90 = vector.broadcast %87 : vector<1x128xf32> to vector<16x128xf32>
    %91 = arith.mulf %72, %90 : vector<16x128xf32>
    %92 = vector.broadcast %89 : vector<1x128xf32> to vector<16x128xf32>
    %93 = arith.addf %91, %92 : vector<16x128xf32>
    %cst_35 = arith.constant 0.00999999977 : f32
    %94 = vector.broadcast %cst_35 : f32 to vector<16x128xf32>
    %95 = arith.mulf %94, %93 : vector<16x128xf32>
    %96 = arith.maximumf %93, %95 : vector<16x128xf32>
    %c2_i32_36 = arith.constant 2 : i32
    %97 = tpu.memref_slice %arg10[%c2_i32_36] : memref<3x!tpu.dma_semaphore, #tpu.memory_space<semaphore_mem>> -> memref<1x!tpu.dma_semaphore, #tpu.memory_space<semaphore_mem>>
    %98 = tpu.memref_squeeze %97 : memref<1x!tpu.dma_semaphore, #tpu.memory_space<semaphore_mem>> -> memref<!tpu.dma_semaphore, #tpu.memory_space<semaphore_mem>>
    tpu.wait_dma2 semaphore(%98 : memref<!tpu.dma_semaphore, #tpu.memory_space<semaphore_mem>>) src(%arg5 : memref<128x128xbf16, #tpu.memory_space<any>>) dst(%arg9 : memref<128x128xbf16, #tpu.memory_space<vmem>>)
    %99 = arith.truncf %96 : vector<16x128xf32> to vector<16x128xbf16>
    %c0_37 = arith.constant 0 : index
    %c0_38 = arith.constant 0 : index
    %100 = vector.load %arg9[%c0_37, %c0_38] : memref<128x128xbf16, #tpu.memory_space<vmem>>, vector<128x128xbf16>
    %cst_39 = arith.constant dense<0.000000e+00> : vector<16x128xf32>
    %101 = tpu.matmul %99, %100, %cst_39 {dimension_numbers = #tpu.dot_dimension_numbers<[1], [0], [0], [1], [0, 0, 1, 1], [], []>} : vector<16x128xbf16>, vector<128x128xbf16>, vector<16x128xf32> -> vector<16x128xf32>
    %c6 = arith.constant 6 : index
    %c0_40 = arith.constant 0 : index
    %102 = vector.load %arg2[%c6, %c0_40] : memref<8x1024xf32, #tpu.memory_space<vmem>>, vector<1x128xf32>
    %103 = vector.broadcast %102 : vector<1x128xf32> to vector<16x128xf32>
    %104 = arith.addf %101, %103 : vector<16x128xf32>
    %cst_41 = arith.constant dense<0xFF800000> : vector<16xf32>
    %105 = vector.multi_reduction <maximumf>, %104, %cst_41 [1] : vector<16x128xf32> to vector<16xf32>
    %106 = vector.shape_cast %105 : vector<16xf32> to vector<16x1xf32>
    %107 = vector.broadcast %106 : vector<16x1xf32> to vector<16x128xf32>
    %108 = arith.subf %104, %107 : vector<16x128xf32>
    %109 = math.exp %108 : vector<16x128xf32>
    %cst_42 = arith.constant dense<0.000000e+00> : vector<16xf32>
    %110 = vector.multi_reduction <add>, %109, %cst_42 [1] : vector<16x128xf32> to vector<16xf32>
    %111 = vector.shape_cast %110 : vector<16xf32> to vector<16x1xf32>
    %112 = tpu.reciprocal %111 : vector<16x1xf32> -> vector<16x1xf32>
    %113 = vector.broadcast %112 : vector<16x1xf32> to vector<16x128xf32>
    %114 = arith.mulf %109, %113 : vector<16x128xf32>
    %c0_43 = arith.constant 0 : index
    %c0_44 = arith.constant 0 : index
    %115 = vector.load %arg6[%c0_43, %c0_44] : memref<16x128xf32, #tpu.memory_space<vmem>>, vector<16x128xf32>
    tpu.vector_store %arg6[%c0_43, %c0_44], %114 {strides = array<i32>} : memref<16x128xf32, #tpu.memory_space<vmem>>, vector<16x128xf32>,
    return
  }
}

</mosaic_0001>

<llo_original>
// kernel: tpu_custom_call.1
$region0: #{tpu_custom_call.1}
  #allocation0 [shape = 'u32[]', space=smem, size = 0x4, offset = 0x4, fixed_abs, tag = 'smem constant byte address 0x4 - core index']
  #allocation1 [shape = 'u32[144,128]{1,0:T(1,128)}', space=vmem, size = 0x12000, scoped, tag = 'internal scratch']
  #allocation2 [shape = 'bf16[1024,512]{1,0:T(8,128)(2,1)}', space=vmem, size = 0x100000, scoped, tag = 'scratch operand']
  #allocation3 [shape = 'bf16[512,128]{1,0:T(8,128)(2,1)}', space=vmem, size = 0x20000, scoped, tag = 'scratch operand']
  #allocation4 [shape = 'bf16[128,128]{1,0:T(8,128)(2,1)}', space=vmem, size = 0x8000, scoped, tag = 'scratch operand']
  #allocation5 [shape = 's32[3]{0}', space=sflag, size = 0xc, scoped, tag = 'scratch operand']
  #allocation13 [shape = 's32[]', space=sflag, size = 0x4, offset = 0, fixed_abs, tag = 'sflag constant byte address 0x0 - dummy sync flag']
  #allocation14 [shape = 's32[]', space=sflag, size = 0x4, offset = 0, fixed_abs, tag = 'sflag constant byte address 0x0 - dummy sync flag']
  #allocation15 [shape = 'u32[]', space=smem, size = 0x4, offset = 0x44, fixed_abs, tag = 'smem constant byte address 0x44 - assertion arg 0']
  #allocation16 [shape = 'u32[]', space=smem, size = 0x4, offset = 0x48, fixed_abs, tag = 'smem constant byte address 0x48 - assertion arg 1']
  #allocation17 [shape = 's32[]', space=sflag, size = 0x4, offset = 0, fixed_abs, tag = 'sflag constant byte address 0x0 - dummy sync flag']
  #allocation18 [shape = 's32[]', space=sflag, size = 0x4, offset = 0, fixed_abs, tag = 'sflag constant byte address 0x0 - dummy sync flag']
  #allocation19 [shape = 's32[]', space=sflag, size = 0x4, offset = 0, fixed_abs, tag = 'sflag constant byte address 0x0 - dummy sync flag']
  #allocation20 [shape = 's32[]', space=sflag, size = 0x4, offset = 0, fixed_abs, tag = 'sflag constant byte address 0x0 - dummy sync flag']
  %s0 = inlined_call_operand.hbm [shape: bf16[16,512], index: 0, kind: input, shape index: {}]
  %s1 = inlined_call_operand.hbm [shape: bf16[512,1024], index: 1, kind: input, shape index: {}]
  %s2 = inlined_call_operand.hbm [shape: f32[8,1024], index: 2, kind: input, shape index: {}]
  %s3 = inlined_call_operand.hbm [shape: bf16[1024,512], index: 3, kind: input, shape index: {}]
  %s4 = inlined_call_operand.hbm [shape: bf16[512,128], index: 4, kind: input, shape index: {}]
  %s5 = inlined_call_operand.hbm [shape: bf16[128,128], index: 5, kind: input, shape index: {}]
  %s6 = inlined_call_operand.hbm [shape: f32[16,128], index: 6, kind: output, shape index: {}]
  %s7 = sld [smem:[#allocation0]]
  $region46: #{tpu_custom_call.1} parent=0
    _
  %s9 = ssub.s32 1, %s7
  %s10 = scalar_select 0, %s9, %s7
  $region1: #{tpu_custom_call.1} parent=0
    #allocation6 [shape = 'u8[16384]{0}', space=vmem, size = 0x4000, scoped, tag = 'input window, operand 0, single buffered']
    #allocation7 [shape = 's32[1]{0}', space=sflag, size = 0x4, scoped, tag = 'scoped memory for tpu_custom_call.1']
    #allocation8 [shape = 's32[1]{0}', space=sflag, size = 0x4, scoped, tag = 'scoped memory for tpu_custom_call.1']
    #allocation9 [shape = 'u8[1048576]{0}', space=vmem, size = 0x100000, scoped, tag = 'input window, operand 1, single buffered']
    #allocation10 [shape = 's32[1]{0}', space=sflag, size = 0x4, scoped, tag = 'scoped memory for tpu_custom_call.1']
    #allocation11 [shape = 'u8[32768]{0}', space=vmem, size = 0x8000, scoped, tag = 'input window, operand 2, single buffered']
    #allocation12 [shape = 'u8[8192]{0}', space=vmem, size = 0x2000, scoped, tag = 'output window, operand 0, single buffered']
    %11 = vsyncpa [#allocation7], 0
    %12 = vsyncpa [#allocation10], 0
    %13 = vsyncpa [#allocation8], 0
    // Predicated region
    $region2: #{tpu_custom_call.1} parent=1 // pred_check
      _
    $region3: #{tpu_custom_call.1} parent=1 // pred_check_branch
      %15 = sbr.rel (0) target = $region5
    $region4: #{tpu_custom_call.1} parent=1 // pred_region
      %s17 = ssub.s32 512, 512
      %18 = vsyncadd [#allocation7], %s17
      %s19 = sshll.u32 [#allocation6], 4
      %s20 = int_to_ptr.vmem [resolvable:$true] %s19
      %25 = dma.hbm_to_vmem [thread:$0]  %s0, 512, %s20, [#allocation7], 256, 256, 16
    $region5: #{tpu_custom_call.1} parent=1 // pred_fallthru
      _
    // Predicated region
    $region6: #{tpu_custom_call.1} parent=1 // pred_check
      _
    $region7: #{tpu_custom_call.1} parent=1 // pred_check_branch
      %27 = sbr.rel (0) target = $region9
    $region8: #{tpu_custom_call.1} parent=1 // pred_region
      %s29 = ssub.s32 32768, 32768
      %30 = vsyncadd [#allocation10], %s29
      %s31 = sshll.u32 [#allocation9], 4
      %s32 = int_to_ptr.vmem [resolvable:$true] %s31
      %37 = dma.hbm_to_vmem [thread:$0]  %s1, 32768, %s32, [#allocation10], 512, 512, 32
    $region9: #{tpu_custom_call.1} parent=1 // pred_fallthru
      _
    // Predicated region
    $region10: #{tpu_custom_call.1} parent=1 // pred_check
      _
    $region11: #{tpu_custom_call.1} parent=1 // pred_check_branch
      %39 = sbr.rel (0) target = $region13
    $region12: #{tpu_custom_call.1} parent=1 // pred_region
      %s41 = ssub.s32 1024, 1024
      %42 = vsyncadd [#allocation10], %s41
      %s44 = sshll.u32 [#allocation11], 4
      %s45 = int_to_ptr.vmem [resolvable:$true] %s44
      %47 = dma.hbm_to_vmem [thread:$0]  %s2, 1024, %s45, [#allocation10]
    $region13: #{tpu_custom_call.1} parent=1 // pred_fallthru
      _
    // Predicated region
    $region14: #{tpu_custom_call.1} parent=1 // pred_check
      _
    $region15: #{tpu_custom_call.1} parent=1 // pred_check_branch
      %49 = sbr.rel (0) target = $region17
    $region16: #{tpu_custom_call.1} parent=1 // pred_region
      %50 = dma.done [#allocation7], 512
    $region17: #{tpu_custom_call.1} parent=1 // pred_fallthru
      _
    // Predicated region
    $region18: #{tpu_custom_call.1} parent=1 // pred_check
      _
    $region19: #{tpu_custom_call.1} parent=1 // pred_check_branch
      %52 = sbr.rel (0) target = $region21
    $region20: #{tpu_custom_call.1} parent=1 // pred_region
      %53 = dma.done [#allocation10], 32768
    $region21: #{tpu_custom_call.1} parent=1 // pred_fallthru
      _
    // Predicated region
    $region22: #{tpu_custom_call.1} parent=1 // pred_check
      _
    $region23: #{tpu_custom_call.1} parent=1 // pred_check_branch
      %55 = sbr.rel (0) target = $region25
    $region24: #{tpu_custom_call.1} parent=1 // pred_region
      %56 = dma.done [#allocation10], 1024
    $region25: #{tpu_custom_call.1} parent=1 // pred_fallthru
      _
    // Predicated region
    $region26: #{tpu_custom_call.1} parent=1 // pred_check
      _
    $region27: #{tpu_custom_call.1} parent=1 // pred_check_branch
      %59 = sbr.rel target = $region29
    $region28: #{tpu_custom_call.1} parent=1 // pred_region
      %60 = sst [smem:[#allocation15]] [#allocation14]
      %61 = sst [smem:[#allocation16]] [#allocation13]
    $region29: #{tpu_custom_call.1} parent=1 // pred_fallthru
      _
    %63 = shalt.err (0)
    %s65 = sshll.u32 [#allocation2], 4
    %s66 = int_to_ptr.vmem [resolvable:$true] %s65
    %68 = dma.hbm_to_vmem [thread:$0]  %s3, 32768, %s66, [#allocation5]
    %s69 = scalar_lea.sflag [#allocation5], 1
    // Predicated region
    $region30: #{tpu_custom_call.1} parent=1 // pred_check
      _
    $region31: #{tpu_custom_call.1} parent=1 // pred_check_branch
      %71 = sbr.rel target = $region33
    $region32: #{tpu_custom_call.1} parent=1 // pred_region
      %72 = sst [smem:[#allocation15]] [#allocation18]
      %73 = sst [smem:[#allocation16]] [#allocation17]
    $region33: #{tpu_custom_call.1} parent=1 // pred_fallthru
      _
    %75 = shalt.err (0)
    %s77 = sshll.u32 [#allocation3], 4
    %s78 = int_to_ptr.vmem [resolvable:$true] %s77
    %80 = dma.hbm_to_vmem [thread:$0]  %s4, 4096, %s78, %s69
    %s81 = scalar_lea.sflag [#allocation5], 2
    // Predicated region
    $region34: #{tpu_custom_call.1} parent=1 // pred_check
      _
    $region35: #{tpu_custom_call.1} parent=1 // pred_check_branch
      %83 = sbr.rel target = $region37
    $region36: #{tpu_custom_call.1} parent=1 // pred_region
      %84 = sst [smem:[#allocation15]] [#allocation20]
      %85 = sst [smem:[#allocation16]] [#allocation19]
    $region37: #{tpu_custom_call.1} parent=1 // pred_fallthru
      _
    %87 = shalt.err (0)
    %s89 = sshll.u32 [#allocation4], 4
    %s90 = int_to_ptr.vmem [resolvable:$true] %s89
    %92 = dma.hbm_to_vmem [thread:$0]  %s5, 1024, %s90, %s81
    %v93 = vld [vmem:[#allocation6] sm:$0xff]
    %v94 = vld [vmem:[#allocation6 + $0x8] sm:$0xff]
    %v95 = vld [vmem:[#allocation6 + $0x10] sm:$0xff]
    %v96 = vld [vmem:[#allocation6 + $0x18] sm:$0xff]
    %v97 = vld [vmem:[#allocation9] sm:$0xff]
    %v98 = vld [vmem:[#allocation9 + $0x8] sm:$0xff]
    %v99 = vld [vmem:[#allocation9 + $0x10] sm:$0xff]
    %v100 = vld [vmem:[#allocation9 + $0x18] sm:$0xff]
    %v101 = vld [vmem:[#allocation9 + $0x20] sm:$0xff]
    %v102 = vld [vmem:[#allocation9 + $0x28] sm:$0xff]
    %v103 = vld [vmem:[#allocation9 + $0x30] sm:$0xff]
    %v104 = vld [vmem:[#allocation9 + $0x38] sm:$0xff]
    %v105 = vld [vmem:[#allocation9 + $0x40] sm:$0xff]
    %v106 = vld [vmem:[#allocation9 + $0x48] sm:$0xff]
    %v107 = vld [vmem:[#allocation9 + $0x50] sm:$0xff]
    %v108 = vld [vmem:[#allocation9 + $0x58] sm:$0xff]
    %v109 = vld [vmem:[#allocation9 + $0x60] sm:$0xff]
    %v110 = vld [vmem:[#allocation9 + $0x68] sm:$0xff]
    %v111 = vld [vmem:[#allocation9 + $0x70] sm:$0xff]
    %v112 = vld [vmem:[#allocation9 + $0x78] sm:$0xff]
    %v113 = vld [vmem:[#allocation9 + $0x80] sm:$0xff]
    %v114 = vld [vmem:[#allocation9 + $0x88] sm:$0xff]
    %v115 = vld [vmem:[#allocation9 + $0x90] sm:$0xff]
    %v116 = vld [vmem:[#allocation9 + $0x98] sm:$0xff]
    %v117 = vld [vmem:[#allocation9 + $0xa0] sm:$0xff]
    %v118 = vld [vmem:[#allocation9 + $0xa8] sm:$0xff]
    %v119 = vld [vmem:[#allocation9 + $0xb0] sm:$0xff]
    %v120 = vld [vmem:[#allocation9 + $0xb8] sm:$0xff]
    %v121 = vld [vmem:[#allocation9 + $0xc0] sm:$0xff]
    %v122 = vld [vmem:[#allocation9 + $0xc8] sm:$0xff]
    %v123 = vld [vmem:[#allocation9 + $0xd0] sm:$0xff]
    %v124 = vld [vmem:[#allocation9 + $0xd8] sm:$0xff]
    %v125 = vld [vmem:[#allocation9 + $0xe0] sm:$0xff]
    %v126 = vld [vmem:[#allocation9 + $0xe8] sm:$0xff]
    %v127 = vld [vmem:[#allocation9 + $0xf0] sm:$0xff]
    %v128 = vld [vmem:[#allocation9 + $0xf8] sm:$0xff]
    %v129 = vld [vmem:[#allocation9 + $0x100] sm:$0xff]
    %v130 = vld [vmem:[#allocation9 + $0x108] sm:$0xff]
    %v131 = vld [vmem:[#allocation9 + $0x110] sm:$0xff]
    %v132 = vld [vmem:[#allocation9 + $0x118] sm:$0xff]
    %v133 = vld [vmem:[#allocation9 + $0x120] sm:$0xff]
    %v134 = vld [vmem:[#allocation9 + $0x128] sm:$0xff]
    %v135 = vld [vmem:[#allocation9 + $0x130] sm:$0xff]
    %v136 = vld [vmem:[#allocation9 + $0x138] sm:$0xff]
    %v137 = vld [vmem:[#allocation9 + $0x140] sm:$0xff]
    %v138 = vld [vmem:[#allocation9 + $0x148] sm:$0xff]
    %v139 = vld [vmem:[#allocation9 + $0x150] sm:$0xff]
    %v140 = vld [vmem:[#allocation9 + $0x158] sm:$0xff]
    %v141 = vld [vmem:[#allocation9 + $0x160] sm:$0xff]
    %v142 = vld [vmem:[#allocation9 + $0x168] sm:$0xff]
    %v143 = vld [vmem:[#allocation9 + $0x170] sm:$0xff]
    %v144 = vld [vmem:[#allocation9 + $0x178] sm:$0xff]
    %v145 = vld [vmem:[#allocation9 + $0x180] sm:$0xff]
    %v146 = vld [vmem:[#allocation9 + $0x188] sm:$0xff]
    %v147 = vld [vmem:[#allocation9 + $0x190] sm:$0xff]
    %v148 = vld [vmem:[#allocation9 + $0x198] sm:$0xff]
    %v149 = vld [vmem:[#allocation9 + $0x1a0] sm:$0xff]
    %v150 = vld [vmem:[#allocation9 + $0x1a8] sm:$0xff]
    %v151 = vld [vmem:[#allocation9 + $0x1b0] sm:$0xff]
    %v152 = vld [vmem:[#allocation9 + $0x1b8] sm:$0xff]
    %v153 = vld [vmem:[#allocation9 + $0x1c0] sm:$0xff]
    %v154 = vld [vmem:[#allocation9 + $0x1c8] sm:$0xff]
    %v155 = vld [vmem:[#allocation9 + $0x1d0] sm:$0xff]
    %v156 = vld [vmem:[#allocation9 + $0x1d8] sm:$0xff]
    %v157 = vld [vmem:[#allocation9 + $0x1e0] sm:$0xff]
    %v158 = vld [vmem:[#allocation9 + $0x1e8] sm:$0xff]
    %v159 = vld [vmem:[#allocation9 + $0x1f0] sm:$0xff]
    %v160 = vld [vmem:[#allocation9 + $0x1f8] sm:$0xff]
    %v161 = vld [vmem:[#allocation9 + $0x200] sm:$0xff]
    %v162 = vld [vmem:[#allocation9 + $0x208] sm:$0xff]
    %v163 = vld [vmem:[#allocation9 + $0x210] sm:$0xff]
    %v164 = vld [vmem:[#allocation9 + $0x218] sm:$0xff]
    %v165 = vld [vmem:[#allocation9 + $0x220] sm:$0xff]
    %v166 = vld [vmem:[#allocation9 + $0x228] sm:$0xff]
    %v167 = vld [vmem:[#allocation9 + $0x230] sm:$0xff]
    %v168 = vld [vmem:[#allocation9 + $0x238] sm:$0xff]
    %v169 = vld [vmem:[#allocation9 + $0x240] sm:$0xff]
    %v170 = vld [vmem:[#allocation9 + $0x248] sm:$0xff]
    %v171 = vld [vmem:[#allocation9 + $0x250] sm:$0xff]
    %v172 = vld [vmem:[#allocation9 + $0x258] sm:$0xff]
    %v173 = vld [vmem:[#allocation9 + $0x260] sm:$0xff]
    %v174 = vld [vmem:[#allocation9 + $0x268] sm:$0xff]
    %v175 = vld [vmem:[#allocation9 + $0x270] sm:$0xff]
    %v176 = vld [vmem:[#allocation9 + $0x278] sm:$0xff]
    %v177 = vld [vmem:[#allocation9 + $0x280] sm:$0xff]
    %v178 = vld [vmem:[#allocation9 + $0x288] sm:$0xff]
    %v179 = vld [vmem:[#allocation9 + $0x290] sm:$0xff]
    %v180 = vld [vmem:[#allocation9 + $0x298] sm:$0xff]
    %v181 = vld [vmem:[#allocation9 + $0x2a0] sm:$0xff]
    %v182 = vld [vmem:[#allocation9 + $0x2a8] sm:$0xff]
    %v183 = vld [vmem:[#allocation9 + $0x2b0] sm:$0xff]
    %v184 = vld [vmem:[#allocation9 + $0x2b8] sm:$0xff]
    %v185 = vld [vmem:[#allocation9 + $0x2c0] sm:$0xff]
    %v186 = vld [vmem:[#allocation9 + $0x2c8] sm:$0xff]
    %v187 = vld [vmem:[#allocation9 + $0x2d0] sm:$0xff]
    %v188 = vld [vmem:[#allocation9 + $0x2d8] sm:$0xff]
    %v189 = vld [vmem:[#allocation9 + $0x2e0] sm:$0xff]
    %v190 = vld [vmem:[#allocation9 + $0x2e8] sm:$0xff]
    %v191 = vld [vmem:[#allocation9 + $0x2f0] sm:$0xff]
    %v192 = vld [vmem:[#allocation9 + $0x2f8] sm:$0xff]
    %v193 = vld [vmem:[#allocation9 + $0x300] sm:$0xff]
    %v194 = vld [vmem:[#allocation9 + $0x308] sm:$0xff]
    %v195 = vld [vmem:[#allocation9 + $0x310] sm:$0xff]
    %v196 = vld [vmem:[#allocation9 + $0x318] sm:$0xff]
    %v197 = vld [vmem:[#allocation9 + $0x320] sm:$0xff]
    %v198 = vld [vmem:[#allocation9 + $0x328] sm:$0xff]
    %v199 = vld [vmem:[#allocation9 + $0x330] sm:$0xff]
    %v200 = vld [vmem:[#allocation9 + $0x338] sm:$0xff]
    %v201 = vld [vmem:[#allocation9 + $0x340] sm:$0xff]
    %v202 = vld [vmem:[#allocation9 + $0x348] sm:$0xff]
    %v203 = vld [vmem:[#allocation9 + $0x350] sm:$0xff]
    %v204 = vld [vmem:[#allocation9 + $0x358] sm:$0xff]
    %v205 = vld [vmem:[#allocation9 + $0x360] sm:$0xff]
    %v206 = vld [vmem:[#allocation9 + $0x368] sm:$0xff]
    %v207 = vld [vmem:[#allocation9 + $0x370] sm:$0xff]
    %v208 = vld [vmem:[#allocation9 + $0x378] sm:$0xff]
    %v209 = vld [vmem:[#allocation9 + $0x380] sm:$0xff]
    %v210 = vld [vmem:[#allocation9 + $0x388] sm:$0xff]
    %v211 = vld [vmem:[#allocation9 + $0x390] sm:$0xff]
    %v212 = vld [vmem:[#allocation9 + $0x398] sm:$0xff]
    %v213 = vld [vmem:[#allocation9 + $0x3a0] sm:$0xff]
    %v214 = vld [vmem:[#allocation9 + $0x3a8] sm:$0xff]
    %v215 = vld [vmem:[#allocation9 + $0x3b0] sm:$0xff]
    %v216 = vld [vmem:[#allocation9 + $0x3b8] sm:$0xff]
    %v217 = vld [vmem:[#allocation9 + $0x3c0] sm:$0xff]
    %v218 = vld [vmem:[#allocation9 + $0x3c8] sm:$0xff]
    %v219 = vld [vmem:[#allocation9 + $0x3d0] sm:$0xff]
    %v220 = vld [vmem:[#allocation9 + $0x3d8] sm:$0xff]
    %v221 = vld [vmem:[#allocation9 + $0x3e0] sm:$0xff]
    %v222 = vld [vmem:[#allocation9 + $0x3e8] sm:$0xff]
    %v223 = vld [vmem:[#allocation9 + $0x3f0] sm:$0xff]
    %v224 = vld [vmem:[#allocation9 + $0x3f8] sm:$0xff]
    %v225 = vld [vmem:[#allocation9 + $0x400] sm:$0xff]
    %v226 = vld [vmem:[#allocation9 + $0x408] sm:$0xff]
    %v227 = vld [vmem:[#allocation9 + $0x410] sm:$0xff]
    %v228 = vld [vmem:[#allocation9 + $0x418] sm:$0xff]
    %v229 = vld [vmem:[#allocation9 + $0x420] sm:$0xff]
    %v230 = vld [vmem:[#allocation9 + $0x428] sm:$0xff]
    %v231 = vld [vmem:[#allocation9 + $0x430] sm:$0xff]
    %v232 = vld [vmem:[#allocation9 + $0x438] sm:$0xff]
    %v233 = vld [vmem:[#allocation9 + $0x440] sm:$0xff]
    %v234 = vld [vmem:[#allocation9 + $0x448] sm:$0xff]
    %v235 = vld [vmem:[#allocation9 + $0x450] sm:$0xff]
    %v236 = vld [vmem:[#allocation9 + $0x458] sm:$0xff]
    %v237 = vld [vmem:[#allocation9 + $0x460] sm:$0xff]
    %v238 = vld [vmem:[#allocation9 + $0x468] sm:$0xff]
    %v239 = vld [vmem:[#allocation9 + $0x470] sm:$0xff]
    %v240 = vld [vmem:[#allocation9 + $0x478] sm:$0xff]
    %v241 = vld [vmem:[#allocation9 + $0x480] sm:$0xff]
    %v242 = vld [vmem:[#allocation9 + $0x488] sm:$0xff]
    %v243 = vld [vmem:[#allocation9 + $0x490] sm:$0xff]
    %v244 = vld [vmem:[#allocation9 + $0x498] sm:$0xff]
    %v245 = vld [vmem:[#allocation9 + $0x4a0] sm:$0xff]
    %v246 = vld [vmem:[#allocation9 + $0x4a8] sm:$0xff]
    %v247 = vld [vmem:[#allocation9 + $0x4b0] sm:$0xff]
    %v248 = vld [vmem:[#allocation9 + $0x4b8] sm:$0xff]
    %v249 = vld [vmem:[#allocation9 + $0x4c0] sm:$0xff]
    %v250 = vld [vmem:[#allocation9 + $0x4c8] sm:$0xff]
    %v251 = vld [vmem:[#allocation9 + $0x4d0] sm:$0xff]
    %v252 = vld [vmem:[#allocation9 + $0x4d8] sm:$0xff]
    %v253 = vld [vmem:[#allocation9 + $0x4e0] sm:$0xff]
    %v254 = vld [vmem:[#allocation9 + $0x4e8] sm:$0xff]
    %v255 = vld [vmem:[#allocation9 + $0x4f0] sm:$0xff]
    %v256 = vld [vmem:[#allocation9 + $0x4f8] sm:$0xff]
    %v257 = vld [vmem:[#allocation9 + $0x500] sm:$0xff]
    %v258 = vld [vmem:[#allocation9 + $0x508] sm:$0xff]
    %v259 = vld [vmem:[#allocation9 + $0x510] sm:$0xff]
    %v260 = vld [vmem:[#allocation9 + $0x518] sm:$0xff]
    %v261 = vld [vmem:[#allocation9 + $0x520] sm:$0xff]
    %v262 = vld [vmem:[#allocation9 + $0x528] sm:$0xff]
    %v263 = vld [vmem:[#allocation9 + $0x530] sm:$0xff]
    %v264 = vld [vmem:[#allocation9 + $0x538] sm:$0xff]
    %v265 = vld [vmem:[#allocation9 + $0x540] sm:$0xff]
    %v266 = vld [vmem:[#allocation9 + $0x548] sm:$0xff]
    %v267 = vld [vmem:[#allocation9 + $0x550] sm:$0xff]
    %v268 = vld [vmem:[#allocation9 + $0x558] sm:$0xff]
    %v269 = vld [vmem:[#allocation9 + $0x560] sm:$0xff]
    %v270 = vld [vmem:[#allocation9 + $0x568] sm:$0xff]
    %v271 = vld [vmem:[#allocation9 + $0x570] sm:$0xff]
    %v272 = vld [vmem:[#allocation9 + $0x578] sm:$0xff]
    %v273 = vld [vmem:[#allocation9 + $0x580] sm:$0xff]
    %v274 = vld [vmem:[#allocation9 + $0x588] sm:$0xff]
    %v275 = vld [vmem:[#allocation9 + $0x590] sm:$0xff]
    %v276 = vld [vmem:[#allocation9 + $0x598] sm:$0xff]
    %v277 = vld [vmem:[#allocation9 + $0x5a0] sm:$0xff]
    %v278 = vld [vmem:[#allocation9 + $0x5a8] sm:$0xff]
    %v279 = vld [vmem:[#allocation9 + $0x5b0] sm:$0xff]
    %v280 = vld [vmem:[#allocation9 + $0x5b8] sm:$0xff]
    %v281 = vld [vmem:[#allocation9 + $0x5c0] sm:$0xff]
    %v282 = vld [vmem:[#allocation9 + $0x5c8] sm:$0xff]
    %v283 = vld [vmem:[#allocation9 + $0x5d0] sm:$0xff]
    %v284 = vld [vmem:[#allocation9 + $0x5d8] sm:$0xff]
    %v285 = vld [vmem:[#allocation9 + $0x5e0] sm:$0xff]
    %v286 = vld [vmem:[#allocation9 + $0x5e8] sm:$0xff]
    %v287 = vld [vmem:[#allocation9 + $0x5f0] sm:$0xff]
    %v288 = vld [vmem:[#allocation9 + $0x5f8] sm:$0xff]
    %v289 = vld [vmem:[#allocation9 + $0x600] sm:$0xff]
    %v290 = vld [vmem:[#allocation9 + $0x608] sm:$0xff]
    %v291 = vld [vmem:[#allocation9 + $0x610] sm:$0xff]
    %v292 = vld [vmem:[#allocation9 + $0x618] sm:$0xff]
    %v293 = vld [vmem:[#allocation9 + $0x620] sm:$0xff]
    %v294 = vld [vmem:[#allocation9 + $0x628] sm:$0xff]
    %v295 = vld [vmem:[#allocation9 + $0x630] sm:$0xff]
    %v296 = vld [vmem:[#allocation9 + $0x638] sm:$0xff]
    %v297 = vld [vmem:[#allocation9 + $0x640] sm:$0xff]
    %v298 = vld [vmem:[#allocation9 + $0x648] sm:$0xff]
    %v299 = vld [vmem:[#allocation9 + $0x650] sm:$0xff]
    %v300 = vld [vmem:[#allocation9 + $0x658] sm:$0xff]
    %v301 = vld [vmem:[#allocation9 + $0x660] sm:$0xff]
    %v302 = vld [vmem:[#allocation9 + $0x668] sm:$0xff]
    %v303 = vld [vmem:[#allocation9 + $0x670] sm:$0xff]
    %v304 = vld [vmem:[#allocation9 + $0x678] sm:$0xff]
    %v305 = vld [vmem:[#allocation9 + $0x680] sm:$0xff]
    %v306 = vld [vmem:[#allocation9 + $0x688] sm:$0xff]
    %v307 = vld [vmem:[#allocation9 + $0x690] sm:$0xff]
    %v308 = vld [vmem:[#allocation9 + $0x698] sm:$0xff]
    %v309 = vld [vmem:[#allocation9 + $0x6a0] sm:$0xff]
    %v310 = vld [vmem:[#allocation9 + $0x6a8] sm:$0xff]
    %v311 = vld [vmem:[#allocation9 + $0x6b0] sm:$0xff]
    %v312 = vld [vmem:[#allocation9 + $0x6b8] sm:$0xff]
    %v313 = vld [vmem:[#allocation9 + $0x6c0] sm:$0xff]
    %v314 = vld [vmem:[#allocation9 + $0x6c8] sm:$0xff]
    %v315 = vld [vmem:[#allocation9 + $0x6d0] sm:$0xff]
    %v316 = vld [vmem:[#allocation9 + $0x6d8] sm:$0xff]
    %v317 = vld [vmem:[#allocation9 + $0x6e0] sm:$0xff]
    %v318 = vld [vmem:[#allocation9 + $0x6e8] sm:$0xff]
    %v319 = vld [vmem:[#allocation9 + $0x6f0] sm:$0xff]
    %v320 = vld [vmem:[#allocation9 + $0x6f8] sm:$0xff]
    %v321 = vld [vmem:[#allocation9 + $0x700] sm:$0xff]
    %v322 = vld [vmem:[#allocation9 + $0x708] sm:$0xff]
    %v323 = vld [vmem:[#allocation9 + $0x710] sm:$0xff]
    %v324 = vld [vmem:[#allocation9 + $0x718] sm:$0xff]
    %v325 = vld [vmem:[#allocation9 + $0x720] sm:$0xff]
    %v326 = vld [vmem:[#allocation9 + $0x728] sm:$0xff]
    %v327 = vld [vmem:[#allocation9 + $0x730] sm:$0xff]
    %v328 = vld [vmem:[#allocation9 + $0x738] sm:$0xff]
    %v329 = vld [vmem:[#allocation9 + $0x740] sm:$0xff]
    %v330 = vld [vmem:[#allocation9 + $0x748] sm:$0xff]
    %v331 = vld [vmem:[#allocation9 + $0x750] sm:$0xff]
    %v332 = vld [vmem:[#allocation9 + $0x758] sm:$0xff]
    %v333 = vld [vmem:[#allocation9 + $0x760] sm:$0xff]
    %v334 = vld [vmem:[#allocation9 + $0x768] sm:$0xff]
    %v335 = vld [vmem:[#allocation9 + $0x770] sm:$0xff]
    %v336 = vld [vmem:[#allocation9 + $0x778] sm:$0xff]
    %v337 = vld [vmem:[#allocation9 + $0x780] sm:$0xff]
    %v338 = vld [vmem:[#allocation9 + $0x788] sm:$0xff]
    %v339 = vld [vmem:[#allocation9 + $0x790] sm:$0xff]
    %v340 = vld [vmem:[#allocation9 + $0x798] sm:$0xff]
    %v341 = vld [vmem:[#allocation9 + $0x7a0] sm:$0xff]
    %v342 = vld [vmem:[#allocation9 + $0x7a8] sm:$0xff]
    %v343 = vld [vmem:[#allocation9 + $0x7b0] sm:$0xff]
    %v344 = vld [vmem:[#allocation9 + $0x7b8] sm:$0xff]
    %v345 = vld [vmem:[#allocation9 + $0x7c0] sm:$0xff]
    %v346 = vld [vmem:[#allocation9 + $0x7c8] sm:$0xff]
    %v347 = vld [vmem:[#allocation9 + $0x7d0] sm:$0xff]
    %v348 = vld [vmem:[#allocation9 + $0x7d8] sm:$0xff]
    %v349 = vld [vmem:[#allocation9 + $0x7e0] sm:$0xff]
    %v350 = vld [vmem:[#allocation9 + $0x7e8] sm:$0xff]
    %v351 = vld [vmem:[#allocation9 + $0x7f0] sm:$0xff]
    %v352 = vld [vmem:[#allocation9 + $0x7f8] sm:$0xff]
    %v353 = vld [vmem:[#allocation11] ss:$8 sm:$0xf]
    %v354 = vld [vmem:[#allocation11] ss:$8 sm:$0xf0]
    %v355 = vor.u32 %v353, %v354
    %s356 = scalar_lea.vmem [#allocation11], 1
    %v357 = vld [vmem:[%s356] ss:$8 sm:$0xf]
    %v358 = vld [vmem:[%s356] ss:$8 sm:$0xf0]
    %v359 = vor.u32 %v357, %v358
    %v364 = vunpack.c.l.b16 %v93
    %v365 = vunpack.c.h.b16 %v93
    %v366 = vunpack.c.l.b16 %v94
    %v367 = vunpack.c.h.b16 %v94
    %v368 = vunpack.c.l.b16 %v95
    %v369 = vunpack.c.h.b16 %v95
    %v370 = vunpack.c.l.b16 %v96
    %v371 = vunpack.c.h.b16 %v96
    %v372 = vpack.c.b16 %v368, %v364
    %v373 = vpack.c.b16 %v369, %v365
    %v374 = vpack.c.b16 %v370, %v366
    %v375 = vpack.c.b16 %v371, %v367
    %v636 = vunpack.c.l.b16 %v97
    %v637 = vunpack.c.h.b16 %v97
    %v638 = vunpack.c.l.b16 %v98
    %v639 = vunpack.c.h.b16 %v98
    %v640 = vunpack.c.l.b16 %v99
    %v641 = vunpack.c.h.b16 %v99
    %v642 = vunpack.c.l.b16 %v100
    %v643 = vunpack.c.h.b16 %v100
    %v644 = vunpack.c.l.b16 %v101
    %v645 = vunpack.c.h.b16 %v101
    %v646 = vunpack.c.l.b16 %v102
    %v647 = vunpack.c.h.b16 %v102
    %v648 = vunpack.c.l.b16 %v103
    %v649 = vunpack.c.h.b16 %v103
    %v650 = vunpack.c.l.b16 %v104
    %v651 = vunpack.c.h.b16 %v104
    %v652 = vunpack.c.l.b16 %v105
    %v653 = vunpack.c.h.b16 %v105
    %v654 = vunpack.c.l.b16 %v106
    %v655 = vunpack.c.h.b16 %v106
    %v656 = vunpack.c.l.b16 %v107
    %v657 = vunpack.c.h.b16 %v107
    %v658 = vunpack.c.l.b16 %v108
    %v659 = vunpack.c.h.b16 %v108
    %v660 = vunpack.c.l.b16 %v109
    %v661 = vunpack.c.h.b16 %v109
    %v662 = vunpack.c.l.b16 %v110
    %v663 = vunpack.c.h.b16 %v110
    %v664 = vunpack.c.l.b16 %v111
    %v665 = vunpack.c.h.b16 %v111
    %v666 = vunpack.c.l.b16 %v112
    %v667 = vunpack.c.h.b16 %v112
    %v668 = vunpack.c.l.b16 %v113
    %v669 = vunpack.c.h.b16 %v113
    %v670 = vunpack.c.l.b16 %v114
    %v671 = vunpack.c.h.b16 %v114
    %v672 = vunpack.c.l.b16 %v115
    %v673 = vunpack.c.h.b16 %v115
    %v674 = vunpack.c.l.b16 %v116
    %v675 = vunpack.c.h.b16 %v116
    %v676 = vunpack.c.l.b16 %v117
    %v677 = vunpack.c.h.b16 %v117
    %v678 = vunpack.c.l.b16 %v118
    %v679 = vunpack.c.h.b16 %v118
    %v680 = vunpack.c.l.b16 %v119
    %v681 = vunpack.c.h.b16 %v119
    %v682 = vunpack.c.l.b16 %v120
    %v683 = vunpack.c.h.b16 %v120
    %v684 = vunpack.c.l.b16 %v121
    %v685 = vunpack.c.h.b16 %v121
    %v686 = vunpack.c.l.b16 %v122
    %v687 = vunpack.c.h.b16 %v122
    %v688 = vunpack.c.l.b16 %v123
    %v689 = vunpack.c.h.b16 %v123
    %v690 = vunpack.c.l.b16 %v124
    %v691 = vunpack.c.h.b16 %v124
    %v692 = vunpack.c.l.b16 %v125
    %v693 = vunpack.c.h.b16 %v125
    %v694 = vunpack.c.l.b16 %v126
    %v695 = vunpack.c.h.b16 %v126
    %v696 = vunpack.c.l.b16 %v127
    %v697 = vunpack.c.h.b16 %v127
    %v698 = vunpack.c.l.b16 %v128
    %v699 = vunpack.c.h.b16 %v128
    %v700 = vunpack.c.l.b16 %v129
    %v701 = vunpack.c.h.b16 %v129
    %v702 = vunpack.c.l.b16 %v130
    %v703 = vunpack.c.h.b16 %v130
    %v704 = vunpack.c.l.b16 %v131
    %v705 = vunpack.c.h.b16 %v131
    %v706 = vunpack.c.l.b16 %v132
    %v707 = vunpack.c.h.b16 %v132
    %v708 = vunpack.c.l.b16 %v133
    %v709 = vunpack.c.h.b16 %v133
    %v710 = vunpack.c.l.b16 %v134
    %v711 = vunpack.c.h.b16 %v134
    %v712 = vunpack.c.l.b16 %v135
    %v713 = vunpack.c.h.b16 %v135
    %v714 = vunpack.c.l.b16 %v136
    %v715 = vunpack.c.h.b16 %v136
    %v716 = vunpack.c.l.b16 %v137
    %v717 = vunpack.c.h.b16 %v137
    %v718 = vunpack.c.l.b16 %v138
    %v719 = vunpack.c.h.b16 %v138
    %v720 = vunpack.c.l.b16 %v139
    %v721 = vunpack.c.h.b16 %v139
    %v722 = vunpack.c.l.b16 %v140
    %v723 = vunpack.c.h.b16 %v140
    %v724 = vunpack.c.l.b16 %v141
    %v725 = vunpack.c.h.b16 %v141
    %v726 = vunpack.c.l.b16 %v142
    %v727 = vunpack.c.h.b16 %v142
    %v728 = vunpack.c.l.b16 %v143
    %v729 = vunpack.c.h.b16 %v143
    %v730 = vunpack.c.l.b16 %v144
    %v731 = vunpack.c.h.b16 %v144
    %v732 = vunpack.c.l.b16 %v145
    %v733 = vunpack.c.h.b16 %v145
    %v734 = vunpack.c.l.b16 %v146
    %v735 = vunpack.c.h.b16 %v146
    %v736 = vunpack.c.l.b16 %v147
    %v737 = vunpack.c.h.b16 %v147
    %v738 = vunpack.c.l.b16 %v148
    %v739 = vunpack.c.h.b16 %v148
    %v740 = vunpack.c.l.b16 %v149
    %v741 = vunpack.c.h.b16 %v149
    %v742 = vunpack.c.l.b16 %v150
    %v743 = vunpack.c.h.b16 %v150
    %v744 = vunpack.c.l.b16 %v151
    %v745 = vunpack.c.h.b16 %v151
    %v746 = vunpack.c.l.b16 %v152
    %v747 = vunpack.c.h.b16 %v152
    %v748 = vunpack.c.l.b16 %v153
    %v749 = vunpack.c.h.b16 %v153
    %v750 = vunpack.c.l.b16 %v154
    %v751 = vunpack.c.h.b16 %v154
    %v752 = vunpack.c.l.b16 %v155
    %v753 = vunpack.c.h.b16 %v155
    %v754 = vunpack.c.l.b16 %v156
    %v755 = vunpack.c.h.b16 %v156
    %v756 = vunpack.c.l.b16 %v157
    %v757 = vunpack.c.h.b16 %v157
    %v758 = vunpack.c.l.b16 %v158
    %v759 = vunpack.c.h.b16 %v158
    %v760 = vunpack.c.l.b16 %v159
    %v761 = vunpack.c.h.b16 %v159
    %v762 = vunpack.c.l.b16 %v160
    %v763 = vunpack.c.h.b16 %v160
    %v764 = vunpack.c.l.b16 %v161
    %v765 = vunpack.c.h.b16 %v161
    %v766 = vunpack.c.l.b16 %v162
    %v767 = vunpack.c.h.b16 %v162
    %v768 = vunpack.c.l.b16 %v163
    %v769 = vunpack.c.h.b16 %v163
    %v770 = vunpack.c.l.b16 %v164
    %v771 = vunpack.c.h.b16 %v164
    %v772 = vunpack.c.l.b16 %v165
    %v773 = vunpack.c.h.b16 %v165
    %v774 = vunpack.c.l.b16 %v166
    %v775 = vunpack.c.h.b16 %v166
    %v776 = vunpack.c.l.b16 %v167
    %v777 = vunpack.c.h.b16 %v167
    %v778 = vunpack.c.l.b16 %v168
    %v779 = vunpack.c.h.b16 %v168
    %v780 = vunpack.c.l.b16 %v169
    %v781 = vunpack.c.h.b16 %v169
    %v782 = vunpack.c.l.b16 %v170
    %v783 = vunpack.c.h.b16 %v170
    %v784 = vunpack.c.l.b16 %v171
    %v785 = vunpack.c.h.b16 %v171
    %v786 = vunpack.c.l.b16 %v172
    %v787 = vunpack.c.h.b16 %v172
    %v788 = vunpack.c.l.b16 %v173
    %v789 = vunpack.c.h.b16 %v173
    %v790 = vunpack.c.l.b16 %v174
    %v791 = vunpack.c.h.b16 %v174
    %v792 = vunpack.c.l.b16 %v175
    %v793 = vunpack.c.h.b16 %v175
    %v794 = vunpack.c.l.b16 %v176
    %v795 = vunpack.c.h.b16 %v176
    %v796 = vunpack.c.l.b16 %v177
    %v797 = vunpack.c.h.b16 %v177
    %v798 = vunpack.c.l.b16 %v178
    %v799 = vunpack.c.h.b16 %v178
    %v800 = vunpack.c.l.b16 %v179
    %v801 = vunpack.c.h.b16 %v179
    %v802 = vunpack.c.l.b16 %v180
    %v803 = vunpack.c.h.b16 %v180
    %v804 = vunpack.c.l.b16 %v181
    %v805 = vunpack.c.h.b16 %v181
    %v806 = vunpack.c.l.b16 %v182
    %v807 = vunpack.c.h.b16 %v182
    %v808 = vunpack.c.l.b16 %v183
    %v809 = vunpack.c.h.b16 %v183
    %v810 = vunpack.c.l.b16 %v184
    %v811 = vunpack.c.h.b16 %v184
    %v812 = vunpack.c.l.b16 %v185
    %v813 = vunpack.c.h.b16 %v185
    %v814 = vunpack.c.l.b16 %v186
    %v815 = vunpack.c.h.b16 %v186
    %v816 = vunpack.c.l.b16 %v187
    %v817 = vunpack.c.h.b16 %v187
    %v818 = vunpack.c.l.b16 %v188
    %v819 = vunpack.c.h.b16 %v188
    %v820 = vunpack.c.l.b16 %v189
    %v821 = vunpack.c.h.b16 %v189
    %v822 = vunpack.c.l.b16 %v190
    %v823 = vunpack.c.h.b16 %v190
    %v824 = vunpack.c.l.b16 %v191
    %v825 = vunpack.c.h.b16 %v191
    %v826 = vunpack.c.l.b16 %v192
    %v827 = vunpack.c.h.b16 %v192
    %v828 = vunpack.c.l.b16 %v193
    %v829 = vunpack.c.h.b16 %v193
    %v830 = vunpack.c.l.b16 %v194
    %v831 = vunpack.c.h.b16 %v194
    %v832 = vunpack.c.l.b16 %v195
    %v833 = vunpack.c.h.b16 %v195
    %v834 = vunpack.c.l.b16 %v196
    %v835 = vunpack.c.h.b16 %v196
    %v836 = vunpack.c.l.b16 %v197
    %v837 = vunpack.c.h.b16 %v197
    %v838 = vunpack.c.l.b16 %v198
    %v839 = vunpack.c.h.b16 %v198
    %v840 = vunpack.c.l.b16 %v199
    %v841 = vunpack.c.h.b16 %v199
    %v842 = vunpack.c.l.b16 %v200
    %v843 = vunpack.c.h.b16 %v200
    %v844 = vunpack.c.l.b16 %v201
    %v845 = vunpack.c.h.b16 %v201
    %v846 = vunpack.c.l.b16 %v202
    %v847 = vunpack.c.h.b16 %v202
    %v848 = vunpack.c.l.b16 %v203
    %v849 = vunpack.c.h.b16 %v203
    %v850 = vunpack.c.l.b16 %v204
    %v851 = vunpack.c.h.b16 %v204
    %v852 = vunpack.c.l.b16 %v205
    %v853 = vunpack.c.h.b16 %v205
    %v854 = vunpack.c.l.b16 %v206
    %v855 = vunpack.c.h.b16 %v206
    %v856 = vunpack.c.l.b16 %v207
    %v857 = vunpack.c.h.b16 %v207
    %v858 = vunpack.c.l.b16 %v208
    %v859 = vunpack.c.h.b16 %v208
    %v860 = vunpack.c.l.b16 %v209
    %v861 = vunpack.c.h.b16 %v209
    %v862 = vunpack.c.l.b16 %v210
    %v863 = vunpack.c.h.b16 %v210
    %v864 = vunpack.c.l.b16 %v211
    %v865 = vunpack.c.h.b16 %v211
    %v866 = vunpack.c.l.b16 %v212
    %v867 = vunpack.c.h.b16 %v212
    %v868 = vunpack.c.l.b16 %v213
    %v869 = vunpack.c.h.b16 %v213
    %v870 = vunpack.c.l.b16 %v214
    %v871 = vunpack.c.h.b16 %v214
    %v872 = vunpack.c.l.b16 %v215
    %v873 = vunpack.c.h.b16 %v215
    %v874 = vunpack.c.l.b16 %v216
    %v875 = vunpack.c.h.b16 %v216
    %v876 = vunpack.c.l.b16 %v217
    %v877 = vunpack.c.h.b16 %v217
    %v878 = vunpack.c.l.b16 %v218
    %v879 = vunpack.c.h.b16 %v218
    %v880 = vunpack.c.l.b16 %v219
    %v881 = vunpack.c.h.b16 %v219
    %v882 = vunpack.c.l.b16 %v220
    %v883 = vunpack.c.h.b16 %v220
    %v884 = vunpack.c.l.b16 %v221
    %v885 = vunpack.c.h.b16 %v221
    %v886 = vunpack.c.l.b16 %v222
    %v887 = vunpack.c.h.b16 %v222
    %v888 = vunpack.c.l.b16 %v223
    %v889 = vunpack.c.h.b16 %v223
    %v890 = vunpack.c.l.b16 %v224
    %v891 = vunpack.c.h.b16 %v224
    %v892 = vunpack.c.l.b16 %v225
    %v893 = vunpack.c.h.b16 %v225
    %v894 = vunpack.c.l.b16 %v226
    %v895 = vunpack.c.h.b16 %v226
    %v896 = vunpack.c.l.b16 %v227
    %v897 = vunpack.c.h.b16 %v227
    %v898 = vunpack.c.l.b16 %v228
    %v899 = vunpack.c.h.b16 %v228
    %v900 = vunpack.c.l.b16 %v229
    %v901 = vunpack.c.h.b16 %v229
    %v902 = vunpack.c.l.b16 %v230
    %v903 = vunpack.c.h.b16 %v230
    %v904 = vunpack.c.l.b16 %v231
    %v905 = vunpack.c.h.b16 %v231
    %v906 = vunpack.c.l.b16 %v232
    %v907 = vunpack.c.h.b16 %v232
    %v908 = vunpack.c.l.b16 %v233
    %v909 = vunpack.c.h.b16 %v233
    %v910 = vunpack.c.l.b16 %v234
    %v911 = vunpack.c.h.b16 %v234
    %v912 = vunpack.c.l.b16 %v235
    %v913 = vunpack.c.h.b16 %v235
    %v914 = vunpack.c.l.b16 %v236
    %v915 = vunpack.c.h.b16 %v236
    %v916 = vunpack.c.l.b16 %v237
    %v917 = vunpack.c.h.b16 %v237
    %v918 = vunpack.c.l.b16 %v238
    %v919 = vunpack.c.h.b16 %v238
    %v920 = vunpack.c.l.b16 %v239
    %v921 = vunpack.c.h.b16 %v239
    %v922 = vunpack.c.l.b16 %v240
    %v923 = vunpack.c.h.b16 %v240
    %v924 = vunpack.c.l.b16 %v241
    %v925 = vunpack.c.h.b16 %v241
    %v926 = vunpack.c.l.b16 %v242
    %v927 = vunpack.c.h.b16 %v242
    %v928 = vunpack.c.l.b16 %v243
    %v929 = vunpack.c.h.b16 %v243
    %v930 = vunpack.c.l.b16 %v244
    %v931 = vunpack.c.h.b16 %v244
    %v932 = vunpack.c.l.b16 %v245
    %v933 = vunpack.c.h.b16 %v245
    %v934 = vunpack.c.l.b16 %v246
    %v935 = vunpack.c.h.b16 %v246
    %v936 = vunpack.c.l.b16 %v247
    %v937 = vunpack.c.h.b16 %v247
    %v938 = vunpack.c.l.b16 %v248
    %v939 = vunpack.c.h.b16 %v248
    %v940 = vunpack.c.l.b16 %v249
    %v941 = vunpack.c.h.b16 %v249
    %v942 = vunpack.c.l.b16 %v250
    %v943 = vunpack.c.h.b16 %v250
    %v944 = vunpack.c.l.b16 %v251
    %v945 = vunpack.c.h.b16 %v251
    %v946 = vunpack.c.l.b16 %v252
    %v947 = vunpack.c.h.b16 %v252
    %v948 = vunpack.c.l.b16 %v253
    %v949 = vunpack.c.h.b16 %v253
    %v950 = vunpack.c.l.b16 %v254
    %v951 = vunpack.c.h.b16 %v254
    %v952 = vunpack.c.l.b16 %v255
    %v953 = vunpack.c.h.b16 %v255
    %v954 = vunpack.c.l.b16 %v256
    %v955 = vunpack.c.h.b16 %v256
    %v956 = vunpack.c.l.b16 %v257
    %v957 = vunpack.c.h.b16 %v257
    %v958 = vunpack.c.l.b16 %v258
    %v959 = vunpack.c.h.b16 %v258
    %v960 = vunpack.c.l.b16 %v259
    %v961 = vunpack.c.h.b16 %v259
    %v962 = vunpack.c.l.b16 %v260
    %v963 = vunpack.c.h.b16 %v260
    %v964 = vunpack.c.l.b16 %v261
    %v965 = vunpack.c.h.b16 %v261
    %v966 = vunpack.c.l.b16 %v262
    %v967 = vunpack.c.h.b16 %v262
    %v968 = vunpack.c.l.b16 %v263
    %v969 = vunpack.c.h.b16 %v263
    %v970 = vunpack.c.l.b16 %v264
    %v971 = vunpack.c.h.b16 %v264
    %v972 = vunpack.c.l.b16 %v265
    %v973 = vunpack.c.h.b16 %v265
    %v974 = vunpack.c.l.b16 %v266
    %v975 = vunpack.c.h.b16 %v266
    %v976 = vunpack.c.l.b16 %v267
    %v977 = vunpack.c.h.b16 %v267
    %v978 = vunpack.c.l.b16 %v268
    %v979 = vunpack.c.h.b16 %v268
    %v980 = vunpack.c.l.b16 %v269
    %v981 = vunpack.c.h.b16 %v269
    %v982 = vunpack.c.l.b16 %v270
    %v983 = vunpack.c.h.b16 %v270
    %v984 = vunpack.c.l.b16 %v271
    %v985 = vunpack.c.h.b16 %v271
    %v986 = vunpack.c.l.b16 %v272
    %v987 = vunpack.c.h.b16 %v272
    %v988 = vunpack.c.l.b16 %v273
    %v989 = vunpack.c.h.b16 %v273
    %v990 = vunpack.c.l.b16 %v274
    %v991 = vunpack.c.h.b16 %v274
    %v992 = vunpack.c.l.b16 %v275
    %v993 = vunpack.c.h.b16 %v275
    %v994 = vunpack.c.l.b16 %v276
    %v995 = vunpack.c.h.b16 %v276
    %v996 = vunpack.c.l.b16 %v277
    %v997 = vunpack.c.h.b16 %v277
    %v998 = vunpack.c.l.b16 %v278
    %v999 = vunpack.c.h.b16 %v278
    %v1000 = vunpack.c.l.b16 %v279
    %v1001 = vunpack.c.h.b16 %v279
    %v1002 = vunpack.c.l.b16 %v280
    %v1003 = vunpack.c.h.b16 %v280
    %v1004 = vunpack.c.l.b16 %v281
    %v1005 = vunpack.c.h.b16 %v281
    %v1006 = vunpack.c.l.b16 %v282
    %v1007 = vunpack.c.h.b16 %v282
    %v1008 = vunpack.c.l.b16 %v283
    %v1009 = vunpack.c.h.b16 %v283
    %v1010 = vunpack.c.l.b16 %v284
    %v1011 = vunpack.c.h.b16 %v284
    %v1012 = vunpack.c.l.b16 %v285
    %v1013 = vunpack.c.h.b16 %v285
    %v1014 = vunpack.c.l.b16 %v286
    %v1015 = vunpack.c.h.b16 %v286
    %v1016 = vunpack.c.l.b16 %v287
    %v1017 = vunpack.c.h.b16 %v287
    %v1018 = vunpack.c.l.b16 %v288
    %v1019 = vunpack.c.h.b16 %v288
    %v1020 = vunpack.c.l.b16 %v289
    %v1021 = vunpack.c.h.b16 %v289
    %v1022 = vunpack.c.l.b16 %v290
    %v1023 = vunpack.c.h.b16 %v290
    %v1024 = vunpack.c.l.b16 %v291
    %v1025 = vunpack.c.h.b16 %v291
    %v1026 = vunpack.c.l.b16 %v292
    %v1027 = vunpack.c.h.b16 %v292
    %v1028 = vunpack.c.l.b16 %v293
    %v1029 = vunpack.c.h.b16 %v293
    %v1030 = vunpack.c.l.b16 %v294
    %v1031 = vunpack.c.h.b16 %v294
    %v1032 = vunpack.c.l.b16 %v295
    %v1033 = vunpack.c.h.b16 %v295
    %v1034 = vunpack.c.l.b16 %v296
    %v1035 = vunpack.c.h.b16 %v296
    %v1036 = vunpack.c.l.b16 %v297
    %v1037 = vunpack.c.h.b16 %v297
    %v1038 = vunpack.c.l.b16 %v298
    %v1039 = vunpack.c.h.b16 %v298
    %v1040 = vunpack.c.l.b16 %v299
    %v1041 = vunpack.c.h.b16 %v299
    %v1042 = vunpack.c.l.b16 %v300
    %v1043 = vunpack.c.h.b16 %v300
    %v1044 = vunpack.c.l.b16 %v301
    %v1045 = vunpack.c.h.b16 %v301
    %v1046 = vunpack.c.l.b16 %v302
    %v1047 = vunpack.c.h.b16 %v302
    %v1048 = vunpack.c.l.b16 %v303
    %v1049 = vunpack.c.h.b16 %v303
    %v1050 = vunpack.c.l.b16 %v304
    %v1051 = vunpack.c.h.b16 %v304
    %v1052 = vunpack.c.l.b16 %v305
    %v1053 = vunpack.c.h.b16 %v305
    %v1054 = vunpack.c.l.b16 %v306
    %v1055 = vunpack.c.h.b16 %v306
    %v1056 = vunpack.c.l.b16 %v307
    %v1057 = vunpack.c.h.b16 %v307
    %v1058 = vunpack.c.l.b16 %v308
    %v1059 = vunpack.c.h.b16 %v308
    %v1060 = vunpack.c.l.b16 %v309
    %v1061 = vunpack.c.h.b16 %v309
    %v1062 = vunpack.c.l.b16 %v310
    %v1063 = vunpack.c.h.b16 %v310
    %v1064 = vunpack.c.l.b16 %v311
    %v1065 = vunpack.c.h.b16 %v311
    %v1066 = vunpack.c.l.b16 %v312
    %v1067 = vunpack.c.h.b16 %v312
    %v1068 = vunpack.c.l.b16 %v313
    %v1069 = vunpack.c.h.b16 %v313
    %v1070 = vunpack.c.l.b16 %v314
    %v1071 = vunpack.c.h.b16 %v314
    %v1072 = vunpack.c.l.b16 %v315
    %v1073 = vunpack.c.h.b16 %v315
    %v1074 = vunpack.c.l.b16 %v316
    %v1075 = vunpack.c.h.b16 %v316
    %v1076 = vunpack.c.l.b16 %v317
    %v1077 = vunpack.c.h.b16 %v317
    %v1078 = vunpack.c.l.b16 %v318
    %v1079 = vunpack.c.h.b16 %v318
    %v1080 = vunpack.c.l.b16 %v319
    %v1081 = vunpack.c.h.b16 %v319
    %v1082 = vunpack.c.l.b16 %v320
    %v1083 = vunpack.c.h.b16 %v320
    %v1084 = vunpack.c.l.b16 %v321
    %v1085 = vunpack.c.h.b16 %v321
    %v1086 = vunpack.c.l.b16 %v322
    %v1087 = vunpack.c.h.b16 %v322
    %v1088 = vunpack.c.l.b16 %v323
    %v1089 = vunpack.c.h.b16 %v323
    %v1090 = vunpack.c.l.b16 %v324
    %v1091 = vunpack.c.h.b16 %v324
    %v1092 = vunpack.c.l.b16 %v325
    %v1093 = vunpack.c.h.b16 %v325
    %v1094 = vunpack.c.l.b16 %v326
    %v1095 = vunpack.c.h.b16 %v326
    %v1096 = vunpack.c.l.b16 %v327
    %v1097 = vunpack.c.h.b16 %v327
    %v1098 = vunpack.c.l.b16 %v328
    %v1099 = vunpack.c.h.b16 %v328
    %v1100 = vunpack.c.l.b16 %v329
    %v1101 = vunpack.c.h.b16 %v329
    %v1102 = vunpack.c.l.b16 %v330
    %v1103 = vunpack.c.h.b16 %v330
    %v1104 = vunpack.c.l.b16 %v331
    %v1105 = vunpack.c.h.b16 %v331
    %v1106 = vunpack.c.l.b16 %v332
    %v1107 = vunpack.c.h.b16 %v332
    %v1108 = vunpack.c.l.b16 %v333
    %v1109 = vunpack.c.h.b16 %v333
    %v1110 = vunpack.c.l.b16 %v334
    %v1111 = vunpack.c.h.b16 %v334
    %v1112 = vunpack.c.l.b16 %v335
    %v1113 = vunpack.c.h.b16 %v335
    %v1114 = vunpack.c.l.b16 %v336
    %v1115 = vunpack.c.h.b16 %v336
    %v1116 = vunpack.c.l.b16 %v337
    %v1117 = vunpack.c.h.b16 %v337
    %v1118 = vunpack.c.l.b16 %v338
    %v1119 = vunpack.c.h.b16 %v338
    %v1120 = vunpack.c.l.b16 %v339
    %v1121 = vunpack.c.h.b16 %v339
    %v1122 = vunpack.c.l.b16 %v340
    %v1123 = vunpack.c.h.b16 %v340
    %v1124 = vunpack.c.l.b16 %v341
    %v1125 = vunpack.c.h.b16 %v341
    %v1126 = vunpack.c.l.b16 %v342
    %v1127 = vunpack.c.h.b16 %v342
    %v1128 = vunpack.c.l.b16 %v343
    %v1129 = vunpack.c.h.b16 %v343
    %v1130 = vunpack.c.l.b16 %v344
    %v1131 = vunpack.c.h.b16 %v344
    %v1132 = vunpack.c.l.b16 %v345
    %v1133 = vunpack.c.h.b16 %v345
    %v1134 = vunpack.c.l.b16 %v346
    %v1135 = vunpack.c.h.b16 %v346
    %v1136 = vunpack.c.l.b16 %v347
    %v1137 = vunpack.c.h.b16 %v347
    %v1138 = vunpack.c.l.b16 %v348
    %v1139 = vunpack.c.h.b16 %v348
    %v1140 = vunpack.c.l.b16 %v349
    %v1141 = vunpack.c.h.b16 %v349
    %v1142 = vunpack.c.l.b16 %v350
    %v1143 = vunpack.c.h.b16 %v350
    %v1144 = vunpack.c.l.b16 %v351
    %v1145 = vunpack.c.h.b16 %v351
    %v1146 = vunpack.c.l.b16 %v352
    %v1147 = vunpack.c.h.b16 %v352
    %v1148 = vpack.c.b16 %v644, %v636
    %v1149 = vpack.c.b16 %v645, %v637
    %v1150 = vpack.c.b16 %v646, %v638
    %v1151 = vpack.c.b16 %v647, %v639
    %v1152 = vpack.c.b16 %v648, %v640
    %v1153 = vpack.c.b16 %v649, %v641
    %v1154 = vpack.c.b16 %v650, %v642
    %v1155 = vpack.c.b16 %v651, %v643
    %v1156 = vpack.c.b16 %v660, %v652
    %v1157 = vpack.c.b16 %v661, %v653
    %v1158 = vpack.c.b16 %v662, %v654
    %v1159 = vpack.c.b16 %v663, %v655
    %v1160 = vpack.c.b16 %v664, %v656
    %v1161 = vpack.c.b16 %v665, %v657
    %v1162 = vpack.c.b16 %v666, %v658
    %v1163 = vpack.c.b16 %v667, %v659
    %v1164 = vpack.c.b16 %v676, %v668
    %v1165 = vpack.c.b16 %v677, %v669
    %v1166 = vpack.c.b16 %v678, %v670
    %v1167 = vpack.c.b16 %v679, %v671
    %v1168 = vpack.c.b16 %v680, %v672
    %v1169 = vpack.c.b16 %v681, %v673
    %v1170 = vpack.c.b16 %v682, %v674
    %v1171 = vpack.c.b16 %v683, %v675
    %v1172 = vpack.c.b16 %v692, %v684
    %v1173 = vpack.c.b16 %v693, %v685
    %v1174 = vpack.c.b16 %v694, %v686
    %v1175 = vpack.c.b16 %v695, %v687
    %v1176 = vpack.c.b16 %v696, %v688
    %v1177 = vpack.c.b16 %v697, %v689
    %v1178 = vpack.c.b16 %v698, %v690
    %v1179 = vpack.c.b16 %v699, %v691
    %v1180 = vpack.c.b16 %v708, %v700
    %v1181 = vpack.c.b16 %v709, %v701
    %v1182 = vpack.c.b16 %v710, %v702
    %v1183 = vpack.c.b16 %v711, %v703
    %v1184 = vpack.c.b16 %v712, %v704
    %v1185 = vpack.c.b16 %v713, %v705
    %v1186 = vpack.c.b16 %v714, %v706
    %v1187 = vpack.c.b16 %v715, %v707
    %v1188 = vpack.c.b16 %v724, %v716
    %v1189 = vpack.c.b16 %v725, %v717
    %v1190 = vpack.c.b16 %v726, %v718
    %v1191 = vpack.c.b16 %v727, %v719
    %v1192 = vpack.c.b16 %v728, %v720
    %v1193 = vpack.c.b16 %v729, %v721
    %v1194 = vpack.c.b16 %v730, %v722
    %v1195 = vpack.c.b16 %v731, %v723
    %v1196 = vpack.c.b16 %v740, %v732
    %v1197 = vpack.c.b16 %v741, %v733
    %v1198 = vpack.c.b16 %v742, %v734
    %v1199 = vpack.c.b16 %v743, %v735
    %v1200 = vpack.c.b16 %v744, %v736
    %v1201 = vpack.c.b16 %v745, %v737
    %v1202 = vpack.c.b16 %v746, %v738
    %v1203 = vpack.c.b16 %v747, %v739
    %v1204 = vpack.c.b16 %v756, %v748
    %v1205 = vpack.c.b16 %v757, %v749
    %v1206 = vpack.c.b16 %v758, %v750
    %v1207 = vpack.c.b16 %v759, %v751
    %v1208 = vpack.c.b16 %v760, %v752
    %v1209 = vpack.c.b16 %v761, %v753
    %v1210 = vpack.c.b16 %v762, %v754
    %v1211 = vpack.c.b16 %v763, %v755
    %v1212 = vpack.c.b16 %v772, %v764
    %v1213 = vpack.c.b16 %v773, %v765
    %v1214 = vpack.c.b16 %v774, %v766
    %v1215 = vpack.c.b16 %v775, %v767
    %v1216 = vpack.c.b16 %v776, %v768
    %v1217 = vpack.c.b16 %v777, %v769
    %v1218 = vpack.c.b16 %v778, %v770
    %v1219 = vpack.c.b16 %v779, %v771
    %v1220 = vpack.c.b16 %v788, %v780
    %v1221 = vpack.c.b16 %v789, %v781
    %v1222 = vpack.c.b16 %v790, %v782
    %v1223 = vpack.c.b16 %v791, %v783
    %v1224 = vpack.c.b16 %v792, %v784
    %v1225 = vpack.c.b16 %v793, %v785
    %v1226 = vpack.c.b16 %v794, %v786
    %v1227 = vpack.c.b16 %v795, %v787
    %v1228 = vpack.c.b16 %v804, %v796
    %v1229 = vpack.c.b16 %v805, %v797
    %v1230 = vpack.c.b16 %v806, %v798
    %v1231 = vpack.c.b16 %v807, %v799
    %v1232 = vpack.c.b16 %v808, %v800
    %v1233 = vpack.c.b16 %v809, %v801
    %v1234 = vpack.c.b16 %v810, %v802
    %v1235 = vpack.c.b16 %v811, %v803
    %v1236 = vpack.c.b16 %v820, %v812
    %v1237 = vpack.c.b16 %v821, %v813
    %v1238 = vpack.c.b16 %v822, %v814
    %v1239 = vpack.c.b16 %v823, %v815
    %v1240 = vpack.c.b16 %v824, %v816
    %v1241 = vpack.c.b16 %v825, %v817
    %v1242 = vpack.c.b16 %v826, %v818
    %v1243 = vpack.c.b16 %v827, %v819
    %v1244 = vpack.c.b16 %v836, %v828
    %v1245 = vpack.c.b16 %v837, %v829
    %v1246 = vpack.c.b16 %v838, %v830
    %v1247 = vpack.c.b16 %v839, %v831
    %v1248 = vpack.c.b16 %v840, %v832
    %v1249 = vpack.c.b16 %v841, %v833
    %v1250 = vpack.c.b16 %v842, %v834
    %v1251 = vpack.c.b16 %v843, %v835
    %v1252 = vpack.c.b16 %v852, %v844
    %v1253 = vpack.c.b16 %v853, %v845
    %v1254 = vpack.c.b16 %v854, %v846
    %v1255 = vpack.c.b16 %v855, %v847
    %v1256 = vpack.c.b16 %v856, %v848
    %v1257 = vpack.c.b16 %v857, %v849
    %v1258 = vpack.c.b16 %v858, %v850
    %v1259 = vpack.c.b16 %v859, %v851
    %v1260 = vpack.c.b16 %v868, %v860
    %v1261 = vpack.c.b16 %v869, %v861
    %v1262 = vpack.c.b16 %v870, %v862
    %v1263 = vpack.c.b16 %v871, %v863
    %v1264 = vpack.c.b16 %v872, %v864
    %v1265 = vpack.c.b16 %v873, %v865
    %v1266 = vpack.c.b16 %v874, %v866
    %v1267 = vpack.c.b16 %v875, %v867
    %v1268 = vpack.c.b16 %v884, %v876
    %v1269 = vpack.c.b16 %v885, %v877
    %v1270 = vpack.c.b16 %v886, %v878
    %v1271 = vpack.c.b16 %v887, %v879
    %v1272 = vpack.c.b16 %v888, %v880
    %v1273 = vpack.c.b16 %v889, %v881
    %v1274 = vpack.c.b16 %v890, %v882
    %v1275 = vpack.c.b16 %v891, %v883
    %v1276 = vpack.c.b16 %v900, %v892
    %v1277 = vpack.c.b16 %v901, %v893
    %v1278 = vpack.c.b16 %v902, %v894
    %v1279 = vpack.c.b16 %v903, %v895
    %v1280 = vpack.c.b16 %v904, %v896
    %v1281 = vpack.c.b16 %v905, %v897
    %v1282 = vpack.c.b16 %v906, %v898
    %v1283 = vpack.c.b16 %v907, %v899
    %v1284 = vpack.c.b16 %v916, %v908
    %v1285 = vpack.c.b16 %v917, %v909
    %v1286 = vpack.c.b16 %v918, %v910
    %v1287 = vpack.c.b16 %v919, %v911
    %v1288 = vpack.c.b16 %v920, %v912
    %v1289 = vpack.c.b16 %v921, %v913
    %v1290 = vpack.c.b16 %v922, %v914
    %v1291 = vpack.c.b16 %v923, %v915
    %v1292 = vpack.c.b16 %v932, %v924
    %v1293 = vpack.c.b16 %v933, %v925
    %v1294 = vpack.c.b16 %v934, %v926
    %v1295 = vpack.c.b16 %v935, %v927
    %v1296 = vpack.c.b16 %v936, %v928
    %v1297 = vpack.c.b16 %v937, %v929
    %v1298 = vpack.c.b16 %v938, %v930
    %v1299 = vpack.c.b16 %v939, %v931
    %v1300 = vpack.c.b16 %v948, %v940
    %v1301 = vpack.c.b16 %v949, %v941
    %v1302 = vpack.c.b16 %v950, %v942
    %v1303 = vpack.c.b16 %v951, %v943
    %v1304 = vpack.c.b16 %v952, %v944
    %v1305 = vpack.c.b16 %v953, %v945
    %v1306 = vpack.c.b16 %v954, %v946
    %v1307 = vpack.c.b16 %v955, %v947
    %v1308 = vpack.c.b16 %v964, %v956
    %v1309 = vpack.c.b16 %v965, %v957
    %v1310 = vpack.c.b16 %v966, %v958
    %v1311 = vpack.c.b16 %v967, %v959
    %v1312 = vpack.c.b16 %v968, %v960
    %v1313 = vpack.c.b16 %v969, %v961
    %v1314 = vpack.c.b16 %v970, %v962
    %v1315 = vpack.c.b16 %v971, %v963
    %v1316 = vpack.c.b16 %v980, %v972
    %v1317 = vpack.c.b16 %v981, %v973
    %v1318 = vpack.c.b16 %v982, %v974
    %v1319 = vpack.c.b16 %v983, %v975
    %v1320 = vpack.c.b16 %v984, %v976
    %v1321 = vpack.c.b16 %v985, %v977
    %v1322 = vpack.c.b16 %v986, %v978
    %v1323 = vpack.c.b16 %v987, %v979
    %v1324 = vpack.c.b16 %v996, %v988
    %v1325 = vpack.c.b16 %v997, %v989
    %v1326 = vpack.c.b16 %v998, %v990
    %v1327 = vpack.c.b16 %v999, %v991
    %v1328 = vpack.c.b16 %v1000, %v992
    %v1329 = vpack.c.b16 %v1001, %v993
    %v1330 = vpack.c.b16 %v1002, %v994
    %v1331 = vpack.c.b16 %v1003, %v995
    %v1332 = vpack.c.b16 %v1012, %v1004
    %v1333 = vpack.c.b16 %v1013, %v1005
    %v1334 = vpack.c.b16 %v1014, %v1006
    %v1335 = vpack.c.b16 %v1015, %v1007
    %v1336 = vpack.c.b16 %v1016, %v1008
    %v1337 = vpack.c.b16 %v1017, %v1009
    %v1338 = vpack.c.b16 %v1018, %v1010
    %v1339 = vpack.c.b16 %v1019, %v1011
    %v1340 = vpack.c.b16 %v1028, %v1020
    %v1341 = vpack.c.b16 %v1029, %v1021
    %v1342 = vpack.c.b16 %v1030, %v1022
    %v1343 = vpack.c.b16 %v1031, %v1023
    %v1344 = vpack.c.b16 %v1032, %v1024
    %v1345 = vpack.c.b16 %v1033, %v1025
    %v1346 = vpack.c.b16 %v1034, %v1026
    %v1347 = vpack.c.b16 %v1035, %v1027
    %v1348 = vpack.c.b16 %v1044, %v1036
    %v1349 = vpack.c.b16 %v1045, %v1037
    %v1350 = vpack.c.b16 %v1046, %v1038
    %v1351 = vpack.c.b16 %v1047, %v1039
    %v1352 = vpack.c.b16 %v1048, %v1040
    %v1353 = vpack.c.b16 %v1049, %v1041
    %v1354 = vpack.c.b16 %v1050, %v1042
    %v1355 = vpack.c.b16 %v1051, %v1043
    %v1356 = vpack.c.b16 %v1060, %v1052
    %v1357 = vpack.c.b16 %v1061, %v1053
    %v1358 = vpack.c.b16 %v1062, %v1054
    %v1359 = vpack.c.b16 %v1063, %v1055
    %v1360 = vpack.c.b16 %v1064, %v1056
    %v1361 = vpack.c.b16 %v1065, %v1057
    %v1362 = vpack.c.b16 %v1066, %v1058
    %v1363 = vpack.c.b16 %v1067, %v1059
    %v1364 = vpack.c.b16 %v1076, %v1068
    %v1365 = vpack.c.b16 %v1077, %v1069
    %v1366 = vpack.c.b16 %v1078, %v1070
    %v1367 = vpack.c.b16 %v1079, %v1071
    %v1368 = vpack.c.b16 %v1080, %v1072
    %v1369 = vpack.c.b16 %v1081, %v1073
    %v1370 = vpack.c.b16 %v1082, %v1074
    %v1371 = vpack.c.b16 %v1083, %v1075
    %v1372 = vpack.c.b16 %v1092, %v1084
    %v1373 = vpack.c.b16 %v1093, %v1085
    %v1374 = vpack.c.b16 %v1094, %v1086
    %v1375 = vpack.c.b16 %v1095, %v1087
    %v1376 = vpack.c.b16 %v1096, %v1088
    %v1377 = vpack.c.b16 %v1097, %v1089
    %v1378 = vpack.c.b16 %v1098, %v1090
    %v1379 = vpack.c.b16 %v1099, %v1091
    %v1380 = vpack.c.b16 %v1108, %v1100
    %v1381 = vpack.c.b16 %v1109, %v1101
    %v1382 = vpack.c.b16 %v1110, %v1102
    %v1383 = vpack.c.b16 %v1111, %v1103
    %v1384 = vpack.c.b16 %v1112, %v1104
    %v1385 = vpack.c.b16 %v1113, %v1105
    %v1386 = vpack.c.b16 %v1114, %v1106
    %v1387 = vpack.c.b16 %v1115, %v1107
    %v1388 = vpack.c.b16 %v1124, %v1116
    %v1389 = vpack.c.b16 %v1125, %v1117
    %v1390 = vpack.c.b16 %v1126, %v1118
    %v1391 = vpack.c.b16 %v1127, %v1119
    %v1392 = vpack.c.b16 %v1128, %v1120
    %v1393 = vpack.c.b16 %v1129, %v1121
    %v1394 = vpack.c.b16 %v1130, %v1122
    %v1395 = vpack.c.b16 %v1131, %v1123
    %v1396 = vpack.c.b16 %v1140, %v1132
    %v1397 = vpack.c.b16 %v1141, %v1133
    %v1398 = vpack.c.b16 %v1142, %v1134
    %v1399 = vpack.c.b16 %v1143, %v1135
    %v1400 = vpack.c.b16 %v1144, %v1136
    %v1401 = vpack.c.b16 %v1145, %v1137
    %v1402 = vpack.c.b16 %v1146, %v1138
    %v1403 = vpack.c.b16 %v1147, %v1139
    %1660 = vmatprep.subr.bf16.mxu0 %v1205
    %1661 = vmatpush1.bf16.msra.mxu0 %v1204
    %1662 = vmatprep.subr.bf16.mxu0 %v1197
    %1663 = vmatpush1.bf16.msra.mxu0 %v1196
    %1664 = vmatprep.subr.bf16.mxu0 %v1189
    %1665 = vmatpush1.bf16.msra.mxu0 %v1188
    %1666 = vmatprep.subr.bf16.mxu0 %v1181
    %1667 = vmatpush1.bf16.msra.mxu0 %v1180
    %1668 = vmatprep.subr.bf16.mxu0 %v1173
    %1669 = vmatpush1.bf16.msra.mxu0 %v1172
    %1670 = vmatprep.subr.bf16.mxu0 %v1165
    %1671 = vmatpush1.bf16.msra.mxu0 %v1164
    %1672 = vmatprep.subr.bf16.mxu0 %v1157
    %1673 = vmatpush1.bf16.msra.mxu0 %v1156
    %1674 = vmatprep.subr.bf16.mxu0 %v1149
    %1675 = vmatpush1.bf16.msra.mxu0 %v1148
    %1676 = vmatprep.subr.bf16.mxu0 %v1269
    %1677 = vmatpush2.bf16.msra.mxu0 %v1268
    %1678 = vmatprep.subr.bf16.mxu0 %v1261
    %1679 = vmatpush2.bf16.msra.mxu0 %v1260
    %1680 = vmatprep.subr.bf16.mxu0 %v1253
    %1681 = vmatpush2.bf16.msra.mxu0 %v1252
    %1682 = vmatprep.subr.bf16.mxu0 %v1245
    %1683 = vmatpush2.bf16.msra.mxu0 %v1244
    %1684 = vmatprep.subr.bf16.mxu0 %v1237
    %1685 = vmatpush2.bf16.msra.mxu0 %v1236
    %1686 = vmatprep.subr.bf16.mxu0 %v1229
    %1687 = vmatpush2.bf16.msra.mxu0 %v1228
    %1688 = vmatprep.subr.bf16.mxu0 %v1221
    %1689 = vmatpush2.bf16.msra.mxu0 %v1220
    %1690 = vmatprep.subr.bf16.mxu0 %v1213
    %1691 = vmatpush2.bf16.msra.mxu0 %v1212
    %1692 = vmatprep.mubr.bf16.mxu0 %v373
    %1693 = vmatmul.mubr.bf16.gmra.mxu0 %v372
    %v1694 = vpop.f32.mrf.mxu0
    %v1695 = vadd.f32 0.0, %v1694
    %v1696 = vpop.f32.mrf.mxu0
    %v1697 = vadd.f32 0.0, %v1696
    %v1698 = vpop.f32.mrf.mxu0
    %v1699 = vadd.f32 0.0, %v1698
    %v1700 = vpop.f32.mrf.mxu0
    %v1701 = vadd.f32 0.0, %v1700
    %1702 = vdwg.mxu0
    %1703 = vmatprep.subr.bf16.mxu0 %v1333
    %1704 = vmatpush1.bf16.msra.mxu0 %v1332
    %1705 = vmatprep.subr.bf16.mxu0 %v1325
    %1706 = vmatpush1.bf16.msra.mxu0 %v1324
    %1707 = vmatprep.subr.bf16.mxu0 %v1317
    %1708 = vmatpush1.bf16.msra.mxu0 %v1316
    %1709 = vmatprep.subr.bf16.mxu0 %v1309
    %1710 = vmatpush1.bf16.msra.mxu0 %v1308
    %1711 = vmatprep.subr.bf16.mxu0 %v1301
    %1712 = vmatpush1.bf16.msra.mxu0 %v1300
    %1713 = vmatprep.subr.bf16.mxu0 %v1293
    %1714 = vmatpush1.bf16.msra.mxu0 %v1292
    %1715 = vmatprep.subr.bf16.mxu0 %v1285
    %1716 = vmatpush1.bf16.msra.mxu0 %v1284
    %1717 = vmatprep.subr.bf16.mxu0 %v1277
    %1718 = vmatpush1.bf16.msra.mxu0 %v1276
    %1719 = vmatprep.subr.bf16.mxu0 %v1397
    %1720 = vmatpush2.bf16.msra.mxu0 %v1396
    %1721 = vmatprep.subr.bf16.mxu0 %v1389
    %1722 = vmatpush2.bf16.msra.mxu0 %v1388
    %1723 = vmatprep.subr.bf16.mxu0 %v1381
    %1724 = vmatpush2.bf16.msra.mxu0 %v1380
    %1725 = vmatprep.subr.bf16.mxu0 %v1373
    %1726 = vmatpush2.bf16.msra.mxu0 %v1372
    %1727 = vmatprep.subr.bf16.mxu0 %v1365
    %1728 = vmatpush2.bf16.msra.mxu0 %v1364
    %1729 = vmatprep.subr.bf16.mxu0 %v1357
    %1730 = vmatpush2.bf16.msra.mxu0 %v1356
    %1731 = vmatprep.subr.bf16.mxu0 %v1349
    %1732 = vmatpush2.bf16.msra.mxu0 %v1348
    %1733 = vmatprep.subr.bf16.mxu0 %v1341
    %1734 = vmatpush2.bf16.msra.mxu0 %v1340
    %1735 = vmatprep.mubr.bf16.mxu0 %v375
    %1736 = vmatmul.mubr.bf16.gmra.mxu0 %v374
    %v1737 = vpop.f32.mrf.mxu0
    %v1738 = vadd.f32 %v1695, %v1737
    %v1739 = vpop.f32.mrf.mxu0
    %v1740 = vadd.f32 %v1697, %v1739
    %v1741 = vpop.f32.mrf.mxu0
    %v1742 = vadd.f32 %v1699, %v1741
    %v1743 = vpop.f32.mrf.mxu0
    %v1744 = vadd.f32 %v1701, %v1743
    %1745 = vdwg.mxu0
    %1746 = vmatprep.subr.bf16.mxu0 %v1207
    %1747 = vmatpush1.bf16.msra.mxu0 %v1206
    %1748 = vmatprep.subr.bf16.mxu0 %v1199
    %1749 = vmatpush1.bf16.msra.mxu0 %v1198
    %1750 = vmatprep.subr.bf16.mxu0 %v1191
    %1751 = vmatpush1.bf16.msra.mxu0 %v1190
    %1752 = vmatprep.subr.bf16.mxu0 %v1183
    %1753 = vmatpush1.bf16.msra.mxu0 %v1182
    %1754 = vmatprep.subr.bf16.mxu0 %v1175
    %1755 = vmatpush1.bf16.msra.mxu0 %v1174
    %1756 = vmatprep.subr.bf16.mxu0 %v1167
    %1757 = vmatpush1.bf16.msra.mxu0 %v1166
    %1758 = vmatprep.subr.bf16.mxu0 %v1159
    %1759 = vmatpush1.bf16.msra.mxu0 %v1158
    %1760 = vmatprep.subr.bf16.mxu0 %v1151
    %1761 = vmatpush1.bf16.msra.mxu0 %v1150
    %1762 = vmatprep.subr.bf16.mxu0 %v1271
    %1763 = vmatpush2.bf16.msra.mxu0 %v1270
    %1764 = vmatprep.subr.bf16.mxu0 %v1263
    %1765 = vmatpush2.bf16.msra.mxu0 %v1262
    %1766 = vmatprep.subr.bf16.mxu0 %v1255
    %1767 = vmatpush2.bf16.msra.mxu0 %v1254
    %1768 = vmatprep.subr.bf16.mxu0 %v1247
    %1769 = vmatpush2.bf16.msra.mxu0 %v1246
    %1770 = vmatprep.subr.bf16.mxu0 %v1239
    %1771 = vmatpush2.bf16.msra.mxu0 %v1238
    %1772 = vmatprep.subr.bf16.mxu0 %v1231
    %1773 = vmatpush2.bf16.msra.mxu0 %v1230
    %1774 = vmatprep.subr.bf16.mxu0 %v1223
    %1775 = vmatpush2.bf16.msra.mxu0 %v1222
    %1776 = vmatprep.subr.bf16.mxu0 %v1215
    %1777 = vmatpush2.bf16.msra.mxu0 %v1214
    %1778 = vmatprep.mubr.bf16.mxu0 %v373
    %1779 = vmatmul.mubr.bf16.gmra.mxu0 %v372
    %v1780 = vpop.f32.mrf.mxu0
    %v1781 = vadd.f32 0.0, %v1780
    %v1782 = vpop.f32.mrf.mxu0
    %v1783 = vadd.f32 0.0, %v1782
    %v1784 = vpop.f32.mrf.mxu0
    %v1785 = vadd.f32 0.0, %v1784
    %v1786 = vpop.f32.mrf.mxu0
    %v1787 = vadd.f32 0.0, %v1786
    %1788 = vdwg.mxu0
    %1789 = vmatprep.subr.bf16.mxu0 %v1335
    %1790 = vmatpush1.bf16.msra.mxu0 %v1334
    %1791 = vmatprep.subr.bf16.mxu0 %v1327
    %1792 = vmatpush1.bf16.msra.mxu0 %v1326
    %1793 = vmatprep.subr.bf16.mxu0 %v1319
    %1794 = vmatpush1.bf16.msra.mxu0 %v1318
    %1795 = vmatprep.subr.bf16.mxu0 %v1311
    %1796 = vmatpush1.bf16.msra.mxu0 %v1310
    %1797 = vmatprep.subr.bf16.mxu0 %v1303
    %1798 = vmatpush1.bf16.msra.mxu0 %v1302
    %1799 = vmatprep.subr.bf16.mxu0 %v1295
    %1800 = vmatpush1.bf16.msra.mxu0 %v1294
    %1801 = vmatprep.subr.bf16.mxu0 %v1287
    %1802 = vmatpush1.bf16.msra.mxu0 %v1286
    %1803 = vmatprep.subr.bf16.mxu0 %v1279
    %1804 = vmatpush1.bf16.msra.mxu0 %v1278
    %1805 = vmatprep.subr.bf16.mxu0 %v1399
    %1806 = vmatpush2.bf16.msra.mxu0 %v1398
    %1807 = vmatprep.subr.bf16.mxu0 %v1391
    %1808 = vmatpush2.bf16.msra.mxu0 %v1390
    %1809 = vmatprep.subr.bf16.mxu0 %v1383
    %1810 = vmatpush2.bf16.msra.mxu0 %v1382
    %1811 = vmatprep.subr.bf16.mxu0 %v1375
    %1812 = vmatpush2.bf16.msra.mxu0 %v1374
    %1813 = vmatprep.subr.bf16.mxu0 %v1367
    %1814 = vmatpush2.bf16.msra.mxu0 %v1366
    %1815 = vmatprep.subr.bf16.mxu0 %v1359
    %1816 = vmatpush2.bf16.msra.mxu0 %v1358
    %1817 = vmatprep.subr.bf16.mxu0 %v1351
    %1818 = vmatpush2.bf16.msra.mxu0 %v1350
    %1819 = vmatprep.subr.bf16.mxu0 %v1343
    %1820 = vmatpush2.bf16.msra.mxu0 %v1342
    %1821 = vmatprep.mubr.bf16.mxu0 %v375
    %1822 = vmatmul.mubr.bf16.gmra.mxu0 %v374
    %v1823 = vpop.f32.mrf.mxu0
    %v1824 = vadd.f32 %v1781, %v1823
    %v1825 = vpop.f32.mrf.mxu0
    %v1826 = vadd.f32 %v1783, %v1825
    %v1827 = vpop.f32.mrf.mxu0
    %v1828 = vadd.f32 %v1785, %v1827
    %v1829 = vpop.f32.mrf.mxu0
    %v1830 = vadd.f32 %v1787, %v1829
    %1831 = vdwg.mxu0
    %1832 = vmatprep.subr.bf16.mxu0 %v1209
    %1833 = vmatpush1.bf16.msra.mxu0 %v1208
    %1834 = vmatprep.subr.bf16.mxu0 %v1201
    %1835 = vmatpush1.bf16.msra.mxu0 %v1200
    %1836 = vmatprep.subr.bf16.mxu0 %v1193
    %1837 = vmatpush1.bf16.msra.mxu0 %v1192
    %1838 = vmatprep.subr.bf16.mxu0 %v1185
    %1839 = vmatpush1.bf16.msra.mxu0 %v1184
    %1840 = vmatprep.subr.bf16.mxu0 %v1177
    %1841 = vmatpush1.bf16.msra.mxu0 %v1176
    %1842 = vmatprep.subr.bf16.mxu0 %v1169
    %1843 = vmatpush1.bf16.msra.mxu0 %v1168
    %1844 = vmatprep.subr.bf16.mxu0 %v1161
    %1845 = vmatpush1.bf16.msra.mxu0 %v1160
    %1846 = vmatprep.subr.bf16.mxu0 %v1153
    %1847 = vmatpush1.bf16.msra.mxu0 %v1152
    %1848 = vmatprep.subr.bf16.mxu0 %v1273
    %1849 = vmatpush2.bf16.msra.mxu0 %v1272
    %1850 = vmatprep.subr.bf16.mxu0 %v1265
    %1851 = vmatpush2.bf16.msra.mxu0 %v1264
    %1852 = vmatprep.subr.bf16.mxu0 %v1257
    %1853 = vmatpush2.bf16.msra.mxu0 %v1256
    %1854 = vmatprep.subr.bf16.mxu0 %v1249
    %1855 = vmatpush2.bf16.msra.mxu0 %v1248
    %1856 = vmatprep.subr.bf16.mxu0 %v1241
    %1857 = vmatpush2.bf16.msra.mxu0 %v1240
    %1858 = vmatprep.subr.bf16.mxu0 %v1233
    %1859 = vmatpush2.bf16.msra.mxu0 %v1232
    %1860 = vmatprep.subr.bf16.mxu0 %v1225
    %1861 = vmatpush2.bf16.msra.mxu0 %v1224
    %1862 = vmatprep.subr.bf16.mxu0 %v1217
    %1863 = vmatpush2.bf16.msra.mxu0 %v1216
    %1864 = vmatprep.mubr.bf16.mxu0 %v373
    %1865 = vmatmul.mubr.bf16.gmra.mxu0 %v372
    %v1866 = vpop.f32.mrf.mxu0
    %v1867 = vadd.f32 0.0, %v1866
    %v1868 = vpop.f32.mrf.mxu0
    %v1869 = vadd.f32 0.0, %v1868
    %v1870 = vpop.f32.mrf.mxu0
    %v1871 = vadd.f32 0.0, %v1870
    %v1872 = vpop.f32.mrf.mxu0
    %v1873 = vadd.f32 0.0, %v1872
    %1874 = vdwg.mxu0
    %1875 = vmatprep.subr.bf16.mxu0 %v1337
    %1876 = vmatpush1.bf16.msra.mxu0 %v1336
    %1877 = vmatprep.subr.bf16.mxu0 %v1329
    %1878 = vmatpush1.bf16.msra.mxu0 %v1328
    %1879 = vmatprep.subr.bf16.mxu0 %v1321
    %1880 = vmatpush1.bf16.msra.mxu0 %v1320
    %1881 = vmatprep.subr.bf16.mxu0 %v1313
    %1882 = vmatpush1.bf16.msra.mxu0 %v1312
    %1883 = vmatprep.subr.bf16.mxu0 %v1305
    %1884 = vmatpush1.bf16.msra.mxu0 %v1304
    %1885 = vmatprep.subr.bf16.mxu0 %v1297
    %1886 = vmatpush1.bf16.msra.mxu0 %v1296
    %1887 = vmatprep.subr.bf16.mxu0 %v1289
    %1888 = vmatpush1.bf16.msra.mxu0 %v1288
    %1889 = vmatprep.subr.bf16.mxu0 %v1281
    %1890 = vmatpush1.bf16.msra.mxu0 %v1280
    %1891 = vmatprep.subr.bf16.mxu0 %v1401
    %1892 = vmatpush2.bf16.msra.mxu0 %v1400
    %1893 = vmatprep.subr.bf16.mxu0 %v1393
    %1894 = vmatpush2.bf16.msra.mxu0 %v1392
    %1895 = vmatprep.subr.bf16.mxu0 %v1385
    %1896 = vmatpush2.bf16.msra.mxu0 %v1384
    %1897 = vmatprep.subr.bf16.mxu0 %v1377
    %1898 = vmatpush2.bf16.msra.mxu0 %v1376
    %1899 = vmatprep.subr.bf16.mxu0 %v1369
    %1900 = vmatpush2.bf16.msra.mxu0 %v1368
    %1901 = vmatprep.subr.bf16.mxu0 %v1361
    %1902 = vmatpush2.bf16.msra.mxu0 %v1360
    %1903 = vmatprep.subr.bf16.mxu0 %v1353
    %1904 = vmatpush2.bf16.msra.mxu0 %v1352
    %1905 = vmatprep.subr.bf16.mxu0 %v1345
    %1906 = vmatpush2.bf16.msra.mxu0 %v1344
    %1907 = vmatprep.mubr.bf16.mxu0 %v375
    %1908 = vmatmul.mubr.bf16.gmra.mxu0 %v374
    %v1909 = vpop.f32.mrf.mxu0
    %v1910 = vadd.f32 %v1867, %v1909
    %v1911 = vpop.f32.mrf.mxu0
    %v1912 = vadd.f32 %v1869, %v1911
    %v1913 = vpop.f32.mrf.mxu0
    %v1914 = vadd.f32 %v1871, %v1913
    %v1915 = vpop.f32.mrf.mxu0
    %v1916 = vadd.f32 %v1873, %v1915
    %1917 = vdwg.mxu0
    %1918 = vmatprep.subr.bf16.mxu0 %v1211
    %1919 = vmatpush1.bf16.msra.mxu0 %v1210
    %1920 = vmatprep.subr.bf16.mxu0 %v1203
    %1921 = vmatpush1.bf16.msra.mxu0 %v1202
    %1922 = vmatprep.subr.bf16.mxu0 %v1195
    %1923 = vmatpush1.bf16.msra.mxu0 %v1194
    %1924 = vmatprep.subr.bf16.mxu0 %v1187
    %1925 = vmatpush1.bf16.msra.mxu0 %v1186
    %1926 = vmatprep.subr.bf16.mxu0 %v1179
    %1927 = vmatpush1.bf16.msra.mxu0 %v1178
    %1928 = vmatprep.subr.bf16.mxu0 %v1171
    %1929 = vmatpush1.bf16.msra.mxu0 %v1170
    %1930 = vmatprep.subr.bf16.mxu0 %v1163
    %1931 = vmatpush1.bf16.msra.mxu0 %v1162
    %1932 = vmatprep.subr.bf16.mxu0 %v1155
    %1933 = vmatpush1.bf16.msra.mxu0 %v1154
    %1934 = vmatprep.subr.bf16.mxu0 %v1275
    %1935 = vmatpush2.bf16.msra.mxu0 %v1274
    %1936 = vmatprep.subr.bf16.mxu0 %v1267
    %1937 = vmatpush2.bf16.msra.mxu0 %v1266
    %1938 = vmatprep.subr.bf16.mxu0 %v1259
    %1939 = vmatpush2.bf16.msra.mxu0 %v1258
    %1940 = vmatprep.subr.bf16.mxu0 %v1251
    %1941 = vmatpush2.bf16.msra.mxu0 %v1250
    %1942 = vmatprep.subr.bf16.mxu0 %v1243
    %1943 = vmatpush2.bf16.msra.mxu0 %v1242
    %1944 = vmatprep.subr.bf16.mxu0 %v1235
    %1945 = vmatpush2.bf16.msra.mxu0 %v1234
    %1946 = vmatprep.subr.bf16.mxu0 %v1227
    %1947 = vmatpush2.bf16.msra.mxu0 %v1226
    %1948 = vmatprep.subr.bf16.mxu0 %v1219
    %1949 = vmatpush2.bf16.msra.mxu0 %v1218
    %1950 = vmatprep.mubr.bf16.mxu0 %v373
    %1951 = vmatmul.mubr.bf16.gmra.mxu0 %v372
    %v1952 = vpop.f32.mrf.mxu0
    %v1953 = vadd.f32 0.0, %v1952
    %v1954 = vpop.f32.mrf.mxu0
    %v1955 = vadd.f32 0.0, %v1954
    %v1956 = vpop.f32.mrf.mxu0
    %v1957 = vadd.f32 0.0, %v1956
    %v1958 = vpop.f32.mrf.mxu0
    %v1959 = vadd.f32 0.0, %v1958
    %1960 = vdwg.mxu0
    %1961 = vmatprep.subr.bf16.mxu0 %v1339
    %1962 = vmatpush1.bf16.msra.mxu0 %v1338
    %1963 = vmatprep.subr.bf16.mxu0 %v1331
    %1964 = vmatpush1.bf16.msra.mxu0 %v1330
    %1965 = vmatprep.subr.bf16.mxu0 %v1323
    %1966 = vmatpush1.bf16.msra.mxu0 %v1322
    %1967 = vmatprep.subr.bf16.mxu0 %v1315
    %1968 = vmatpush1.bf16.msra.mxu0 %v1314
    %1969 = vmatprep.subr.bf16.mxu0 %v1307
    %1970 = vmatpush1.bf16.msra.mxu0 %v1306
    %1971 = vmatprep.subr.bf16.mxu0 %v1299
    %1972 = vmatpush1.bf16.msra.mxu0 %v1298
    %1973 = vmatprep.subr.bf16.mxu0 %v1291
    %1974 = vmatpush1.bf16.msra.mxu0 %v1290
    %1975 = vmatprep.subr.bf16.mxu0 %v1283
    %1976 = vmatpush1.bf16.msra.mxu0 %v1282
    %1977 = vmatprep.subr.bf16.mxu0 %v1403
    %1978 = vmatpush2.bf16.msra.mxu0 %v1402
    %1979 = vmatprep.subr.bf16.mxu0 %v1395
    %1980 = vmatpush2.bf16.msra.mxu0 %v1394
    %1981 = vmatprep.subr.bf16.mxu0 %v1387
    %1982 = vmatpush2.bf16.msra.mxu0 %v1386
    %1983 = vmatprep.subr.bf16.mxu0 %v1379
    %1984 = vmatpush2.bf16.msra.mxu0 %v1378
    %1985 = vmatprep.subr.bf16.mxu0 %v1371
    %1986 = vmatpush2.bf16.msra.mxu0 %v1370
    %1987 = vmatprep.subr.bf16.mxu0 %v1363
    %1988 = vmatpush2.bf16.msra.mxu0 %v1362
    %1989 = vmatprep.subr.bf16.mxu0 %v1355
    %1990 = vmatpush2.bf16.msra.mxu0 %v1354
    %1991 = vmatprep.subr.bf16.mxu0 %v1347
    %1992 = vmatpush2.bf16.msra.mxu0 %v1346
    %1993 = vmatprep.mubr.bf16.mxu0 %v375
    %1994 = vmatmul.mubr.bf16.gmra.mxu0 %v374
    %v1995 = vpop.f32.mrf.mxu0
    %v1996 = vadd.f32 %v1953, %v1995
    %v1997 = vpop.f32.mrf.mxu0
    %v1998 = vadd.f32 %v1955, %v1997
    %v1999 = vpop.f32.mrf.mxu0
    %v2000 = vadd.f32 %v1957, %v1999
    %v2001 = vpop.f32.mrf.mxu0
    %v2002 = vadd.f32 %v1959, %v2001
    %2003 = vdwg.mxu0
    %v2004 = vadd.f32 %v1738, %v1742
    %v2005 = vrot.slane %v2004, 4
    %v2006 = vadd.f32 %v2004, %v2005
    %v2007 = vrot.slane %v2006, 2
    %v2008 = vadd.f32 %v2006, %v2007
    %v2009 = vrot.slane %v2008, 1
    %v2010 = vadd.f32 %v2008, %v2009
    %v2011 = vadd.f32 %v1740, %v1744
    %v2012 = vrot.slane %v2011, 4
    %v2013 = vadd.f32 %v2011, %v2012
    %v2014 = vrot.slane %v2013, 2
    %v2015 = vadd.f32 %v2013, %v2014
    %v2016 = vrot.slane %v2015, 1
    %v2017 = vadd.f32 %v2015, %v2016
    %v2018 = vadd.f32 %v1824, %v1828
    %v2019 = vrot.slane %v2018, 4
    %v2020 = vadd.f32 %v2018, %v2019
    %v2021 = vrot.slane %v2020, 2
    %v2022 = vadd.f32 %v2020, %v2021
    %v2023 = vrot.slane %v2022, 1
    %v2024 = vadd.f32 %v2022, %v2023
    %v2025 = vadd.f32 %v1826, %v1830
    %v2026 = vrot.slane %v2025, 4
    %v2027 = vadd.f32 %v2025, %v2026
    %v2028 = vrot.slane %v2027, 2
    %v2029 = vadd.f32 %v2027, %v2028
    %v2030 = vrot.slane %v2029, 1
    %v2031 = vadd.f32 %v2029, %v2030
    %v2032 = vadd.f32 %v1910, %v1914
    %v2033 = vrot.slane %v2032, 4
    %v2034 = vadd.f32 %v2032, %v2033
    %v2035 = vrot.slane %v2034, 2
    %v2036 = vadd.f32 %v2034, %v2035
    %v2037 = vrot.slane %v2036, 1
    %v2038 = vadd.f32 %v2036, %v2037
    %v2039 = vadd.f32 %v1912, %v1916
    %v2040 = vrot.slane %v2039, 4
    %v2041 = vadd.f32 %v2039, %v2040
    %v2042 = vrot.slane %v2041, 2
    %v2043 = vadd.f32 %v2041, %v2042
    %v2044 = vrot.slane %v2043, 1
    %v2045 = vadd.f32 %v2043, %v2044
    %v2046 = vadd.f32 %v1996, %v2000
    %v2047 = vrot.slane %v2046, 4
    %v2048 = vadd.f32 %v2046, %v2047
    %v2049 = vrot.slane %v2048, 2
    %v2050 = vadd.f32 %v2048, %v2049
    %v2051 = vrot.slane %v2050, 1
    %v2052 = vadd.f32 %v2050, %v2051
    %v2053 = vadd.f32 %v1998, %v2002
    %v2054 = vrot.slane %v2053, 4
    %v2055 = vadd.f32 %v2053, %v2054
    %v2056 = vrot.slane %v2055, 2
    %v2057 = vadd.f32 %v2055, %v2056
    %v2058 = vrot.slane %v2057, 1
    %v2059 = vadd.f32 %v2057, %v2058
    %v2060 = vmul.f32 %v2010, 0.0625
    %v2061 = vmul.f32 %v2017, 0.0625
    %v2062 = vmul.f32 %v2024, 0.0625
    %v2063 = vmul.f32 %v2031, 0.0625
    %v2064 = vmul.f32 %v2038, 0.0625
    %v2065 = vmul.f32 %v2045, 0.0625
    %v2066 = vmul.f32 %v2052, 0.0625
    %v2067 = vmul.f32 %v2059, 0.0625
    %v2068 = vmul.f32 %v1738, %v1738
    %v2069 = vmul.f32 %v1740, %v1740
    %v2070 = vmul.f32 %v1824, %v1824
    %v2071 = vmul.f32 %v1826, %v1826
    %v2072 = vmul.f32 %v1910, %v1910
    %v2073 = vmul.f32 %v1912, %v1912
    %v2074 = vmul.f32 %v1996, %v1996
    %v2075 = vmul.f32 %v1998, %v1998
    %v2076 = vmul.f32 %v1742, %v1742
    %v2077 = vmul.f32 %v1744, %v1744
    %v2078 = vmul.f32 %v1828, %v1828
    %v2079 = vmul.f32 %v1830, %v1830
    %v2080 = vmul.f32 %v1914, %v1914
    %v2081 = vmul.f32 %v1916, %v1916
    %v2082 = vmul.f32 %v2000, %v2000
    %v2083 = vmul.f32 %v2002, %v2002
    %v2084 = vadd.f32 %v2068, %v2076
    %v2085 = vrot.slane %v2084, 4
    %v2086 = vadd.f32 %v2084, %v2085
    %v2087 = vrot.slane %v2086, 2
    %v2088 = vadd.f32 %v2086, %v2087
    %v2089 = vrot.slane %v2088, 1
    %v2090 = vadd.f32 %v2088, %v2089
    %v2091 = vadd.f32 %v2069, %v2077
    %v2092 = vrot.slane %v2091, 4
    %v2093 = vadd.f32 %v2091, %v2092
    %v2094 = vrot.slane %v2093, 2
    %v2095 = vadd.f32 %v2093, %v2094
    %v2096 = vrot.slane %v2095, 1
    %v2097 = vadd.f32 %v2095, %v2096
    %v2098 = vadd.f32 %v2070, %v2078
    %v2099 = vrot.slane %v2098, 4
    %v2100 = vadd.f32 %v2098, %v2099
    %v2101 = vrot.slane %v2100, 2
    %v2102 = vadd.f32 %v2100, %v2101
    %v2103 = vrot.slane %v2102, 1
    %v2104 = vadd.f32 %v2102, %v2103
    %v2105 = vadd.f32 %v2071, %v2079
    %v2106 = vrot.slane %v2105, 4
    %v2107 = vadd.f32 %v2105, %v2106
    %v2108 = vrot.slane %v2107, 2
    %v2109 = vadd.f32 %v2107, %v2108
    %v2110 = vrot.slane %v2109, 1
    %v2111 = vadd.f32 %v2109, %v2110
    %v2112 = vadd.f32 %v2072, %v2080
    %v2113 = vrot.slane %v2112, 4
    %v2114 = vadd.f32 %v2112, %v2113
    %v2115 = vrot.slane %v2114, 2
    %v2116 = vadd.f32 %v2114, %v2115
    %v2117 = vrot.slane %v2116, 1
    %v2118 = vadd.f32 %v2116, %v2117
    %v2119 = vadd.f32 %v2073, %v2081
    %v2120 = vrot.slane %v2119, 4
    %v2121 = vadd.f32 %v2119, %v2120
    %v2122 = vrot.slane %v2121, 2
    %v2123 = vadd.f32 %v2121, %v2122
    %v2124 = vrot.slane %v2123, 1
    %v2125 = vadd.f32 %v2123, %v2124
    %v2126 = vadd.f32 %v2074, %v2082
    %v2127 = vrot.slane %v2126, 4
    %v2128 = vadd.f32 %v2126, %v2127
    %v2129 = vrot.slane %v2128, 2
    %v2130 = vadd.f32 %v2128, %v2129
    %v2131 = vrot.slane %v2130, 1
    %v2132 = vadd.f32 %v2130, %v2131
    %v2133 = vadd.f32 %v2075, %v2083
    %v2134 = vrot.slane %v2133, 4
    %v2135 = vadd.f32 %v2133, %v2134
    %v2136 = vrot.slane %v2135, 2
    %v2137 = vadd.f32 %v2135, %v2136
    %v2138 = vrot.slane %v2137, 1
    %v2139 = vadd.f32 %v2137, %v2138
    %v2140 = vmul.f32 %v2090, 0.0625
    %v2141 = vmul.f32 %v2097, 0.0625
    %v2142 = vmul.f32 %v2104, 0.0625
    %v2143 = vmul.f32 %v2111, 0.0625
    %v2144 = vmul.f32 %v2118, 0.0625
    %v2145 = vmul.f32 %v2125, 0.0625
    %v2146 = vmul.f32 %v2132, 0.0625
    %v2147 = vmul.f32 %v2139, 0.0625
    %v2148 = vmul.f32 %v2060, %v2060
    %v2149 = vmul.f32 %v2061, %v2061
    %v2150 = vmul.f32 %v2062, %v2062
    %v2151 = vmul.f32 %v2063, %v2063
    %v2152 = vmul.f32 %v2064, %v2064
    %v2153 = vmul.f32 %v2065, %v2065
    %v2154 = vmul.f32 %v2066, %v2066
    %v2155 = vmul.f32 %v2067, %v2067
    %v2156 = vsub.f32 %v2140, %v2148
    %v2157 = vsub.f32 %v2141, %v2149
    %v2158 = vsub.f32 %v2142, %v2150
    %v2159 = vsub.f32 %v2143, %v2151
    %v2160 = vsub.f32 %v2144, %v2152
    %v2161 = vsub.f32 %v2145, %v2153
    %v2162 = vsub.f32 %v2146, %v2154
    %v2163 = vsub.f32 %v2147, %v2155
    %v2164 = vadd.f32 %v2156, 1e-05
    %v2165 = vadd.f32 %v2157, 1e-05
    %v2166 = vadd.f32 %v2158, 1e-05
    %v2167 = vadd.f32 %v2159, 1e-05
    %v2168 = vadd.f32 %v2160, 1e-05
    %v2169 = vadd.f32 %v2161, 1e-05
    %v2170 = vadd.f32 %v2162, 1e-05
    %v2171 = vadd.f32 %v2163, 1e-05
    %v2172 = vrsqrt.pop %v2164
    %v2173 = vrsqrt.pop %v2165
    %v2174 = vrsqrt.pop %v2166
    %v2175 = vrsqrt.pop %v2167
    %v2176 = vrsqrt.pop %v2168
    %v2177 = vrsqrt.pop %v2169
    %v2178 = vrsqrt.pop %v2170
    %v2179 = vrsqrt.pop %v2171
    %v2188 = vcombine.low %v2172, %v2173
    %v2189 = vcombine.low %v2174, %v2175
    %v2190 = vcombine.low %v2176, %v2177
    %v2191 = vcombine.low %v2178, %v2179
    %v2193 = vunpack.c.l.s4 1966171168
    %v2194 = vunpack.c.0.s8 %v2193
    %v2195 = vlaneseq
    %v2196 = vshrl.u32 %v2195, 7
    %v2197 = vsub.s32 %v2194, %v2196
    %v2198 = vrot.slane %v2188, %v2197
    %v2200 = vunpack.c.l.s4 1966171168
    %v2201 = vunpack.c.0.s8 %v2200
    %v2202 = vlaneseq
    %v2203 = vshrl.u32 %v2202, 7
    %v2204 = vsub.s32 %v2201, %v2203
    %v2205 = vrot.slane %v2189, %v2204
    %v2207 = vunpack.c.l.s4 1966171168
    %v2208 = vunpack.c.0.s8 %v2207
    %v2209 = vlaneseq
    %v2210 = vshrl.u32 %v2209, 7
    %v2211 = vsub.s32 %v2208, %v2210
    %v2212 = vrot.slane %v2190, %v2211
    %v2214 = vunpack.c.l.s4 1966171168
    %v2215 = vunpack.c.0.s8 %v2214
    %v2216 = vlaneseq
    %v2217 = vshrl.u32 %v2216, 7
    %v2218 = vsub.s32 %v2215, %v2217
    %v2219 = vrot.slane %v2191, %v2218
    %v2220 = vcombine.low %v2198, %v2205
    %v2221 = vcombine.low %v2212, %v2219
    %v2223 = vunpack.c.l.s4 1966171168
    %v2224 = vunpack.c.0.s8 %v2223
    %v2225 = vlaneseq
    %v2226 = vshrl.u32 %v2225, 7
    %v2227 = vsub.s32 %v2224, %v2226
    %v2228 = vrot.slane %v2220, %v2227
    %v2230 = vunpack.c.l.s4 1966171168
    %v2231 = vunpack.c.0.s8 %v2230
    %v2232 = vlaneseq
    %v2233 = vshrl.u32 %v2232, 7
    %v2234 = vsub.s32 %v2231, %v2233
    %v2235 = vrot.slane %v2221, %v2234
    %v2236 = vcombine.low %v2228, %v2235
    %v2238 = vmul.f32 %v355, %v2236
    %v2240 = vlaneseq
    %v2241 = vshrl.u32 %v2240, 7
    %v2242 = vsub.s32 0, %v2241
    %v2243 = vrot.slane %v2238, %v2242
    %v2244 = vlaneseq
    %v2245 = vshrl.u32 %v2244, 7
    %v2246 = vsub.s32 1, %v2245
    %v2247 = vrot.slane %v2238, %v2246
    %v2248 = vlaneseq
    %v2249 = vshrl.u32 %v2248, 7
    %v2250 = vsub.s32 2, %v2249
    %v2251 = vrot.slane %v2238, %v2250
    %v2252 = vlaneseq
    %v2253 = vshrl.u32 %v2252, 7
    %v2254 = vsub.s32 3, %v2253
    %v2255 = vrot.slane %v2238, %v2254
    %v2256 = vlaneseq
    %v2257 = vshrl.u32 %v2256, 7
    %v2258 = vsub.s32 4, %v2257
    %v2259 = vrot.slane %v2238, %v2258
    %v2260 = vlaneseq
    %v2261 = vshrl.u32 %v2260, 7
    %v2262 = vsub.s32 5, %v2261
    %v2263 = vrot.slane %v2238, %v2262
    %v2264 = vlaneseq
    %v2265 = vshrl.u32 %v2264, 7
    %v2266 = vsub.s32 6, %v2265
    %v2267 = vrot.slane %v2238, %v2266
    %v2268 = vlaneseq
    %v2269 = vshrl.u32 %v2268, 7
    %v2270 = vsub.s32 7, %v2269
    %v2271 = vrot.slane %v2238, %v2270
    %v2280 = vmul.f32 %v2060, %v2243
    %v2281 = vmul.f32 %v2061, %v2247
    %v2282 = vmul.f32 %v2062, %v2251
    %v2283 = vmul.f32 %v2063, %v2255
    %v2284 = vmul.f32 %v2064, %v2259
    %v2285 = vmul.f32 %v2065, %v2263
    %v2286 = vmul.f32 %v2066, %v2267
    %v2287 = vmul.f32 %v2067, %v2271
    %v2296 = vcombine.low %v2280, %v2281
    %v2297 = vcombine.low %v2282, %v2283
    %v2298 = vcombine.low %v2284, %v2285
    %v2299 = vcombine.low %v2286, %v2287
    %v2301 = vunpack.c.l.s4 1966171168
    %v2302 = vunpack.c.0.s8 %v2301
    %v2303 = vlaneseq
    %v2304 = vshrl.u32 %v2303, 7
    %v2305 = vsub.s32 %v2302, %v2304
    %v2306 = vrot.slane %v2296, %v2305
    %v2308 = vunpack.c.l.s4 1966171168
    %v2309 = vunpack.c.0.s8 %v2308
    %v2310 = vlaneseq
    %v2311 = vshrl.u32 %v2310, 7
    %v2312 = vsub.s32 %v2309, %v2311
    %v2313 = vrot.slane %v2297, %v2312
    %v2315 = vunpack.c.l.s4 1966171168
    %v2316 = vunpack.c.0.s8 %v2315
    %v2317 = vlaneseq
    %v2318 = vshrl.u32 %v2317, 7
    %v2319 = vsub.s32 %v2316, %v2318
    %v2320 = vrot.slane %v2298, %v2319
    %v2322 = vunpack.c.l.s4 1966171168
    %v2323 = vunpack.c.0.s8 %v2322
    %v2324 = vlaneseq
    %v2325 = vshrl.u32 %v2324, 7
    %v2326 = vsub.s32 %v2323, %v2325
    %v2327 = vrot.slane %v2299, %v2326
    %v2328 = vcombine.low %v2306, %v2313
    %v2329 = vcombine.low %v2320, %v2327
    %v2331 = vunpack.c.l.s4 1966171168
    %v2332 = vunpack.c.0.s8 %v2331
    %v2333 = vlaneseq
    %v2334 = vshrl.u32 %v2333, 7
    %v2335 = vsub.s32 %v2332, %v2334
    %v2336 = vrot.slane %v2328, %v2335
    %v2338 = vunpack.c.l.s4 1966171168
    %v2339 = vunpack.c.0.s8 %v2338
    %v2340 = vlaneseq
    %v2341 = vshrl.u32 %v2340, 7
    %v2342 = vsub.s32 %v2339, %v2341
    %v2343 = vrot.slane %v2329, %v2342
    %v2344 = vcombine.low %v2336, %v2343
    %v2346 = vsub.f32 %v359, %v2344
    %v2347 = vmul.f32 %v1738, %v2243
    %v2348 = vmul.f32 %v1740, %v2247
    %v2349 = vmul.f32 %v1824, %v2251
    %v2350 = vmul.f32 %v1826, %v2255
    %v2351 = vmul.f32 %v1910, %v2259
    %v2352 = vmul.f32 %v1912, %v2263
    %v2353 = vmul.f32 %v1996, %v2267
    %v2354 = vmul.f32 %v1998, %v2271
    %v2355 = vmul.f32 %v1742, %v2243
    %v2356 = vmul.f32 %v1744, %v2247
    %v2357 = vmul.f32 %v1828, %v2251
    %v2358 = vmul.f32 %v1830, %v2255
    %v2359 = vmul.f32 %v1914, %v2259
    %v2360 = vmul.f32 %v1916, %v2263
    %v2361 = vmul.f32 %v2000, %v2267
    %v2362 = vmul.f32 %v2002, %v2271
    %v2364 = vlaneseq
    %v2365 = vshrl.u32 %v2364, 7
    %v2366 = vsub.s32 0, %v2365
    %v2367 = vrot.slane %v2346, %v2366
    %v2368 = vlaneseq
    %v2369 = vshrl.u32 %v2368, 7
    %v2370 = vsub.s32 1, %v2369
    %v2371 = vrot.slane %v2346, %v2370
    %v2372 = vlaneseq
    %v2373 = vshrl.u32 %v2372, 7
    %v2374 = vsub.s32 2, %v2373
    %v2375 = vrot.slane %v2346, %v2374
    %v2376 = vlaneseq
    %v2377 = vshrl.u32 %v2376, 7
    %v2378 = vsub.s32 3, %v2377
    %v2379 = vrot.slane %v2346, %v2378
    %v2380 = vlaneseq
    %v2381 = vshrl.u32 %v2380, 7
    %v2382 = vsub.s32 4, %v2381
    %v2383 = vrot.slane %v2346, %v2382
    %v2384 = vlaneseq
    %v2385 = vshrl.u32 %v2384, 7
    %v2386 = vsub.s32 5, %v2385
    %v2387 = vrot.slane %v2346, %v2386
    %v2388 = vlaneseq
    %v2389 = vshrl.u32 %v2388, 7
    %v2390 = vsub.s32 6, %v2389
    %v2391 = vrot.slane %v2346, %v2390
    %v2392 = vlaneseq
    %v2393 = vshrl.u32 %v2392, 7
    %v2394 = vsub.s32 7, %v2393
    %v2395 = vrot.slane %v2346, %v2394
    %v2404 = vadd.f32 %v2347, %v2367
    %v2405 = vadd.f32 %v2348, %v2371
    %v2406 = vadd.f32 %v2349, %v2375
    %v2407 = vadd.f32 %v2350, %v2379
    %v2408 = vadd.f32 %v2351, %v2383
    %v2409 = vadd.f32 %v2352, %v2387
    %v2410 = vadd.f32 %v2353, %v2391
    %v2411 = vadd.f32 %v2354, %v2395
    %v2412 = vadd.f32 %v2355, %v2367
    %v2413 = vadd.f32 %v2356, %v2371
    %v2414 = vadd.f32 %v2357, %v2375
    %v2415 = vadd.f32 %v2358, %v2379
    %v2416 = vadd.f32 %v2359, %v2383
    %v2417 = vadd.f32 %v2360, %v2387
    %v2418 = vadd.f32 %v2361, %v2391
    %v2419 = vadd.f32 %v2362, %v2395
    %v2420 = vmul.f32 %v2404, 0.01
    %v2421 = vmul.f32 %v2405, 0.01
    %v2422 = vmul.f32 %v2406, 0.01
    %v2423 = vmul.f32 %v2407, 0.01
    %v2424 = vmul.f32 %v2408, 0.01
    %v2425 = vmul.f32 %v2409, 0.01
    %v2426 = vmul.f32 %v2410, 0.01
    %v2427 = vmul.f32 %v2411, 0.01
    %v2428 = vmul.f32 %v2412, 0.01
    %v2429 = vmul.f32 %v2413, 0.01
    %v2430 = vmul.f32 %v2414, 0.01
    %v2431 = vmul.f32 %v2415, 0.01
    %v2432 = vmul.f32 %v2416, 0.01
    %v2433 = vmul.f32 %v2417, 0.01
    %v2434 = vmul.f32 %v2418, 0.01
    %v2435 = vmul.f32 %v2419, 0.01
    %v2436 = vmax.f32 %v2404, %v2420
    %v2437 = vmax.f32 %v2405, %v2421
    %v2438 = vmax.f32 %v2406, %v2422
    %v2439 = vmax.f32 %v2407, %v2423
    %v2440 = vmax.f32 %v2408, %v2424
    %v2441 = vmax.f32 %v2409, %v2425
    %v2442 = vmax.f32 %v2410, %v2426
    %v2443 = vmax.f32 %v2411, %v2427
    %v2444 = vmax.f32 %v2412, %v2428
    %v2445 = vmax.f32 %v2413, %v2429
    %v2446 = vmax.f32 %v2414, %v2430
    %v2447 = vmax.f32 %v2415, %v2431
    %v2448 = vmax.f32 %v2416, %v2432
    %v2449 = vmax.f32 %v2417, %v2433
    %v2450 = vmax.f32 %v2418, %v2434
    %v2451 = vmax.f32 %v2419, %v2435
    %s2452 = smul.u32 4, 128
    %s2453 = smul.u32 %s2452, 4
    %s2454 = sshll.u32 %s2453, 4
    %2455 = dma.done [#allocation5], %s2454
    %v2456 = vld [vmem:[#allocation2] sm:$0xff]
    %v2457 = vld [vmem:[#allocation2 + $0x8] sm:$0xff]
    %v2458 = vld [vmem:[#allocation2 + $0x10] sm:$0xff]
    %v2459 = vld [vmem:[#allocation2 + $0x18] sm:$0xff]
    %v2460 = vld [vmem:[#allocation2 + $0x20] sm:$0xff]
    %v2461 = vld [vmem:[#allocation2 + $0x28] sm:$0xff]
    %v2462 = vld [vmem:[#allocation2 + $0x30] sm:$0xff]
    %v2463 = vld [vmem:[#allocation2 + $0x38] sm:$0xff]
    %v2464 = vld [vmem:[#allocation2 + $0x40] sm:$0xff]
    %v2465 = vld [vmem:[#allocation2 + $0x48] sm:$0xff]
    %v2466 = vld [vmem:[#allocation2 + $0x50] sm:$0xff]
    %v2467 = vld [vmem:[#allocation2 + $0x58] sm:$0xff]
    %v2468 = vld [vmem:[#allocation2 + $0x60] sm:$0xff]
    %v2469 = vld [vmem:[#allocation2 + $0x68] sm:$0xff]
    %v2470 = vld [vmem:[#allocation2 + $0x70] sm:$0xff]
    %v2471 = vld [vmem:[#allocation2 + $0x78] sm:$0xff]
    %v2472 = vld [vmem:[#allocation2 + $0x80] sm:$0xff]
    %v2473 = vld [vmem:[#allocation2 + $0x88] sm:$0xff]
    %v2474 = vld [vmem:[#allocation2 + $0x90] sm:$0xff]
    %v2475 = vld [vmem:[#allocation2 + $0x98] sm:$0xff]
    %v2476 = vld [vmem:[#allocation2 + $0xa0] sm:$0xff]
    %v2477 = vld [vmem:[#allocation2 + $0xa8] sm:$0xff]
    %v2478 = vld [vmem:[#allocation2 + $0xb0] sm:$0xff]
    %v2479 = vld [vmem:[#allocation2 + $0xb8] sm:$0xff]
    %v2480 = vld [vmem:[#allocation2 + $0xc0] sm:$0xff]
    %v2481 = vld [vmem:[#allocation2 + $0xc8] sm:$0xff]
    %v2482 = vld [vmem:[#allocation2 + $0xd0] sm:$0xff]
    %v2483 = vld [vmem:[#allocation2 + $0xd8] sm:$0xff]
    %v2484 = vld [vmem:[#allocation2 + $0xe0] sm:$0xff]
    %v2485 = vld [vmem:[#allocation2 + $0xe8] sm:$0xff]
    %v2486 = vld [vmem:[#allocation2 + $0xf0] sm:$0xff]
    %v2487 = vld [vmem:[#allocation2 + $0xf8] sm:$0xff]
    %v2488 = vld [vmem:[#allocation2 + $0x100] sm:$0xff]
    %v2489 = vld [vmem:[#allocation2 + $0x108] sm:$0xff]
    %v2490 = vld [vmem:[#allocation2 + $0x110] sm:$0xff]
    %v2491 = vld [vmem:[#allocation2 + $0x118] sm:$0xff]
    %v2492 = vld [vmem:[#allocation2 + $0x120] sm:$0xff]
    %v2493 = vld [vmem:[#allocation2 + $0x128] sm:$0xff]
    %v2494 = vld [vmem:[#allocation2 + $0x130] sm:$0xff]
    %v2495 = vld [vmem:[#allocation2 + $0x138] sm:$0xff]
    %v2496 = vld [vmem:[#allocation2 + $0x140] sm:$0xff]
    %v2497 = vld [vmem:[#allocation2 + $0x148] sm:$0xff]
    %v2498 = vld [vmem:[#allocation2 + $0x150] sm:$0xff]
    %v2499 = vld [vmem:[#allocation2 + $0x158] sm:$0xff]
    %v2500 = vld [vmem:[#allocation2 + $0x160] sm:$0xff]
    %v2501 = vld [vmem:[#allocation2 + $0x168] sm:$0xff]
    %v2502 = vld [vmem:[#allocation2 + $0x170] sm:$0xff]
    %v2503 = vld [vmem:[#allocation2 + $0x178] sm:$0xff]
    %v2504 = vld [vmem:[#allocation2 + $0x180] sm:$0xff]
    %v2505 = vld [vmem:[#allocation2 + $0x188] sm:$0xff]
    %v2506 = vld [vmem:[#allocation2 + $0x190] sm:$0xff]
    %v2507 = vld [vmem:[#allocation2 + $0x198] sm:$0xff]
    %v2508 = vld [vmem:[#allocation2 + $0x1a0] sm:$0xff]
    %v2509 = vld [vmem:[#allocation2 + $0x1a8] sm:$0xff]
    %v2510 = vld [vmem:[#allocation2 + $0x1b0] sm:$0xff]
    %v2511 = vld [vmem:[#allocation2 + $0x1b8] sm:$0xff]
    %v2512 = vld [vmem:[#allocation2 + $0x1c0] sm:$0xff]
    %v2513 = vld [vmem:[#allocation2 + $0x1c8] sm:$0xff]
    %v2514 = vld [vmem:[#allocation2 + $0x1d0] sm:$0xff]
    %v2515 = vld [vmem:[#allocation2 + $0x1d8] sm:$0xff]
    %v2516 = vld [vmem:[#allocation2 + $0x1e0] sm:$0xff]
    %v2517 = vld [vmem:[#allocation2 + $0x1e8] sm:$0xff]
    %v2518 = vld [vmem:[#allocation2 + $0x1f0] sm:$0xff]
    %v2519 = vld [vmem:[#allocation2 + $0x1f8] sm:$0xff]
    %v2520 = vld [vmem:[#allocation2 + $0x200] sm:$0xff]
    %v2521 = vld [vmem:[#allocation2 + $0x208] sm:$0xff]
    %v2522 = vld [vmem:[#allocation2 + $0x210] sm:$0xff]
    %v2523 = vld [vmem:[#allocation2 + $0x218] sm:$0xff]
    %v2524 = vld [vmem:[#allocation2 + $0x220] sm:$0xff]
    %v2525 = vld [vmem:[#allocation2 + $0x228] sm:$0xff]
    %v2526 = vld [vmem:[#allocation2 + $0x230] sm:$0xff]
    %v2527 = vld [vmem:[#allocation2 + $0x238] sm:$0xff]
    %v2528 = vld [vmem:[#allocation2 + $0x240] sm:$0xff]
    %v2529 = vld [vmem:[#allocation2 + $0x248] sm:$0xff]
    %v2530 = vld [vmem:[#allocation2 + $0x250] sm:$0xff]
    %v2531 = vld [vmem:[#allocation2 + $0x258] sm:$0xff]
    %v2532 = vld [vmem:[#allocation2 + $0x260] sm:$0xff]
    %v2533 = vld [vmem:[#allocation2 + $0x268] sm:$0xff]
    %v2534 = vld [vmem:[#allocation2 + $0x270] sm:$0xff]
    %v2535 = vld [vmem:[#allocation2 + $0x278] sm:$0xff]
    %v2536 = vld [vmem:[#allocation2 + $0x280] sm:$0xff]
    %v2537 = vld [vmem:[#allocation2 + $0x288] sm:$0xff]
    %v2538 = vld [vmem:[#allocation2 + $0x290] sm:$0xff]
    %v2539 = vld [vmem:[#allocation2 + $0x298] sm:$0xff]
    %v2540 = vld [vmem:[#allocation2 + $0x2a0] sm:$0xff]
    %v2541 = vld [vmem:[#allocation2 + $0x2a8] sm:$0xff]
    %v2542 = vld [vmem:[#allocation2 + $0x2b0] sm:$0xff]
    %v2543 = vld [vmem:[#allocation2 + $0x2b8] sm:$0xff]
    %v2544 = vld [vmem:[#allocation2 + $0x2c0] sm:$0xff]
    %v2545 = vld [vmem:[#allocation2 + $0x2c8] sm:$0xff]
    %v2546 = vld [vmem:[#allocation2 + $0x2d0] sm:$0xff]
    %v2547 = vld [vmem:[#allocation2 + $0x2d8] sm:$0xff]
    %v2548 = vld [vmem:[#allocation2 + $0x2e0] sm:$0xff]
    %v2549 = vld [vmem:[#allocation2 + $0x2e8] sm:$0xff]
    %v2550 = vld [vmem:[#allocation2 + $0x2f0] sm:$0xff]
    %v2551 = vld [vmem:[#allocation2 + $0x2f8] sm:$0xff]
    %v2552 = vld [vmem:[#allocation2 + $0x300] sm:$0xff]
    %v2553 = vld [vmem:[#allocation2 + $0x308] sm:$0xff]
    %v2554 = vld [vmem:[#allocation2 + $0x310] sm:$0xff]
    %v2555 = vld [vmem:[#allocation2 + $0x318] sm:$0xff]
    %v2556 = vld [vmem:[#allocation2 + $0x320] sm:$0xff]
    %v2557 = vld [vmem:[#allocation2 + $0x328] sm:$0xff]
    %v2558 = vld [vmem:[#allocation2 + $0x330] sm:$0xff]
    %v2559 = vld [vmem:[#allocation2 + $0x338] sm:$0xff]
    %v2560 = vld [vmem:[#allocation2 + $0x340] sm:$0xff]
    %v2561 = vld [vmem:[#allocation2 + $0x348] sm:$0xff]
    %v2562 = vld [vmem:[#allocation2 + $0x350] sm:$0xff]
    %v2563 = vld [vmem:[#allocation2 + $0x358] sm:$0xff]
    %v2564 = vld [vmem:[#allocation2 + $0x360] sm:$0xff]
    %v2565 = vld [vmem:[#allocation2 + $0x368] sm:$0xff]
    %v2566 = vld [vmem:[#allocation2 + $0x370] sm:$0xff]
    %v2567 = vld [vmem:[#allocation2 + $0x378] sm:$0xff]
    %v2568 = vld [vmem:[#allocation2 + $0x380] sm:$0xff]
    %v2569 = vld [vmem:[#allocation2 + $0x388] sm:$0xff]
    %v2570 = vld [vmem:[#allocation2 + $0x390] sm:$0xff]
    %v2571 = vld [vmem:[#allocation2 + $0x398] sm:$0xff]
    %v2572 = vld [vmem:[#allocation2 + $0x3a0] sm:$0xff]
    %v2573 = vld [vmem:[#allocation2 + $0x3a8] sm:$0xff]
    %v2574 = vld [vmem:[#allocation2 + $0x3b0] sm:$0xff]
    %v2575 = vld [vmem:[#allocation2 + $0x3b8] sm:$0xff]
    %v2576 = vld [vmem:[#allocation2 + $0x3c0] sm:$0xff]
    %v2577 = vld [vmem:[#allocation2 + $0x3c8] sm:$0xff]
    %v2578 = vld [vmem:[#allocation2 + $0x3d0] sm:$0xff]
    %v2579 = vld [vmem:[#allocation2 + $0x3d8] sm:$0xff]
    %v2580 = vld [vmem:[#allocation2 + $0x3e0] sm:$0xff]
    %v2581 = vld [vmem:[#allocation2 + $0x3e8] sm:$0xff]
    %v2582 = vld [vmem:[#allocation2 + $0x3f0] sm:$0xff]
    %v2583 = vld [vmem:[#allocation2 + $0x3f8] sm:$0xff]
    %v2584 = vld [vmem:[#allocation2 + $0x400] sm:$0xff]
    %v2585 = vld [vmem:[#allocation2 + $0x408] sm:$0xff]
    %v2586 = vld [vmem:[#allocation2 + $0x410] sm:$0xff]
    %v2587 = vld [vmem:[#allocation2 + $0x418] sm:$0xff]
    %v2588 = vld [vmem:[#allocation2 + $0x420] sm:$0xff]
    %v2589 = vld [vmem:[#allocation2 + $0x428] sm:$0xff]
    %v2590 = vld [vmem:[#allocation2 + $0x430] sm:$0xff]
    %v2591 = vld [vmem:[#allocation2 + $0x438] sm:$0xff]
    %v2592 = vld [vmem:[#allocation2 + $0x440] sm:$0xff]
    %v2593 = vld [vmem:[#allocation2 + $0x448] sm:$0xff]
    %v2594 = vld [vmem:[#allocation2 + $0x450] sm:$0xff]
    %v2595 = vld [vmem:[#allocation2 + $0x458] sm:$0xff]
    %v2596 = vld [vmem:[#allocation2 + $0x460] sm:$0xff]
    %v2597 = vld [vmem:[#allocation2 + $0x468] sm:$0xff]
    %v2598 = vld [vmem:[#allocation2 + $0x470] sm:$0xff]
    %v2599 = vld [vmem:[#allocation2 + $0x478] sm:$0xff]
    %v2600 = vld [vmem:[#allocation2 + $0x480] sm:$0xff]
    %v2601 = vld [vmem:[#allocation2 + $0x488] sm:$0xff]
    %v2602 = vld [vmem:[#allocation2 + $0x490] sm:$0xff]
    %v2603 = vld [vmem:[#allocation2 + $0x498] sm:$0xff]
    %v2604 = vld [vmem:[#allocation2 + $0x4a0] sm:$0xff]
    %v2605 = vld [vmem:[#allocation2 + $0x4a8] sm:$0xff]
    %v2606 = vld [vmem:[#allocation2 + $0x4b0] sm:$0xff]
    %v2607 = vld [vmem:[#allocation2 + $0x4b8] sm:$0xff]
    %v2608 = vld [vmem:[#allocation2 + $0x4c0] sm:$0xff]
    %v2609 = vld [vmem:[#allocation2 + $0x4c8] sm:$0xff]
    %v2610 = vld [vmem:[#allocation2 + $0x4d0] sm:$0xff]
    %v2611 = vld [vmem:[#allocation2 + $0x4d8] sm:$0xff]
    %v2612 = vld [vmem:[#allocation2 + $0x4e0] sm:$0xff]
    %v2613 = vld [vmem:[#allocation2 + $0x4e8] sm:$0xff]
    %v2614 = vld [vmem:[#allocation2 + $0x4f0] sm:$0xff]
    %v2615 = vld [vmem:[#allocation2 + $0x4f8] sm:$0xff]
    %v2616 = vld [vmem:[#allocation2 + $0x500] sm:$0xff]
    %v2617 = vld [vmem:[#allocation2 + $0x508] sm:$0xff]
    %v2618 = vld [vmem:[#allocation2 + $0x510] sm:$0xff]
    %v2619 = vld [vmem:[#allocation2 + $0x518] sm:$0xff]
    %v2620 = vld [vmem:[#allocation2 + $0x520] sm:$0xff]
    %v2621 = vld [vmem:[#allocation2 + $0x528] sm:$0xff]
    %v2622 = vld [vmem:[#allocation2 + $0x530] sm:$0xff]
    %v2623 = vld [vmem:[#allocation2 + $0x538] sm:$0xff]
    %v2624 = vld [vmem:[#allocation2 + $0x540] sm:$0xff]
    %v2625 = vld [vmem:[#allocation2 + $0x548] sm:$0xff]
    %v2626 = vld [vmem:[#allocation2 + $0x550] sm:$0xff]
    %v2627 = vld [vmem:[#allocation2 + $0x558] sm:$0xff]
    %v2628 = vld [vmem:[#allocation2 + $0x560] sm:$0xff]
    %v2629 = vld [vmem:[#allocation2 + $0x568] sm:$0xff]
    %v2630 = vld [vmem:[#allocation2 + $0x570] sm:$0xff]
    %v2631 = vld [vmem:[#allocation2 + $0x578] sm:$0xff]
    %v2632 = vld [vmem:[#allocation2 + $0x580] sm:$0xff]
    %v2633 = vld [vmem:[#allocation2 + $0x588] sm:$0xff]
    %v2634 = vld [vmem:[#allocation2 + $0x590] sm:$0xff]
    %v2635 = vld [vmem:[#allocation2 + $0x598] sm:$0xff]
    %v2636 = vld [vmem:[#allocation2 + $0x5a0] sm:$0xff]
    %v2637 = vld [vmem:[#allocation2 + $0x5a8] sm:$0xff]
    %v2638 = vld [vmem:[#allocation2 + $0x5b0] sm:$0xff]
    %v2639 = vld [vmem:[#allocation2 + $0x5b8] sm:$0xff]
    %v2640 = vld [vmem:[#allocation2 + $0x5c0] sm:$0xff]
    %v2641 = vld [vmem:[#allocation2 + $0x5c8] sm:$0xff]
    %v2642 = vld [vmem:[#allocation2 + $0x5d0] sm:$0xff]
    %v2643 = vld [vmem:[#allocation2 + $0x5d8] sm:$0xff]
    %v2644 = vld [vmem:[#allocation2 + $0x5e0] sm:$0xff]
    %v2645 = vld [vmem:[#allocation2 + $0x5e8] sm:$0xff]
    %v2646 = vld [vmem:[#allocation2 + $0x5f0] sm:$0xff]
    %v2647 = vld [vmem:[#allocation2 + $0x5f8] sm:$0xff]
    %v2648 = vld [vmem:[#allocation2 + $0x600] sm:$0xff]
    %v2649 = vld [vmem:[#allocation2 + $0x608] sm:$0xff]
    %v2650 = vld [vmem:[#allocation2 + $0x610] sm:$0xff]
    %v2651 = vld [vmem:[#allocation2 + $0x618] sm:$0xff]
    %v2652 = vld [vmem:[#allocation2 + $0x620] sm:$0xff]
    %v2653 = vld [vmem:[#allocation2 + $0x628] sm:$0xff]
    %v2654 = vld [vmem:[#allocation2 + $0x630] sm:$0xff]
    %v2655 = vld [vmem:[#allocation2 + $0x638] sm:$0xff]
    %v2656 = vld [vmem:[#allocation2 + $0x640] sm:$0xff]
    %v2657 = vld [vmem:[#allocation2 + $0x648] sm:$0xff]
    %v2658 = vld [vmem:[#allocation2 + $0x650] sm:$0xff]
    %v2659 = vld [vmem:[#allocation2 + $0x658] sm:$0xff]
    %v2660 = vld [vmem:[#allocation2 + $0x660] sm:$0xff]
    %v2661 = vld [vmem:[#allocation2 + $0x668] sm:$0xff]
    %v2662 = vld [vmem:[#allocation2 + $0x670] sm:$0xff]
    %v2663 = vld [vmem:[#allocation2 + $0x678] sm:$0xff]
    %v2664 = vld [vmem:[#allocation2 + $0x680] sm:$0xff]
    %v2665 = vld [vmem:[#allocation2 + $0x688] sm:$0xff]
    %v2666 = vld [vmem:[#allocation2 + $0x690] sm:$0xff]
    %v2667 = vld [vmem:[#allocation2 + $0x698] sm:$0xff]
    %v2668 = vld [vmem:[#allocation2 + $0x6a0] sm:$0xff]
    %v2669 = vld [vmem:[#allocation2 + $0x6a8] sm:$0xff]
    %v2670 = vld [vmem:[#allocation2 + $0x6b0] sm:$0xff]
    %v2671 = vld [vmem:[#allocation2 + $0x6b8] sm:$0xff]
    %v2672 = vld [vmem:[#allocation2 + $0x6c0] sm:$0xff]
    %v2673 = vld [vmem:[#allocation2 + $0x6c8] sm:$0xff]
    %v2674 = vld [vmem:[#allocation2 + $0x6d0] sm:$0xff]
    %v2675 = vld [vmem:[#allocation2 + $0x6d8] sm:$0xff]
    %v2676 = vld [vmem:[#allocation2 + $0x6e0] sm:$0xff]
    %v2677 = vld [vmem:[#allocation2 + $0x6e8] sm:$0xff]
    %v2678 = vld [vmem:[#allocation2 + $0x6f0] sm:$0xff]
    %v2679 = vld [vmem:[#allocation2 + $0x6f8] sm:$0xff]
    %v2680 = vld [vmem:[#allocation2 + $0x700] sm:$0xff]
    %v2681 = vld [vmem:[#allocation2 + $0x708] sm:$0xff]
    %v2682 = vld [vmem:[#allocation2 + $0x710] sm:$0xff]
    %v2683 = vld [vmem:[#allocation2 + $0x718] sm:$0xff]
    %v2684 = vld [vmem:[#allocation2 + $0x720] sm:$0xff]
    %v2685 = vld [vmem:[#allocation2 + $0x728] sm:$0xff]
    %v2686 = vld [vmem:[#allocation2 + $0x730] sm:$0xff]
    %v2687 = vld [vmem:[#allocation2 + $0x738] sm:$0xff]
    %v2688 = vld [vmem:[#allocation2 + $0x740] sm:$0xff]
    %v2689 = vld [vmem:[#allocation2 + $0x748] sm:$0xff]
    %v2690 = vld [vmem:[#allocation2 + $0x750] sm:$0xff]
    %v2691 = vld [vmem:[#allocation2 + $0x758] sm:$0xff]
    %v2692 = vld [vmem:[#allocation2 + $0x760] sm:$0xff]
    %v2693 = vld [vmem:[#allocation2 + $0x768] sm:$0xff]
    %v2694 = vld [vmem:[#allocation2 + $0x770] sm:$0xff]
    %v2695 = vld [vmem:[#allocation2 + $0x778] sm:$0xff]
    %v2696 = vld [vmem:[#allocation2 + $0x780] sm:$0xff]
    %v2697 = vld [vmem:[#allocation2 + $0x788] sm:$0xff]
    %v2698 = vld [vmem:[#allocation2 + $0x790] sm:$0xff]
    %v2699 = vld [vmem:[#allocation2 + $0x798] sm:$0xff]
    %v2700 = vld [vmem:[#allocation2 + $0x7a0] sm:$0xff]
    %v2701 = vld [vmem:[#allocation2 + $0x7a8] sm:$0xff]
    %v2702 = vld [vmem:[#allocation2 + $0x7b0] sm:$0xff]
    %v2703 = vld [vmem:[#allocation2 + $0x7b8] sm:$0xff]
    %v2704 = vld [vmem:[#allocation2 + $0x7c0] sm:$0xff]
    %v2705 = vld [vmem:[#allocation2 + $0x7c8] sm:$0xff]
    %v2706 = vld [vmem:[#allocation2 + $0x7d0] sm:$0xff]
    %v2707 = vld [vmem:[#allocation2 + $0x7d8] sm:$0xff]
    %v2708 = vld [vmem:[#allocation2 + $0x7e0] sm:$0xff]
    %v2709 = vld [vmem:[#allocation2 + $0x7e8] sm:$0xff]
    %v2710 = vld [vmem:[#allocation2 + $0x7f0] sm:$0xff]
    %v2711 = vld [vmem:[#allocation2 + $0x7f8] sm:$0xff]
    %s2712 = scalar_lea.vmem [#allocation11], 2
    %v2713 = vld [vmem:[%s2712] ss:$8 sm:$0xf]
    %s2714 = scalar_lea.vmem [#allocation11], 3
    %v2715 = vld [vmem:[%s2714] ss:$8 sm:$0xf]
    %v2716 = vpack.c.bf16 %v2444, %v2436
    %v2717 = vpack.c.bf16 %v2445, %v2437
    %v2718 = vpack.c.bf16 %v2446, %v2438
    %v2719 = vpack.c.bf16 %v2447, %v2439
    %v2720 = vpack.c.bf16 %v2448, %v2440
    %v2721 = vpack.c.bf16 %v2449, %v2441
    %v2722 = vpack.c.bf16 %v2450, %v2442
    %v2723 = vpack.c.bf16 %v2451, %v2443
    %v2980 = vunpack.c.l.b16 %v2456
    %v2981 = vunpack.c.h.b16 %v2456
    %v2982 = vunpack.c.l.b16 %v2457
    %v2983 = vunpack.c.h.b16 %v2457
    %v2984 = vunpack.c.l.b16 %v2458
    %v2985 = vunpack.c.h.b16 %v2458
    %v2986 = vunpack.c.l.b16 %v2459
    %v2987 = vunpack.c.h.b16 %v2459
    %v2988 = vunpack.c.l.b16 %v2460
    %v2989 = vunpack.c.h.b16 %v2460
    %v2990 = vunpack.c.l.b16 %v2461
    %v2991 = vunpack.c.h.b16 %v2461
    %v2992 = vunpack.c.l.b16 %v2462
    %v2993 = vunpack.c.h.b16 %v2462
    %v2994 = vunpack.c.l.b16 %v2463
    %v2995 = vunpack.c.h.b16 %v2463
    %v2996 = vunpack.c.l.b16 %v2464
    %v2997 = vunpack.c.h.b16 %v2464
    %v2998 = vunpack.c.l.b16 %v2465
    %v2999 = vunpack.c.h.b16 %v2465
    %v3000 = vunpack.c.l.b16 %v2466
    %v3001 = vunpack.c.h.b16 %v2466
    %v3002 = vunpack.c.l.b16 %v2467
    %v3003 = vunpack.c.h.b16 %v2467
    %v3004 = vunpack.c.l.b16 %v2468
    %v3005 = vunpack.c.h.b16 %v2468
    %v3006 = vunpack.c.l.b16 %v2469
    %v3007 = vunpack.c.h.b16 %v2469
    %v3008 = vunpack.c.l.b16 %v2470
    %v3009 = vunpack.c.h.b16 %v2470
    %v3010 = vunpack.c.l.b16 %v2471
    %v3011 = vunpack.c.h.b16 %v2471
    %v3012 = vunpack.c.l.b16 %v2472
    %v3013 = vunpack.c.h.b16 %v2472
    %v3014 = vunpack.c.l.b16 %v2473
    %v3015 = vunpack.c.h.b16 %v2473
    %v3016 = vunpack.c.l.b16 %v2474
    %v3017 = vunpack.c.h.b16 %v2474
    %v3018 = vunpack.c.l.b16 %v2475
    %v3019 = vunpack.c.h.b16 %v2475
    %v3020 = vunpack.c.l.b16 %v2476
    %v3021 = vunpack.c.h.b16 %v2476
    %v3022 = vunpack.c.l.b16 %v2477
    %v3023 = vunpack.c.h.b16 %v2477
    %v3024 = vunpack.c.l.b16 %v2478
    %v3025 = vunpack.c.h.b16 %v2478
    %v3026 = vunpack.c.l.b16 %v2479
    %v3027 = vunpack.c.h.b16 %v2479
    %v3028 = vunpack.c.l.b16 %v2480
    %v3029 = vunpack.c.h.b16 %v2480
    %v3030 = vunpack.c.l.b16 %v2481
    %v3031 = vunpack.c.h.b16 %v2481
    %v3032 = vunpack.c.l.b16 %v2482
    %v3033 = vunpack.c.h.b16 %v2482
    %v3034 = vunpack.c.l.b16 %v2483
    %v3035 = vunpack.c.h.b16 %v2483
    %v3036 = vunpack.c.l.b16 %v2484
    %v3037 = vunpack.c.h.b16 %v2484
    %v3038 = vunpack.c.l.b16 %v2485
    %v3039 = vunpack.c.h.b16 %v2485
    %v3040 = vunpack.c.l.b16 %v2486
    %v3041 = vunpack.c.h.b16 %v2486
    %v3042 = vunpack.c.l.b16 %v2487
    %v3043 = vunpack.c.h.b16 %v2487
    %v3044 = vunpack.c.l.b16 %v2488
    %v3045 = vunpack.c.h.b16 %v2488
    %v3046 = vunpack.c.l.b16 %v2489
    %v3047 = vunpack.c.h.b16 %v2489
    %v3048 = vunpack.c.l.b16 %v2490
    %v3049 = vunpack.c.h.b16 %v2490
    %v3050 = vunpack.c.l.b16 %v2491
    %v3051 = vunpack.c.h.b16 %v2491
    %v3052 = vunpack.c.l.b16 %v2492
    %v3053 = vunpack.c.h.b16 %v2492
    %v3054 = vunpack.c.l.b16 %v2493
    %v3055 = vunpack.c.h.b16 %v2493
    %v3056 = vunpack.c.l.b16 %v2494
    %v3057 = vunpack.c.h.b16 %v2494
    %v3058 = vunpack.c.l.b16 %v2495
    %v3059 = vunpack.c.h.b16 %v2495
    %v3060 = vunpack.c.l.b16 %v2496
    %v3061 = vunpack.c.h.b16 %v2496
    %v3062 = vunpack.c.l.b16 %v2497
    %v3063 = vunpack.c.h.b16 %v2497
    %v3064 = vunpack.c.l.b16 %v2498
    %v3065 = vunpack.c.h.b16 %v2498
    %v3066 = vunpack.c.l.b16 %v2499
    %v3067 = vunpack.c.h.b16 %v2499
    %v3068 = vunpack.c.l.b16 %v2500
    %v3069 = vunpack.c.h.b16 %v2500
    %v3070 = vunpack.c.l.b16 %v2501
    %v3071 = vunpack.c.h.b16 %v2501
    %v3072 = vunpack.c.l.b16 %v2502
    %v3073 = vunpack.c.h.b16 %v2502
    %v3074 = vunpack.c.l.b16 %v2503
    %v3075 = vunpack.c.h.b16 %v2503
    %v3076 = vunpack.c.l.b16 %v2504
    %v3077 = vunpack.c.h.b16 %v2504
    %v3078 = vunpack.c.l.b16 %v2505
    %v3079 = vunpack.c.h.b16 %v2505
    %v3080 = vunpack.c.l.b16 %v2506
    %v3081 = vunpack.c.h.b16 %v2506
    %v3082 = vunpack.c.l.b16 %v2507
    %v3083 = vunpack.c.h.b16 %v2507
    %v3084 = vunpack.c.l.b16 %v2508
    %v3085 = vunpack.c.h.b16 %v2508
    %v3086 = vunpack.c.l.b16 %v2509
    %v3087 = vunpack.c.h.b16 %v2509
    %v3088 = vunpack.c.l.b16 %v2510
    %v3089 = vunpack.c.h.b16 %v2510
    %v3090 = vunpack.c.l.b16 %v2511
    %v3091 = vunpack.c.h.b16 %v2511
    %v3092 = vunpack.c.l.b16 %v2512
    %v3093 = vunpack.c.h.b16 %v2512
    %v3094 = vunpack.c.l.b16 %v2513
    %v3095 = vunpack.c.h.b16 %v2513
    %v3096 = vunpack.c.l.b16 %v2514
    %v3097 = vunpack.c.h.b16 %v2514
    %v3098 = vunpack.c.l.b16 %v2515
    %v3099 = vunpack.c.h.b16 %v2515
    %v3100 = vunpack.c.l.b16 %v2516
    %v3101 = vunpack.c.h.b16 %v2516
    %v3102 = vunpack.c.l.b16 %v2517
    %v3103 = vunpack.c.h.b16 %v2517
    %v3104 = vunpack.c.l.b16 %v2518
    %v3105 = vunpack.c.h.b16 %v2518
    %v3106 = vunpack.c.l.b16 %v2519
    %v3107 = vunpack.c.h.b16 %v2519
    %v3108 = vunpack.c.l.b16 %v2520
    %v3109 = vunpack.c.h.b16 %v2520
    %v3110 = vunpack.c.l.b16 %v2521
    %v3111 = vunpack.c.h.b16 %v2521
    %v3112 = vunpack.c.l.b16 %v2522
    %v3113 = vunpack.c.h.b16 %v2522
    %v3114 = vunpack.c.l.b16 %v2523
    %v3115 = vunpack.c.h.b16 %v2523
    %v3116 = vunpack.c.l.b16 %v2524
    %v3117 = vunpack.c.h.b16 %v2524
    %v3118 = vunpack.c.l.b16 %v2525
    %v3119 = vunpack.c.h.b16 %v2525
    %v3120 = vunpack.c.l.b16 %v2526
    %v3121 = vunpack.c.h.b16 %v2526
    %v3122 = vunpack.c.l.b16 %v2527
    %v3123 = vunpack.c.h.b16 %v2527
    %v3124 = vunpack.c.l.b16 %v2528
    %v3125 = vunpack.c.h.b16 %v2528
    %v3126 = vunpack.c.l.b16 %v2529
    %v3127 = vunpack.c.h.b16 %v2529
    %v3128 = vunpack.c.l.b16 %v2530
    %v3129 = vunpack.c.h.b16 %v2530
    %v3130 = vunpack.c.l.b16 %v2531
    %v3131 = vunpack.c.h.b16 %v2531
    %v3132 = vunpack.c.l.b16 %v2532
    %v3133 = vunpack.c.h.b16 %v2532
    %v3134 = vunpack.c.l.b16 %v2533
    %v3135 = vunpack.c.h.b16 %v2533
    %v3136 = vunpack.c.l.b16 %v2534
    %v3137 = vunpack.c.h.b16 %v2534
    %v3138 = vunpack.c.l.b16 %v2535
    %v3139 = vunpack.c.h.b16 %v2535
    %v3140 = vunpack.c.l.b16 %v2536
    %v3141 = vunpack.c.h.b16 %v2536
    %v3142 = vunpack.c.l.b16 %v2537
    %v3143 = vunpack.c.h.b16 %v2537
    %v3144 = vunpack.c.l.b16 %v2538
    %v3145 = vunpack.c.h.b16 %v2538
    %v3146 = vunpack.c.l.b16 %v2539
    %v3147 = vunpack.c.h.b16 %v2539
    %v3148 = vunpack.c.l.b16 %v2540
    %v3149 = vunpack.c.h.b16 %v2540
    %v3150 = vunpack.c.l.b16 %v2541
    %v3151 = vunpack.c.h.b16 %v2541
    %v3152 = vunpack.c.l.b16 %v2542
    %v3153 = vunpack.c.h.b16 %v2542
    %v3154 = vunpack.c.l.b16 %v2543
    %v3155 = vunpack.c.h.b16 %v2543
    %v3156 = vunpack.c.l.b16 %v2544
    %v3157 = vunpack.c.h.b16 %v2544
    %v3158 = vunpack.c.l.b16 %v2545
    %v3159 = vunpack.c.h.b16 %v2545
    %v3160 = vunpack.c.l.b16 %v2546
    %v3161 = vunpack.c.h.b16 %v2546
    %v3162 = vunpack.c.l.b16 %v2547
    %v3163 = vunpack.c.h.b16 %v2547
    %v3164 = vunpack.c.l.b16 %v2548
    %v3165 = vunpack.c.h.b16 %v2548
    %v3166 = vunpack.c.l.b16 %v2549
    %v3167 = vunpack.c.h.b16 %v2549
    %v3168 = vunpack.c.l.b16 %v2550
    %v3169 = vunpack.c.h.b16 %v2550
    %v3170 = vunpack.c.l.b16 %v2551
    %v3171 = vunpack.c.h.b16 %v2551
    %v3172 = vunpack.c.l.b16 %v2552
    %v3173 = vunpack.c.h.b16 %v2552
    %v3174 = vunpack.c.l.b16 %v2553
    %v3175 = vunpack.c.h.b16 %v2553
    %v3176 = vunpack.c.l.b16 %v2554
    %v3177 = vunpack.c.h.b16 %v2554
    %v3178 = vunpack.c.l.b16 %v2555
    %v3179 = vunpack.c.h.b16 %v2555
    %v3180 = vunpack.c.l.b16 %v2556
    %v3181 = vunpack.c.h.b16 %v2556
    %v3182 = vunpack.c.l.b16 %v2557
    %v3183 = vunpack.c.h.b16 %v2557
    %v3184 = vunpack.c.l.b16 %v2558
    %v3185 = vunpack.c.h.b16 %v2558
    %v3186 = vunpack.c.l.b16 %v2559
    %v3187 = vunpack.c.h.b16 %v2559
    %v3188 = vunpack.c.l.b16 %v2560
    %v3189 = vunpack.c.h.b16 %v2560
    %v3190 = vunpack.c.l.b16 %v2561
    %v3191 = vunpack.c.h.b16 %v2561
    %v3192 = vunpack.c.l.b16 %v2562
    %v3193 = vunpack.c.h.b16 %v2562
    %v3194 = vunpack.c.l.b16 %v2563
    %v3195 = vunpack.c.h.b16 %v2563
    %v3196 = vunpack.c.l.b16 %v2564
    %v3197 = vunpack.c.h.b16 %v2564
    %v3198 = vunpack.c.l.b16 %v2565
    %v3199 = vunpack.c.h.b16 %v2565
    %v3200 = vunpack.c.l.b16 %v2566
    %v3201 = vunpack.c.h.b16 %v2566
    %v3202 = vunpack.c.l.b16 %v2567
    %v3203 = vunpack.c.h.b16 %v2567
    %v3204 = vunpack.c.l.b16 %v2568
    %v3205 = vunpack.c.h.b16 %v2568
    %v3206 = vunpack.c.l.b16 %v2569
    %v3207 = vunpack.c.h.b16 %v2569
    %v3208 = vunpack.c.l.b16 %v2570
    %v3209 = vunpack.c.h.b16 %v2570
    %v3210 = vunpack.c.l.b16 %v2571
    %v3211 = vunpack.c.h.b16 %v2571
    %v3212 = vunpack.c.l.b16 %v2572
    %v3213 = vunpack.c.h.b16 %v2572
    %v3214 = vunpack.c.l.b16 %v2573
    %v3215 = vunpack.c.h.b16 %v2573
    %v3216 = vunpack.c.l.b16 %v2574
    %v3217 = vunpack.c.h.b16 %v2574
    %v3218 = vunpack.c.l.b16 %v2575
    %v3219 = vunpack.c.h.b16 %v2575
    %v3220 = vunpack.c.l.b16 %v2576
    %v3221 = vunpack.c.h.b16 %v2576
    %v3222 = vunpack.c.l.b16 %v2577
    %v3223 = vunpack.c.h.b16 %v2577
    %v3224 = vunpack.c.l.b16 %v2578
    %v3225 = vunpack.c.h.b16 %v2578
    %v3226 = vunpack.c.l.b16 %v2579
    %v3227 = vunpack.c.h.b16 %v2579
    %v3228 = vunpack.c.l.b16 %v2580
    %v3229 = vunpack.c.h.b16 %v2580
    %v3230 = vunpack.c.l.b16 %v2581
    %v3231 = vunpack.c.h.b16 %v2581
    %v3232 = vunpack.c.l.b16 %v2582
    %v3233 = vunpack.c.h.b16 %v2582
    %v3234 = vunpack.c.l.b16 %v2583
    %v3235 = vunpack.c.h.b16 %v2583
    %v3236 = vunpack.c.l.b16 %v2584
    %v3237 = vunpack.c.h.b16 %v2584
    %v3238 = vunpack.c.l.b16 %v2585
    %v3239 = vunpack.c.h.b16 %v2585
    %v3240 = vunpack.c.l.b16 %v2586
    %v3241 = vunpack.c.h.b16 %v2586
    %v3242 = vunpack.c.l.b16 %v2587
    %v3243 = vunpack.c.h.b16 %v2587
    %v3244 = vunpack.c.l.b16 %v2588
    %v3245 = vunpack.c.h.b16 %v2588
    %v3246 = vunpack.c.l.b16 %v2589
    %v3247 = vunpack.c.h.b16 %v2589
    %v3248 = vunpack.c.l.b16 %v2590
    %v3249 = vunpack.c.h.b16 %v2590
    %v3250 = vunpack.c.l.b16 %v2591
    %v3251 = vunpack.c.h.b16 %v2591
    %v3252 = vunpack.c.l.b16 %v2592
    %v3253 = vunpack.c.h.b16 %v2592
    %v3254 = vunpack.c.l.b16 %v2593
    %v3255 = vunpack.c.h.b16 %v2593
    %v3256 = vunpack.c.l.b16 %v2594
    %v3257 = vunpack.c.h.b16 %v2594
    %v3258 = vunpack.c.l.b16 %v2595
    %v3259 = vunpack.c.h.b16 %v2595
    %v3260 = vunpack.c.l.b16 %v2596
    %v3261 = vunpack.c.h.b16 %v2596
    %v3262 = vunpack.c.l.b16 %v2597
    %v3263 = vunpack.c.h.b16 %v2597
    %v3264 = vunpack.c.l.b16 %v2598
    %v3265 = vunpack.c.h.b16 %v2598
    %v3266 = vunpack.c.l.b16 %v2599
    %v3267 = vunpack.c.h.b16 %v2599
    %v3268 = vunpack.c.l.b16 %v2600
    %v3269 = vunpack.c.h.b16 %v2600
    %v3270 = vunpack.c.l.b16 %v2601
    %v3271 = vunpack.c.h.b16 %v2601
    %v3272 = vunpack.c.l.b16 %v2602
    %v3273 = vunpack.c.h.b16 %v2602
    %v3274 = vunpack.c.l.b16 %v2603
    %v3275 = vunpack.c.h.b16 %v2603
    %v3276 = vunpack.c.l.b16 %v2604
    %v3277 = vunpack.c.h.b16 %v2604
    %v3278 = vunpack.c.l.b16 %v2605
    %v3279 = vunpack.c.h.b16 %v2605
    %v3280 = vunpack.c.l.b16 %v2606
    %v3281 = vunpack.c.h.b16 %v2606
    %v3282 = vunpack.c.l.b16 %v2607
    %v3283 = vunpack.c.h.b16 %v2607
    %v3284 = vunpack.c.l.b16 %v2608
    %v3285 = vunpack.c.h.b16 %v2608
    %v3286 = vunpack.c.l.b16 %v2609
    %v3287 = vunpack.c.h.b16 %v2609
    %v3288 = vunpack.c.l.b16 %v2610
    %v3289 = vunpack.c.h.b16 %v2610
    %v3290 = vunpack.c.l.b16 %v2611
    %v3291 = vunpack.c.h.b16 %v2611
    %v3292 = vunpack.c.l.b16 %v2612
    %v3293 = vunpack.c.h.b16 %v2612
    %v3294 = vunpack.c.l.b16 %v2613
    %v3295 = vunpack.c.h.b16 %v2613
    %v3296 = vunpack.c.l.b16 %v2614
    %v3297 = vunpack.c.h.b16 %v2614
    %v3298 = vunpack.c.l.b16 %v2615
    %v3299 = vunpack.c.h.b16 %v2615
    %v3300 = vunpack.c.l.b16 %v2616
    %v3301 = vunpack.c.h.b16 %v2616
    %v3302 = vunpack.c.l.b16 %v2617
    %v3303 = vunpack.c.h.b16 %v2617
    %v3304 = vunpack.c.l.b16 %v2618
    %v3305 = vunpack.c.h.b16 %v2618
    %v3306 = vunpack.c.l.b16 %v2619
    %v3307 = vunpack.c.h.b16 %v2619
    %v3308 = vunpack.c.l.b16 %v2620
    %v3309 = vunpack.c.h.b16 %v2620
    %v3310 = vunpack.c.l.b16 %v2621
    %v3311 = vunpack.c.h.b16 %v2621
    %v3312 = vunpack.c.l.b16 %v2622
    %v3313 = vunpack.c.h.b16 %v2622
    %v3314 = vunpack.c.l.b16 %v2623
    %v3315 = vunpack.c.h.b16 %v2623
    %v3316 = vunpack.c.l.b16 %v2624
    %v3317 = vunpack.c.h.b16 %v2624
    %v3318 = vunpack.c.l.b16 %v2625
    %v3319 = vunpack.c.h.b16 %v2625
    %v3320 = vunpack.c.l.b16 %v2626
    %v3321 = vunpack.c.h.b16 %v2626
    %v3322 = vunpack.c.l.b16 %v2627
    %v3323 = vunpack.c.h.b16 %v2627
    %v3324 = vunpack.c.l.b16 %v2628
    %v3325 = vunpack.c.h.b16 %v2628
    %v3326 = vunpack.c.l.b16 %v2629
    %v3327 = vunpack.c.h.b16 %v2629
    %v3328 = vunpack.c.l.b16 %v2630
    %v3329 = vunpack.c.h.b16 %v2630
    %v3330 = vunpack.c.l.b16 %v2631
    %v3331 = vunpack.c.h.b16 %v2631
    %v3332 = vunpack.c.l.b16 %v2632
    %v3333 = vunpack.c.h.b16 %v2632
    %v3334 = vunpack.c.l.b16 %v2633
    %v3335 = vunpack.c.h.b16 %v2633
    %v3336 = vunpack.c.l.b16 %v2634
    %v3337 = vunpack.c.h.b16 %v2634
    %v3338 = vunpack.c.l.b16 %v2635
    %v3339 = vunpack.c.h.b16 %v2635
    %v3340 = vunpack.c.l.b16 %v2636
    %v3341 = vunpack.c.h.b16 %v2636
    %v3342 = vunpack.c.l.b16 %v2637
    %v3343 = vunpack.c.h.b16 %v2637
    %v3344 = vunpack.c.l.b16 %v2638
    %v3345 = vunpack.c.h.b16 %v2638
    %v3346 = vunpack.c.l.b16 %v2639
    %v3347 = vunpack.c.h.b16 %v2639
    %v3348 = vunpack.c.l.b16 %v2640
    %v3349 = vunpack.c.h.b16 %v2640
    %v3350 = vunpack.c.l.b16 %v2641
    %v3351 = vunpack.c.h.b16 %v2641
    %v3352 = vunpack.c.l.b16 %v2642
    %v3353 = vunpack.c.h.b16 %v2642
    %v3354 = vunpack.c.l.b16 %v2643
    %v3355 = vunpack.c.h.b16 %v2643
    %v3356 = vunpack.c.l.b16 %v2644
    %v3357 = vunpack.c.h.b16 %v2644
    %v3358 = vunpack.c.l.b16 %v2645
    %v3359 = vunpack.c.h.b16 %v2645
    %v3360 = vunpack.c.l.b16 %v2646
    %v3361 = vunpack.c.h.b16 %v2646
    %v3362 = vunpack.c.l.b16 %v2647
    %v3363 = vunpack.c.h.b16 %v2647
    %v3364 = vunpack.c.l.b16 %v2648
    %v3365 = vunpack.c.h.b16 %v2648
    %v3366 = vunpack.c.l.b16 %v2649
    %v3367 = vunpack.c.h.b16 %v2649
    %v3368 = vunpack.c.l.b16 %v2650
    %v3369 = vunpack.c.h.b16 %v2650
    %v3370 = vunpack.c.l.b16 %v2651
    %v3371 = vunpack.c.h.b16 %v2651
    %v3372 = vunpack.c.l.b16 %v2652
    %v3373 = vunpack.c.h.b16 %v2652
    %v3374 = vunpack.c.l.b16 %v2653
    %v3375 = vunpack.c.h.b16 %v2653
    %v3376 = vunpack.c.l.b16 %v2654
    %v3377 = vunpack.c.h.b16 %v2654
    %v3378 = vunpack.c.l.b16 %v2655
    %v3379 = vunpack.c.h.b16 %v2655
    %v3380 = vunpack.c.l.b16 %v2656
    %v3381 = vunpack.c.h.b16 %v2656
    %v3382 = vunpack.c.l.b16 %v2657
    %v3383 = vunpack.c.h.b16 %v2657
    %v3384 = vunpack.c.l.b16 %v2658
    %v3385 = vunpack.c.h.b16 %v2658
    %v3386 = vunpack.c.l.b16 %v2659
    %v3387 = vunpack.c.h.b16 %v2659
    %v3388 = vunpack.c.l.b16 %v2660
    %v3389 = vunpack.c.h.b16 %v2660
    %v3390 = vunpack.c.l.b16 %v2661
    %v3391 = vunpack.c.h.b16 %v2661
    %v3392 = vunpack.c.l.b16 %v2662
    %v3393 = vunpack.c.h.b16 %v2662
    %v3394 = vunpack.c.l.b16 %v2663
    %v3395 = vunpack.c.h.b16 %v2663
    %v3396 = vunpack.c.l.b16 %v2664
    %v3397 = vunpack.c.h.b16 %v2664
    %v3398 = vunpack.c.l.b16 %v2665
    %v3399 = vunpack.c.h.b16 %v2665
    %v3400 = vunpack.c.l.b16 %v2666
    %v3401 = vunpack.c.h.b16 %v2666
    %v3402 = vunpack.c.l.b16 %v2667
    %v3403 = vunpack.c.h.b16 %v2667
    %v3404 = vunpack.c.l.b16 %v2668
    %v3405 = vunpack.c.h.b16 %v2668
    %v3406 = vunpack.c.l.b16 %v2669
    %v3407 = vunpack.c.h.b16 %v2669
    %v3408 = vunpack.c.l.b16 %v2670
    %v3409 = vunpack.c.h.b16 %v2670
    %v3410 = vunpack.c.l.b16 %v2671
    %v3411 = vunpack.c.h.b16 %v2671
    %v3412 = vunpack.c.l.b16 %v2672
    %v3413 = vunpack.c.h.b16 %v2672
    %v3414 = vunpack.c.l.b16 %v2673
    %v3415 = vunpack.c.h.b16 %v2673
    %v3416 = vunpack.c.l.b16 %v2674
    %v3417 = vunpack.c.h.b16 %v2674
    %v3418 = vunpack.c.l.b16 %v2675
    %v3419 = vunpack.c.h.b16 %v2675
    %v3420 = vunpack.c.l.b16 %v2676
    %v3421 = vunpack.c.h.b16 %v2676
    %v3422 = vunpack.c.l.b16 %v2677
    %v3423 = vunpack.c.h.b16 %v2677
    %v3424 = vunpack.c.l.b16 %v2678
    %v3425 = vunpack.c.h.b16 %v2678
    %v3426 = vunpack.c.l.b16 %v2679
    %v3427 = vunpack.c.h.b16 %v2679
    %v3428 = vunpack.c.l.b16 %v2680
    %v3429 = vunpack.c.h.b16 %v2680
    %v3430 = vunpack.c.l.b16 %v2681
    %v3431 = vunpack.c.h.b16 %v2681
    %v3432 = vunpack.c.l.b16 %v2682
    %v3433 = vunpack.c.h.b16 %v2682
    %v3434 = vunpack.c.l.b16 %v2683
    %v3435 = vunpack.c.h.b16 %v2683
    %v3436 = vunpack.c.l.b16 %v2684
    %v3437 = vunpack.c.h.b16 %v2684
    %v3438 = vunpack.c.l.b16 %v2685
    %v3439 = vunpack.c.h.b16 %v2685
    %v3440 = vunpack.c.l.b16 %v2686
    %v3441 = vunpack.c.h.b16 %v2686
    %v3442 = vunpack.c.l.b16 %v2687
    %v3443 = vunpack.c.h.b16 %v2687
    %v3444 = vunpack.c.l.b16 %v2688
    %v3445 = vunpack.c.h.b16 %v2688
    %v3446 = vunpack.c.l.b16 %v2689
    %v3447 = vunpack.c.h.b16 %v2689
    %v3448 = vunpack.c.l.b16 %v2690
    %v3449 = vunpack.c.h.b16 %v2690
    %v3450 = vunpack.c.l.b16 %v2691
    %v3451 = vunpack.c.h.b16 %v2691
    %v3452 = vunpack.c.l.b16 %v2692
    %v3453 = vunpack.c.h.b16 %v2692
    %v3454 = vunpack.c.l.b16 %v2693
    %v3455 = vunpack.c.h.b16 %v2693
    %v3456 = vunpack.c.l.b16 %v2694
    %v3457 = vunpack.c.h.b16 %v2694
    %v3458 = vunpack.c.l.b16 %v2695
    %v3459 = vunpack.c.h.b16 %v2695
    %v3460 = vunpack.c.l.b16 %v2696
    %v3461 = vunpack.c.h.b16 %v2696
    %v3462 = vunpack.c.l.b16 %v2697
    %v3463 = vunpack.c.h.b16 %v2697
    %v3464 = vunpack.c.l.b16 %v2698
    %v3465 = vunpack.c.h.b16 %v2698
    %v3466 = vunpack.c.l.b16 %v2699
    %v3467 = vunpack.c.h.b16 %v2699
    %v3468 = vunpack.c.l.b16 %v2700
    %v3469 = vunpack.c.h.b16 %v2700
    %v3470 = vunpack.c.l.b16 %v2701
    %v3471 = vunpack.c.h.b16 %v2701
    %v3472 = vunpack.c.l.b16 %v2702
    %v3473 = vunpack.c.h.b16 %v2702
    %v3474 = vunpack.c.l.b16 %v2703
    %v3475 = vunpack.c.h.b16 %v2703
    %v3476 = vunpack.c.l.b16 %v2704
    %v3477 = vunpack.c.h.b16 %v2704
    %v3478 = vunpack.c.l.b16 %v2705
    %v3479 = vunpack.c.h.b16 %v2705
    %v3480 = vunpack.c.l.b16 %v2706
    %v3481 = vunpack.c.h.b16 %v2706
    %v3482 = vunpack.c.l.b16 %v2707
    %v3483 = vunpack.c.h.b16 %v2707
    %v3484 = vunpack.c.l.b16 %v2708
    %v3485 = vunpack.c.h.b16 %v2708
    %v3486 = vunpack.c.l.b16 %v2709
    %v3487 = vunpack.c.h.b16 %v2709
    %v3488 = vunpack.c.l.b16 %v2710
    %v3489 = vunpack.c.h.b16 %v2710
    %v3490 = vunpack.c.l.b16 %v2711
    %v3491 = vunpack.c.h.b16 %v2711
    %v3492 = vpack.c.b16 %v2984, %v2980
    %v3493 = vpack.c.b16 %v2985, %v2981
    %v3494 = vpack.c.b16 %v2986, %v2982
    %v3495 = vpack.c.b16 %v2987, %v2983
    %v3496 = vpack.c.b16 %v2992, %v2988
    %v3497 = vpack.c.b16 %v2993, %v2989
    %v3498 = vpack.c.b16 %v2994, %v2990
    %v3499 = vpack.c.b16 %v2995, %v2991
    %v3500 = vpack.c.b16 %v3000, %v2996
    %v3501 = vpack.c.b16 %v3001, %v2997
    %v3502 = vpack.c.b16 %v3002, %v2998
    %v3503 = vpack.c.b16 %v3003, %v2999
    %v3504 = vpack.c.b16 %v3008, %v3004
    %v3505 = vpack.c.b16 %v3009, %v3005
    %v3506 = vpack.c.b16 %v3010, %v3006
    %v3507 = vpack.c.b16 %v3011, %v3007
    %v3508 = vpack.c.b16 %v3016, %v3012
    %v3509 = vpack.c.b16 %v3017, %v3013
    %v3510 = vpack.c.b16 %v3018, %v3014
    %v3511 = vpack.c.b16 %v3019, %v3015
    %v3512 = vpack.c.b16 %v3024, %v3020
    %v3513 = vpack.c.b16 %v3025, %v3021
    %v3514 = vpack.c.b16 %v3026, %v3022
    %v3515 = vpack.c.b16 %v3027, %v3023
    %v3516 = vpack.c.b16 %v3032, %v3028
    %v3517 = vpack.c.b16 %v3033, %v3029
    %v3518 = vpack.c.b16 %v3034, %v3030
    %v3519 = vpack.c.b16 %v3035, %v3031
    %v3520 = vpack.c.b16 %v3040, %v3036
    %v3521 = vpack.c.b16 %v3041, %v3037
    %v3522 = vpack.c.b16 %v3042, %v3038
    %v3523 = vpack.c.b16 %v3043, %v3039
    %v3524 = vpack.c.b16 %v3048, %v3044
    %v3525 = vpack.c.b16 %v3049, %v3045
    %v3526 = vpack.c.b16 %v3050, %v3046
    %v3527 = vpack.c.b16 %v3051, %v3047
    %v3528 = vpack.c.b16 %v3056, %v3052
    %v3529 = vpack.c.b16 %v3057, %v3053
    %v3530 = vpack.c.b16 %v3058, %v3054
    %v3531 = vpack.c.b16 %v3059, %v3055
    %v3532 = vpack.c.b16 %v3064, %v3060
    %v3533 = vpack.c.b16 %v3065, %v3061
    %v3534 = vpack.c.b16 %v3066, %v3062
    %v3535 = vpack.c.b16 %v3067, %v3063
    %v3536 = vpack.c.b16 %v3072, %v3068
    %v3537 = vpack.c.b16 %v3073, %v3069
    %v3538 = vpack.c.b16 %v3074, %v3070
    %v3539 = vpack.c.b16 %v3075, %v3071
    %v3540 = vpack.c.b16 %v3080, %v3076
    %v3541 = vpack.c.b16 %v3081, %v3077
    %v3542 = vpack.c.b16 %v3082, %v3078
    %v3543 = vpack.c.b16 %v3083, %v3079
    %v3544 = vpack.c.b16 %v3088, %v3084
    %v3545 = vpack.c.b16 %v3089, %v3085
    %v3546 = vpack.c.b16 %v3090, %v3086
    %v3547 = vpack.c.b16 %v3091, %v3087
    %v3548 = vpack.c.b16 %v3096, %v3092
    %v3549 = vpack.c.b16 %v3097, %v3093
    %v3550 = vpack.c.b16 %v3098, %v3094
    %v3551 = vpack.c.b16 %v3099, %v3095
    %v3552 = vpack.c.b16 %v3104, %v3100
    %v3553 = vpack.c.b16 %v3105, %v3101
    %v3554 = vpack.c.b16 %v3106, %v3102
    %v3555 = vpack.c.b16 %v3107, %v3103
    %v3556 = vpack.c.b16 %v3112, %v3108
    %v3557 = vpack.c.b16 %v3113, %v3109
    %v3558 = vpack.c.b16 %v3114, %v3110
    %v3559 = vpack.c.b16 %v3115, %v3111
    %v3560 = vpack.c.b16 %v3120, %v3116
    %v3561 = vpack.c.b16 %v3121, %v3117
    %v3562 = vpack.c.b16 %v3122, %v3118
    %v3563 = vpack.c.b16 %v3123, %v3119
    %v3564 = vpack.c.b16 %v3128, %v3124
    %v3565 = vpack.c.b16 %v3129, %v3125
    %v3566 = vpack.c.b16 %v3130, %v3126
    %v3567 = vpack.c.b16 %v3131, %v3127
    %v3568 = vpack.c.b16 %v3136, %v3132
    %v3569 = vpack.c.b16 %v3137, %v3133
    %v3570 = vpack.c.b16 %v3138, %v3134
    %v3571 = vpack.c.b16 %v3139, %v3135
    %v3572 = vpack.c.b16 %v3144, %v3140
    %v3573 = vpack.c.b16 %v3145, %v3141
    %v3574 = vpack.c.b16 %v3146, %v3142
    %v3575 = vpack.c.b16 %v3147, %v3143
    %v3576 = vpack.c.b16 %v3152, %v3148
    %v3577 = vpack.c.b16 %v3153, %v3149
    %v3578 = vpack.c.b16 %v3154, %v3150
    %v3579 = vpack.c.b16 %v3155, %v3151
    %v3580 = vpack.c.b16 %v3160, %v3156
    %v3581 = vpack.c.b16 %v3161, %v3157
    %v3582 = vpack.c.b16 %v3162, %v3158
    %v3583 = vpack.c.b16 %v3163, %v3159
    %v3584 = vpack.c.b16 %v3168, %v3164
    %v3585 = vpack.c.b16 %v3169, %v3165
    %v3586 = vpack.c.b16 %v3170, %v3166
    %v3587 = vpack.c.b16 %v3171, %v3167
    %v3588 = vpack.c.b16 %v3176, %v3172
    %v3589 = vpack.c.b16 %v3177, %v3173
    %v3590 = vpack.c.b16 %v3178, %v3174
    %v3591 = vpack.c.b16 %v3179, %v3175
    %v3592 = vpack.c.b16 %v3184, %v3180
    %v3593 = vpack.c.b16 %v3185, %v3181
    %v3594 = vpack.c.b16 %v3186, %v3182
    %v3595 = vpack.c.b16 %v3187, %v3183
    %v3596 = vpack.c.b16 %v3192, %v3188
    %v3597 = vpack.c.b16 %v3193, %v3189
    %v3598 = vpack.c.b16 %v3194, %v3190
    %v3599 = vpack.c.b16 %v3195, %v3191
    %v3600 = vpack.c.b16 %v3200, %v3196
    %v3601 = vpack.c.b16 %v3201, %v3197
    %v3602 = vpack.c.b16 %v3202, %v3198
    %v3603 = vpack.c.b16 %v3203, %v3199
    %v3604 = vpack.c.b16 %v3208, %v3204
    %v3605 = vpack.c.b16 %v3209, %v3205
    %v3606 = vpack.c.b16 %v3210, %v3206
    %v3607 = vpack.c.b16 %v3211, %v3207
    %v3608 = vpack.c.b16 %v3216, %v3212
    %v3609 = vpack.c.b16 %v3217, %v3213
    %v3610 = vpack.c.b16 %v3218, %v3214
    %v3611 = vpack.c.b16 %v3219, %v3215
    %v3612 = vpack.c.b16 %v3224, %v3220
    %v3613 = vpack.c.b16 %v3225, %v3221
    %v3614 = vpack.c.b16 %v3226, %v3222
    %v3615 = vpack.c.b16 %v3227, %v3223
    %v3616 = vpack.c.b16 %v3232, %v3228
    %v3617 = vpack.c.b16 %v3233, %v3229
    %v3618 = vpack.c.b16 %v3234, %v3230
    %v3619 = vpack.c.b16 %v3235, %v3231
    %v3620 = vpack.c.b16 %v3240, %v3236
    %v3621 = vpack.c.b16 %v3241, %v3237
    %v3622 = vpack.c.b16 %v3242, %v3238
    %v3623 = vpack.c.b16 %v3243, %v3239
    %v3624 = vpack.c.b16 %v3248, %v3244
    %v3625 = vpack.c.b16 %v3249, %v3245
    %v3626 = vpack.c.b16 %v3250, %v3246
    %v3627 = vpack.c.b16 %v3251, %v3247
    %v3628 = vpack.c.b16 %v3256, %v3252
    %v3629 = vpack.c.b16 %v3257, %v3253
    %v3630 = vpack.c.b16 %v3258, %v3254
    %v3631 = vpack.c.b16 %v3259, %v3255
    %v3632 = vpack.c.b16 %v3264, %v3260
    %v3633 = vpack.c.b16 %v3265, %v3261
    %v3634 = vpack.c.b16 %v3266, %v3262
    %v3635 = vpack.c.b16 %v3267, %v3263
    %v3636 = vpack.c.b16 %v3272, %v3268
    %v3637 = vpack.c.b16 %v3273, %v3269
    %v3638 = vpack.c.b16 %v3274, %v3270
    %v3639 = vpack.c.b16 %v3275, %v3271
    %v3640 = vpack.c.b16 %v3280, %v3276
    %v3641 = vpack.c.b16 %v3281, %v3277
    %v3642 = vpack.c.b16 %v3282, %v3278
    %v3643 = vpack.c.b16 %v3283, %v3279
    %v3644 = vpack.c.b16 %v3288, %v3284
    %v3645 = vpack.c.b16 %v3289, %v3285
    %v3646 = vpack.c.b16 %v3290, %v3286
    %v3647 = vpack.c.b16 %v3291, %v3287
    %v3648 = vpack.c.b16 %v3296, %v3292
    %v3649 = vpack.c.b16 %v3297, %v3293
    %v3650 = vpack.c.b16 %v3298, %v3294
    %v3651 = vpack.c.b16 %v3299, %v3295
    %v3652 = vpack.c.b16 %v3304, %v3300
    %v3653 = vpack.c.b16 %v3305, %v3301
    %v3654 = vpack.c.b16 %v3306, %v3302
    %v3655 = vpack.c.b16 %v3307, %v3303
    %v3656 = vpack.c.b16 %v3312, %v3308
    %v3657 = vpack.c.b16 %v3313, %v3309
    %v3658 = vpack.c.b16 %v3314, %v3310
    %v3659 = vpack.c.b16 %v3315, %v3311
    %v3660 = vpack.c.b16 %v3320, %v3316
    %v3661 = vpack.c.b16 %v3321, %v3317
    %v3662 = vpack.c.b16 %v3322, %v3318
    %v3663 = vpack.c.b16 %v3323, %v3319
    %v3664 = vpack.c.b16 %v3328, %v3324
    %v3665 = vpack.c.b16 %v3329, %v3325
    %v3666 = vpack.c.b16 %v3330, %v3326
    %v3667 = vpack.c.b16 %v3331, %v3327
    %v3668 = vpack.c.b16 %v3336, %v3332
    %v3669 = vpack.c.b16 %v3337, %v3333
    %v3670 = vpack.c.b16 %v3338, %v3334
    %v3671 = vpack.c.b16 %v3339, %v3335
    %v3672 = vpack.c.b16 %v3344, %v3340
    %v3673 = vpack.c.b16 %v3345, %v3341
    %v3674 = vpack.c.b16 %v3346, %v3342
    %v3675 = vpack.c.b16 %v3347, %v3343
    %v3676 = vpack.c.b16 %v3352, %v3348
    %v3677 = vpack.c.b16 %v3353, %v3349
    %v3678 = vpack.c.b16 %v3354, %v3350
    %v3679 = vpack.c.b16 %v3355, %v3351
    %v3680 = vpack.c.b16 %v3360, %v3356
    %v3681 = vpack.c.b16 %v3361, %v3357
    %v3682 = vpack.c.b16 %v3362, %v3358
    %v3683 = vpack.c.b16 %v3363, %v3359
    %v3684 = vpack.c.b16 %v3368, %v3364
    %v3685 = vpack.c.b16 %v3369, %v3365
    %v3686 = vpack.c.b16 %v3370, %v3366
    %v3687 = vpack.c.b16 %v3371, %v3367
    %v3688 = vpack.c.b16 %v3376, %v3372
    %v3689 = vpack.c.b16 %v3377, %v3373
    %v3690 = vpack.c.b16 %v3378, %v3374
    %v3691 = vpack.c.b16 %v3379, %v3375
    %v3692 = vpack.c.b16 %v3384, %v3380
    %v3693 = vpack.c.b16 %v3385, %v3381
    %v3694 = vpack.c.b16 %v3386, %v3382
    %v3695 = vpack.c.b16 %v3387, %v3383
    %v3696 = vpack.c.b16 %v3392, %v3388
    %v3697 = vpack.c.b16 %v3393, %v3389
    %v3698 = vpack.c.b16 %v3394, %v3390
    %v3699 = vpack.c.b16 %v3395, %v3391
    %v3700 = vpack.c.b16 %v3400, %v3396
    %v3701 = vpack.c.b16 %v3401, %v3397
    %v3702 = vpack.c.b16 %v3402, %v3398
    %v3703 = vpack.c.b16 %v3403, %v3399
    %v3704 = vpack.c.b16 %v3408, %v3404
    %v3705 = vpack.c.b16 %v3409, %v3405
    %v3706 = vpack.c.b16 %v3410, %v3406
    %v3707 = vpack.c.b16 %v3411, %v3407
    %v3708 = vpack.c.b16 %v3416, %v3412
    %v3709 = vpack.c.b16 %v3417, %v3413
    %v3710 = vpack.c.b16 %v3418, %v3414
    %v3711 = vpack.c.b16 %v3419, %v3415
    %v3712 = vpack.c.b16 %v3424, %v3420
    %v3713 = vpack.c.b16 %v3425, %v3421
    %v3714 = vpack.c.b16 %v3426, %v3422
    %v3715 = vpack.c.b16 %v3427, %v3423
    %v3716 = vpack.c.b16 %v3432, %v3428
    %v3717 = vpack.c.b16 %v3433, %v3429
    %v3718 = vpack.c.b16 %v3434, %v3430
    %v3719 = vpack.c.b16 %v3435, %v3431
    %v3720 = vpack.c.b16 %v3440, %v3436
    %v3721 = vpack.c.b16 %v3441, %v3437
    %v3722 = vpack.c.b16 %v3442, %v3438
    %v3723 = vpack.c.b16 %v3443, %v3439
    %v3724 = vpack.c.b16 %v3448, %v3444
    %v3725 = vpack.c.b16 %v3449, %v3445
    %v3726 = vpack.c.b16 %v3450, %v3446
    %v3727 = vpack.c.b16 %v3451, %v3447
    %v3728 = vpack.c.b16 %v3456, %v3452
    %v3729 = vpack.c.b16 %v3457, %v3453
    %v3730 = vpack.c.b16 %v3458, %v3454
    %v3731 = vpack.c.b16 %v3459, %v3455
    %v3732 = vpack.c.b16 %v3464, %v3460
    %v3733 = vpack.c.b16 %v3465, %v3461
    %v3734 = vpack.c.b16 %v3466, %v3462
    %v3735 = vpack.c.b16 %v3467, %v3463
    %v3736 = vpack.c.b16 %v3472, %v3468
    %v3737 = vpack.c.b16 %v3473, %v3469
    %v3738 = vpack.c.b16 %v3474, %v3470
    %v3739 = vpack.c.b16 %v3475, %v3471
    %v3740 = vpack.c.b16 %v3480, %v3476
    %v3741 = vpack.c.b16 %v3481, %v3477
    %v3742 = vpack.c.b16 %v3482, %v3478
    %v3743 = vpack.c.b16 %v3483, %v3479
    %v3744 = vpack.c.b16 %v3488, %v3484
    %v3745 = vpack.c.b16 %v3489, %v3485
    %v3746 = vpack.c.b16 %v3490, %v3486
    %v3747 = vpack.c.b16 %v3491, %v3487
    %4004 = vmatprep.subr.bf16.mxu0 %v3521
    %4005 = vmatpush1.bf16.msra.mxu0 %v3520
    %4006 = vmatprep.subr.bf16.mxu0 %v3517
    %4007 = vmatpush1.bf16.msra.mxu0 %v3516
    %4008 = vmatprep.subr.bf16.mxu0 %v3513
    %4009 = vmatpush1.bf16.msra.mxu0 %v3512
    %4010 = vmatprep.subr.bf16.mxu0 %v3509
    %4011 = vmatpush1.bf16.msra.mxu0 %v3508
    %4012 = vmatprep.subr.bf16.mxu0 %v3505
    %4013 = vmatpush1.bf16.msra.mxu0 %v3504
    %4014 = vmatprep.subr.bf16.mxu0 %v3501
    %4015 = vmatpush1.bf16.msra.mxu0 %v3500
    %4016 = vmatprep.subr.bf16.mxu0 %v3497
    %4017 = vmatpush1.bf16.msra.mxu0 %v3496
    %4018 = vmatprep.subr.bf16.mxu0 %v3493
    %4019 = vmatpush1.bf16.msra.mxu0 %v3492
    %4020 = vmatprep.subr.bf16.mxu0 %v3553
    %4021 = vmatpush2.bf16.msra.mxu0 %v3552
    %4022 = vmatprep.subr.bf16.mxu0 %v3549
    %4023 = vmatpush2.bf16.msra.mxu0 %v3548
    %4024 = vmatprep.subr.bf16.mxu0 %v3545
    %4025 = vmatpush2.bf16.msra.mxu0 %v3544
    %4026 = vmatprep.subr.bf16.mxu0 %v3541
    %4027 = vmatpush2.bf16.msra.mxu0 %v3540
    %4028 = vmatprep.subr.bf16.mxu0 %v3537
    %4029 = vmatpush2.bf16.msra.mxu0 %v3536
    %4030 = vmatprep.subr.bf16.mxu0 %v3533
    %4031 = vmatpush2.bf16.msra.mxu0 %v3532
    %4032 = vmatprep.subr.bf16.mxu0 %v3529
    %4033 = vmatpush2.bf16.msra.mxu0 %v3528
    %4034 = vmatprep.subr.bf16.mxu0 %v3525
    %4035 = vmatpush2.bf16.msra.mxu0 %v3524
    %4036 = vmatprep.mubr.bf16.mxu0 %v2717
    %4037 = vmatmul.mubr.bf16.gmra.mxu0 %v2716
    %v4038 = vpop.f32.mrf.mxu0
    %v4039 = vadd.f32 0.0, %v4038
    %v4040 = vpop.f32.mrf.mxu0
    %v4041 = vadd.f32 0.0, %v4040
    %v4042 = vpop.f32.mrf.mxu0
    %v4043 = vadd.f32 0.0, %v4042
    %v4044 = vpop.f32.mrf.mxu0
    %v4045 = vadd.f32 0.0, %v4044
    %4046 = vdwg.mxu0
    %4047 = vmatprep.subr.bf16.mxu0 %v3585
    %4048 = vmatpush1.bf16.msra.mxu0 %v3584
    %4049 = vmatprep.subr.bf16.mxu0 %v3581
    %4050 = vmatpush1.bf16.msra.mxu0 %v3580
    %4051 = vmatprep.subr.bf16.mxu0 %v3577
    %4052 = vmatpush1.bf16.msra.mxu0 %v3576
    %4053 = vmatprep.subr.bf16.mxu0 %v3573
    %4054 = vmatpush1.bf16.msra.mxu0 %v3572
    %4055 = vmatprep.subr.bf16.mxu0 %v3569
    %4056 = vmatpush1.bf16.msra.mxu0 %v3568
    %4057 = vmatprep.subr.bf16.mxu0 %v3565
    %4058 = vmatpush1.bf16.msra.mxu0 %v3564
    %4059 = vmatprep.subr.bf16.mxu0 %v3561
    %4060 = vmatpush1.bf16.msra.mxu0 %v3560
    %4061 = vmatprep.subr.bf16.mxu0 %v3557
    %4062 = vmatpush1.bf16.msra.mxu0 %v3556
    %4063 = vmatprep.subr.bf16.mxu0 %v3617
    %4064 = vmatpush2.bf16.msra.mxu0 %v3616
    %4065 = vmatprep.subr.bf16.mxu0 %v3613
    %4066 = vmatpush2.bf16.msra.mxu0 %v3612
    %4067 = vmatprep.subr.bf16.mxu0 %v3609
    %4068 = vmatpush2.bf16.msra.mxu0 %v3608
    %4069 = vmatprep.subr.bf16.mxu0 %v3605
    %4070 = vmatpush2.bf16.msra.mxu0 %v3604
    %4071 = vmatprep.subr.bf16.mxu0 %v3601
    %4072 = vmatpush2.bf16.msra.mxu0 %v3600
    %4073 = vmatprep.subr.bf16.mxu0 %v3597
    %4074 = vmatpush2.bf16.msra.mxu0 %v3596
    %4075 = vmatprep.subr.bf16.mxu0 %v3593
    %4076 = vmatpush2.bf16.msra.mxu0 %v3592
    %4077 = vmatprep.subr.bf16.mxu0 %v3589
    %4078 = vmatpush2.bf16.msra.mxu0 %v3588
    %4079 = vmatprep.mubr.bf16.mxu0 %v2719
    %4080 = vmatmul.mubr.bf16.gmra.mxu0 %v2718
    %v4081 = vpop.f32.mrf.mxu0
    %v4082 = vadd.f32 %v4039, %v4081
    %v4083 = vpop.f32.mrf.mxu0
    %v4084 = vadd.f32 %v4041, %v4083
    %v4085 = vpop.f32.mrf.mxu0
    %v4086 = vadd.f32 %v4043, %v4085
    %v4087 = vpop.f32.mrf.mxu0
    %v4088 = vadd.f32 %v4045, %v4087
    %4089 = vdwg.mxu0
    %4090 = vmatprep.subr.bf16.mxu0 %v3649
    %4091 = vmatpush1.bf16.msra.mxu0 %v3648
    %4092 = vmatprep.subr.bf16.mxu0 %v3645
    %4093 = vmatpush1.bf16.msra.mxu0 %v3644
    %4094 = vmatprep.subr.bf16.mxu0 %v3641
    %4095 = vmatpush1.bf16.msra.mxu0 %v3640
    %4096 = vmatprep.subr.bf16.mxu0 %v3637
    %4097 = vmatpush1.bf16.msra.mxu0 %v3636
    %4098 = vmatprep.subr.bf16.mxu0 %v3633
    %4099 = vmatpush1.bf16.msra.mxu0 %v3632
    %4100 = vmatprep.subr.bf16.mxu0 %v3629
    %4101 = vmatpush1.bf16.msra.mxu0 %v3628
    %4102 = vmatprep.subr.bf16.mxu0 %v3625
    %4103 = vmatpush1.bf16.msra.mxu0 %v3624
    %4104 = vmatprep.subr.bf16.mxu0 %v3621
    %4105 = vmatpush1.bf16.msra.mxu0 %v3620
    %4106 = vmatprep.subr.bf16.mxu0 %v3681
    %4107 = vmatpush2.bf16.msra.mxu0 %v3680
    %4108 = vmatprep.subr.bf16.mxu0 %v3677
    %4109 = vmatpush2.bf16.msra.mxu0 %v3676
    %4110 = vmatprep.subr.bf16.mxu0 %v3673
    %4111 = vmatpush2.bf16.msra.mxu0 %v3672
    %4112 = vmatprep.subr.bf16.mxu0 %v3669
    %4113 = vmatpush2.bf16.msra.mxu0 %v3668
    %4114 = vmatprep.subr.bf16.mxu0 %v3665
    %4115 = vmatpush2.bf16.msra.mxu0 %v3664
    %4116 = vmatprep.subr.bf16.mxu0 %v3661
    %4117 = vmatpush2.bf16.msra.mxu0 %v3660
    %4118 = vmatprep.subr.bf16.mxu0 %v3657
    %4119 = vmatpush2.bf16.msra.mxu0 %v3656
    %4120 = vmatprep.subr.bf16.mxu0 %v3653
    %4121 = vmatpush2.bf16.msra.mxu0 %v3652
    %4122 = vmatprep.mubr.bf16.mxu0 %v2721
    %4123 = vmatmul.mubr.bf16.gmra.mxu0 %v2720
    %v4124 = vpop.f32.mrf.mxu0
    %v4125 = vadd.f32 %v4082, %v4124
    %v4126 = vpop.f32.mrf.mxu0
    %v4127 = vadd.f32 %v4084, %v4126
    %v4128 = vpop.f32.mrf.mxu0
    %v4129 = vadd.f32 %v4086, %v4128
    %v4130 = vpop.f32.mrf.mxu0
    %v4131 = vadd.f32 %v4088, %v4130
    %4132 = vdwg.mxu0
    %4133 = vmatprep.subr.bf16.mxu0 %v3713
    %4134 = vmatpush1.bf16.msra.mxu0 %v3712
    %4135 = vmatprep.subr.bf16.mxu0 %v3709
    %4136 = vmatpush1.bf16.msra.mxu0 %v3708
    %4137 = vmatprep.subr.bf16.mxu0 %v3705
    %4138 = vmatpush1.bf16.msra.mxu0 %v3704
    %4139 = vmatprep.subr.bf16.mxu0 %v3701
    %4140 = vmatpush1.bf16.msra.mxu0 %v3700
    %4141 = vmatprep.subr.bf16.mxu0 %v3697
    %4142 = vmatpush1.bf16.msra.mxu0 %v3696
    %4143 = vmatprep.subr.bf16.mxu0 %v3693
    %4144 = vmatpush1.bf16.msra.mxu0 %v3692
    %4145 = vmatprep.subr.bf16.mxu0 %v3689
    %4146 = vmatpush1.bf16.msra.mxu0 %v3688
    %4147 = vmatprep.subr.bf16.mxu0 %v3685
    %4148 = vmatpush1.bf16.msra.mxu0 %v3684
    %4149 = vmatprep.subr.bf16.mxu0 %v3745
    %4150 = vmatpush2.bf16.msra.mxu0 %v3744
    %4151 = vmatprep.subr.bf16.mxu0 %v3741
    %4152 = vmatpush2.bf16.msra.mxu0 %v3740
    %4153 = vmatprep.subr.bf16.mxu0 %v3737
    %4154 = vmatpush2.bf16.msra.mxu0 %v3736
    %4155 = vmatprep.subr.bf16.mxu0 %v3733
    %4156 = vmatpush2.bf16.msra.mxu0 %v3732
    %4157 = vmatprep.subr.bf16.mxu0 %v3729
    %4158 = vmatpush2.bf16.msra.mxu0 %v3728
    %4159 = vmatprep.subr.bf16.mxu0 %v3725
    %4160 = vmatpush2.bf16.msra.mxu0 %v3724
    %4161 = vmatprep.subr.bf16.mxu0 %v3721
    %4162 = vmatpush2.bf16.msra.mxu0 %v3720
    %4163 = vmatprep.subr.bf16.mxu0 %v3717
    %4164 = vmatpush2.bf16.msra.mxu0 %v3716
    %4165 = vmatprep.mubr.bf16.mxu0 %v2723
    %4166 = vmatmul.mubr.bf16.gmra.mxu0 %v2722
    %v4167 = vpop.f32.mrf.mxu0
    %v4168 = vadd.f32 %v4125, %v4167
    %v4169 = vpop.f32.mrf.mxu0
    %v4170 = vadd.f32 %v4127, %v4169
    %v4171 = vpop.f32.mrf.mxu0
    %v4172 = vadd.f32 %v4129, %v4171
    %v4173 = vpop.f32.mrf.mxu0
    %v4174 = vadd.f32 %v4131, %v4173
    %4175 = vdwg.mxu0
    %4176 = vmatprep.subr.bf16.mxu0 %v3523
    %4177 = vmatpush1.bf16.msra.mxu0 %v3522
    %4178 = vmatprep.subr.bf16.mxu0 %v3519
    %4179 = vmatpush1.bf16.msra.mxu0 %v3518
    %4180 = vmatprep.subr.bf16.mxu0 %v3515
    %4181 = vmatpush1.bf16.msra.mxu0 %v3514
    %4182 = vmatprep.subr.bf16.mxu0 %v3511
    %4183 = vmatpush1.bf16.msra.mxu0 %v3510
    %4184 = vmatprep.subr.bf16.mxu0 %v3507
    %4185 = vmatpush1.bf16.msra.mxu0 %v3506
    %4186 = vmatprep.subr.bf16.mxu0 %v3503
    %4187 = vmatpush1.bf16.msra.mxu0 %v3502
    %4188 = vmatprep.subr.bf16.mxu0 %v3499
    %4189 = vmatpush1.bf16.msra.mxu0 %v3498
    %4190 = vmatprep.subr.bf16.mxu0 %v3495
    %4191 = vmatpush1.bf16.msra.mxu0 %v3494
    %4192 = vmatprep.subr.bf16.mxu0 %v3555
    %4193 = vmatpush2.bf16.msra.mxu0 %v3554
    %4194 = vmatprep.subr.bf16.mxu0 %v3551
    %4195 = vmatpush2.bf16.msra.mxu0 %v3550
    %4196 = vmatprep.subr.bf16.mxu0 %v3547
    %4197 = vmatpush2.bf16.msra.mxu0 %v3546
    %4198 = vmatprep.subr.bf16.mxu0 %v3543
    %4199 = vmatpush2.bf16.msra.mxu0 %v3542
    %4200 = vmatprep.subr.bf16.mxu0 %v3539
    %4201 = vmatpush2.bf16.msra.mxu0 %v3538
    %4202 = vmatprep.subr.bf16.mxu0 %v3535
    %4203 = vmatpush2.bf16.msra.mxu0 %v3534
    %4204 = vmatprep.subr.bf16.mxu0 %v3531
    %4205 = vmatpush2.bf16.msra.mxu0 %v3530
    %4206 = vmatprep.subr.bf16.mxu0 %v3527
    %4207 = vmatpush2.bf16.msra.mxu0 %v3526
    %4208 = vmatprep.mubr.bf16.mxu0 %v2717
    %4209 = vmatmul.mubr.bf16.gmra.mxu0 %v2716
    %v4210 = vpop.f32.mrf.mxu0
    %v4211 = vadd.f32 0.0, %v4210
    %v4212 = vpop.f32.mrf.mxu0
    %v4213 = vadd.f32 0.0, %v4212
    %v4214 = vpop.f32.mrf.mxu0
    %v4215 = vadd.f32 0.0, %v4214
    %v4216 = vpop.f32.mrf.mxu0
    %v4217 = vadd.f32 0.0, %v4216
    %4218 = vdwg.mxu0
    %4219 = vmatprep.subr.bf16.mxu0 %v3587
    %4220 = vmatpush1.bf16.msra.mxu0 %v3586
    %4221 = vmatprep.subr.bf16.mxu0 %v3583
    %4222 = vmatpush1.bf16.msra.mxu0 %v3582
    %4223 = vmatprep.subr.bf16.mxu0 %v3579
    %4224 = vmatpush1.bf16.msra.mxu0 %v3578
    %4225 = vmatprep.subr.bf16.mxu0 %v3575
    %4226 = vmatpush1.bf16.msra.mxu0 %v3574
    %4227 = vmatprep.subr.bf16.mxu0 %v3571
    %4228 = vmatpush1.bf16.msra.mxu0 %v3570
    %4229 = vmatprep.subr.bf16.mxu0 %v3567
    %4230 = vmatpush1.bf16.msra.mxu0 %v3566
    %4231 = vmatprep.subr.bf16.mxu0 %v3563
    %4232 = vmatpush1.bf16.msra.mxu0 %v3562
    %4233 = vmatprep.subr.bf16.mxu0 %v3559
    %4234 = vmatpush1.bf16.msra.mxu0 %v3558
    %4235 = vmatprep.subr.bf16.mxu0 %v3619
    %4236 = vmatpush2.bf16.msra.mxu0 %v3618
    %4237 = vmatprep.subr.bf16.mxu0 %v3615
    %4238 = vmatpush2.bf16.msra.mxu0 %v3614
    %4239 = vmatprep.subr.bf16.mxu0 %v3611
    %4240 = vmatpush2.bf16.msra.mxu0 %v3610
    %4241 = vmatprep.subr.bf16.mxu0 %v3607
    %4242 = vmatpush2.bf16.msra.mxu0 %v3606
    %4243 = vmatprep.subr.bf16.mxu0 %v3603
    %4244 = vmatpush2.bf16.msra.mxu0 %v3602
    %4245 = vmatprep.subr.bf16.mxu0 %v3599
    %4246 = vmatpush2.bf16.msra.mxu0 %v3598
    %4247 = vmatprep.subr.bf16.mxu0 %v3595
    %4248 = vmatpush2.bf16.msra.mxu0 %v3594
    %4249 = vmatprep.subr.bf16.mxu0 %v3591
    %4250 = vmatpush2.bf16.msra.mxu0 %v3590
    %4251 = vmatprep.mubr.bf16.mxu0 %v2719
    %4252 = vmatmul.mubr.bf16.gmra.mxu0 %v2718
    %v4253 = vpop.f32.mrf.mxu0
    %v4254 = vadd.f32 %v4211, %v4253
    %v4255 = vpop.f32.mrf.mxu0
    %v4256 = vadd.f32 %v4213, %v4255
    %v4257 = vpop.f32.mrf.mxu0
    %v4258 = vadd.f32 %v4215, %v4257
    %v4259 = vpop.f32.mrf.mxu0
    %v4260 = vadd.f32 %v4217, %v4259
    %4261 = vdwg.mxu0
    %4262 = vmatprep.subr.bf16.mxu0 %v3651
    %4263 = vmatpush1.bf16.msra.mxu0 %v3650
    %4264 = vmatprep.subr.bf16.mxu0 %v3647
    %4265 = vmatpush1.bf16.msra.mxu0 %v3646
    %4266 = vmatprep.subr.bf16.mxu0 %v3643
    %4267 = vmatpush1.bf16.msra.mxu0 %v3642
    %4268 = vmatprep.subr.bf16.mxu0 %v3639
    %4269 = vmatpush1.bf16.msra.mxu0 %v3638
    %4270 = vmatprep.subr.bf16.mxu0 %v3635
    %4271 = vmatpush1.bf16.msra.mxu0 %v3634
    %4272 = vmatprep.subr.bf16.mxu0 %v3631
    %4273 = vmatpush1.bf16.msra.mxu0 %v3630
    %4274 = vmatprep.subr.bf16.mxu0 %v3627
    %4275 = vmatpush1.bf16.msra.mxu0 %v3626
    %4276 = vmatprep.subr.bf16.mxu0 %v3623
    %4277 = vmatpush1.bf16.msra.mxu0 %v3622
    %4278 = vmatprep.subr.bf16.mxu0 %v3683
    %4279 = vmatpush2.bf16.msra.mxu0 %v3682
    %4280 = vmatprep.subr.bf16.mxu0 %v3679
    %4281 = vmatpush2.bf16.msra.mxu0 %v3678
    %4282 = vmatprep.subr.bf16.mxu0 %v3675
    %4283 = vmatpush2.bf16.msra.mxu0 %v3674
    %4284 = vmatprep.subr.bf16.mxu0 %v3671
    %4285 = vmatpush2.bf16.msra.mxu0 %v3670
    %4286 = vmatprep.subr.bf16.mxu0 %v3667
    %4287 = vmatpush2.bf16.msra.mxu0 %v3666
    %4288 = vmatprep.subr.bf16.mxu0 %v3663
    %4289 = vmatpush2.bf16.msra.mxu0 %v3662
    %4290 = vmatprep.subr.bf16.mxu0 %v3659
    %4291 = vmatpush2.bf16.msra.mxu0 %v3658
    %4292 = vmatprep.subr.bf16.mxu0 %v3655
    %4293 = vmatpush2.bf16.msra.mxu0 %v3654
    %4294 = vmatprep.mubr.bf16.mxu0 %v2721
    %4295 = vmatmul.mubr.bf16.gmra.mxu0 %v2720
    %v4296 = vpop.f32.mrf.mxu0
    %v4297 = vadd.f32 %v4254, %v4296
    %v4298 = vpop.f32.mrf.mxu0
    %v4299 = vadd.f32 %v4256, %v4298
    %v4300 = vpop.f32.mrf.mxu0
    %v4301 = vadd.f32 %v4258, %v4300
    %v4302 = vpop.f32.mrf.mxu0
    %v4303 = vadd.f32 %v4260, %v4302
    %4304 = vdwg.mxu0
    %4305 = vmatprep.subr.bf16.mxu0 %v3715
    %4306 = vmatpush1.bf16.msra.mxu0 %v3714
    %4307 = vmatprep.subr.bf16.mxu0 %v3711
    %4308 = vmatpush1.bf16.msra.mxu0 %v3710
    %4309 = vmatprep.subr.bf16.mxu0 %v3707
    %4310 = vmatpush1.bf16.msra.mxu0 %v3706
    %4311 = vmatprep.subr.bf16.mxu0 %v3703
    %4312 = vmatpush1.bf16.msra.mxu0 %v3702
    %4313 = vmatprep.subr.bf16.mxu0 %v3699
    %4314 = vmatpush1.bf16.msra.mxu0 %v3698
    %4315 = vmatprep.subr.bf16.mxu0 %v3695
    %4316 = vmatpush1.bf16.msra.mxu0 %v3694
    %4317 = vmatprep.subr.bf16.mxu0 %v3691
    %4318 = vmatpush1.bf16.msra.mxu0 %v3690
    %4319 = vmatprep.subr.bf16.mxu0 %v3687
    %4320 = vmatpush1.bf16.msra.mxu0 %v3686
    %4321 = vmatprep.subr.bf16.mxu0 %v3747
    %4322 = vmatpush2.bf16.msra.mxu0 %v3746
    %4323 = vmatprep.subr.bf16.mxu0 %v3743
    %4324 = vmatpush2.bf16.msra.mxu0 %v3742
    %4325 = vmatprep.subr.bf16.mxu0 %v3739
    %4326 = vmatpush2.bf16.msra.mxu0 %v3738
    %4327 = vmatprep.subr.bf16.mxu0 %v3735
    %4328 = vmatpush2.bf16.msra.mxu0 %v3734
    %4329 = vmatprep.subr.bf16.mxu0 %v3731
    %4330 = vmatpush2.bf16.msra.mxu0 %v3730
    %4331 = vmatprep.subr.bf16.mxu0 %v3727
    %4332 = vmatpush2.bf16.msra.mxu0 %v3726
    %4333 = vmatprep.subr.bf16.mxu0 %v3723
    %4334 = vmatpush2.bf16.msra.mxu0 %v3722
    %4335 = vmatprep.subr.bf16.mxu0 %v3719
    %4336 = vmatpush2.bf16.msra.mxu0 %v3718
    %4337 = vmatprep.mubr.bf16.mxu0 %v2723
    %4338 = vmatmul.mubr.bf16.gmra.mxu0 %v2722
    %v4339 = vpop.f32.mrf.mxu0
    %v4340 = vadd.f32 %v4297, %v4339
    %v4341 = vpop.f32.mrf.mxu0
    %v4342 = vadd.f32 %v4299, %v4341
    %v4343 = vpop.f32.mrf.mxu0
    %v4344 = vadd.f32 %v4301, %v4343
    %v4345 = vpop.f32.mrf.mxu0
    %v4346 = vadd.f32 %v4303, %v4345
    %4347 = vdwg.mxu0
    %v4348 = vadd.f32 %v4168, %v4172
    %v4349 = vrot.slane %v4348, 4
    %v4350 = vadd.f32 %v4348, %v4349
    %v4351 = vrot.slane %v4350, 2
    %v4352 = vadd.f32 %v4350, %v4351
    %v4353 = vrot.slane %v4352, 1
    %v4354 = vadd.f32 %v4352, %v4353
    %v4355 = vadd.f32 %v4170, %v4174
    %v4356 = vrot.slane %v4355, 4
    %v4357 = vadd.f32 %v4355, %v4356
    %v4358 = vrot.slane %v4357, 2
    %v4359 = vadd.f32 %v4357, %v4358
    %v4360 = vrot.slane %v4359, 1
    %v4361 = vadd.f32 %v4359, %v4360
    %v4362 = vadd.f32 %v4340, %v4344
    %v4363 = vrot.slane %v4362, 4
    %v4364 = vadd.f32 %v4362, %v4363
    %v4365 = vrot.slane %v4364, 2
    %v4366 = vadd.f32 %v4364, %v4365
    %v4367 = vrot.slane %v4366, 1
    %v4368 = vadd.f32 %v4366, %v4367
    %v4369 = vadd.f32 %v4342, %v4346
    %v4370 = vrot.slane %v4369, 4
    %v4371 = vadd.f32 %v4369, %v4370
    %v4372 = vrot.slane %v4371, 2
    %v4373 = vadd.f32 %v4371, %v4372
    %v4374 = vrot.slane %v4373, 1
    %v4375 = vadd.f32 %v4373, %v4374
    %v4376 = vmul.f32 %v4354, 0.0625
    %v4377 = vmul.f32 %v4361, 0.0625
    %v4378 = vmul.f32 %v4368, 0.0625
    %v4379 = vmul.f32 %v4375, 0.0625
    %v4380 = vmul.f32 %v4168, %v4168
    %v4381 = vmul.f32 %v4170, %v4170
    %v4382 = vmul.f32 %v4340, %v4340
    %v4383 = vmul.f32 %v4342, %v4342
    %v4384 = vmul.f32 %v4172, %v4172
    %v4385 = vmul.f32 %v4174, %v4174
    %v4386 = vmul.f32 %v4344, %v4344
    %v4387 = vmul.f32 %v4346, %v4346
    %v4388 = vadd.f32 %v4380, %v4384
    %v4389 = vrot.slane %v4388, 4
    %v4390 = vadd.f32 %v4388, %v4389
    %v4391 = vrot.slane %v4390, 2
    %v4392 = vadd.f32 %v4390, %v4391
    %v4393 = vrot.slane %v4392, 1
    %v4394 = vadd.f32 %v4392, %v4393
    %v4395 = vadd.f32 %v4381, %v4385
    %v4396 = vrot.slane %v4395, 4
    %v4397 = vadd.f32 %v4395, %v4396
    %v4398 = vrot.slane %v4397, 2
    %v4399 = vadd.f32 %v4397, %v4398
    %v4400 = vrot.slane %v4399, 1
    %v4401 = vadd.f32 %v4399, %v4400
    %v4402 = vadd.f32 %v4382, %v4386
    %v4403 = vrot.slane %v4402, 4
    %v4404 = vadd.f32 %v4402, %v4403
    %v4405 = vrot.slane %v4404, 2
    %v4406 = vadd.f32 %v4404, %v4405
    %v4407 = vrot.slane %v4406, 1
    %v4408 = vadd.f32 %v4406, %v4407
    %v4409 = vadd.f32 %v4383, %v4387
    %v4410 = vrot.slane %v4409, 4
    %v4411 = vadd.f32 %v4409, %v4410
    %v4412 = vrot.slane %v4411, 2
    %v4413 = vadd.f32 %v4411, %v4412
    %v4414 = vrot.slane %v4413, 1
    %v4415 = vadd.f32 %v4413, %v4414
    %v4416 = vmul.f32 %v4394, 0.0625
    %v4417 = vmul.f32 %v4401, 0.0625
    %v4418 = vmul.f32 %v4408, 0.0625
    %v4419 = vmul.f32 %v4415, 0.0625
    %v4420 = vmul.f32 %v4376, %v4376
    %v4421 = vmul.f32 %v4377, %v4377
    %v4422 = vmul.f32 %v4378, %v4378
    %v4423 = vmul.f32 %v4379, %v4379
    %v4424 = vsub.f32 %v4416, %v4420
    %v4425 = vsub.f32 %v4417, %v4421
    %v4426 = vsub.f32 %v4418, %v4422
    %v4427 = vsub.f32 %v4419, %v4423
    %v4428 = vadd.f32 %v4424, 1e-05
    %v4429 = vadd.f32 %v4425, 1e-05
    %v4430 = vadd.f32 %v4426, 1e-05
    %v4431 = vadd.f32 %v4427, 1e-05
    %v4432 = vrsqrt.pop %v4428
    %v4433 = vrsqrt.pop %v4429
    %v4434 = vrsqrt.pop %v4430
    %v4435 = vrsqrt.pop %v4431
    %v4440 = vcombine.low %v4432, %v4433
    %v4441 = vcombine.low %v4434, %v4435
    %v4443 = vunpack.c.l.s4 1966171168
    %v4444 = vunpack.c.0.s8 %v4443
    %v4445 = vlaneseq
    %v4446 = vshrl.u32 %v4445, 7
    %v4447 = vsub.s32 %v4444, %v4446
    %v4448 = vrot.slane %v4440, %v4447
    %v4450 = vunpack.c.l.s4 1966171168
    %v4451 = vunpack.c.0.s8 %v4450
    %v4452 = vlaneseq
    %v4453 = vshrl.u32 %v4452, 7
    %v4454 = vsub.s32 %v4451, %v4453
    %v4455 = vrot.slane %v4441, %v4454
    %v4456 = vcombine.low %v4448, %v4455
    %v4458 = vunpack.c.l.s4 1966171168
    %v4459 = vunpack.c.0.s8 %v4458
    %v4460 = vlaneseq
    %v4461 = vshrl.u32 %v4460, 7
    %v4462 = vsub.s32 %v4459, %v4461
    %v4463 = vrot.slane %v4456, %v4462
    %v4465 = vmul.f32 %v2713, %v4463
    %v4467 = vlaneseq
    %v4468 = vshrl.u32 %v4467, 7
    %v4469 = vsub.s32 0, %v4468
    %v4470 = vrot.slane %v4465, %v4469
    %v4471 = vlaneseq
    %v4472 = vshrl.u32 %v4471, 7
    %v4473 = vsub.s32 1, %v4472
    %v4474 = vrot.slane %v4465, %v4473
    %v4475 = vlaneseq
    %v4476 = vshrl.u32 %v4475, 7
    %v4477 = vsub.s32 2, %v4476
    %v4478 = vrot.slane %v4465, %v4477
    %v4479 = vlaneseq
    %v4480 = vshrl.u32 %v4479, 7
    %v4481 = vsub.s32 3, %v4480
    %v4482 = vrot.slane %v4465, %v4481
    %v4487 = vmul.f32 %v4376, %v4470
    %v4488 = vmul.f32 %v4377, %v4474
    %v4489 = vmul.f32 %v4378, %v4478
    %v4490 = vmul.f32 %v4379, %v4482
    %v4495 = vcombine.low %v4487, %v4488
    %v4496 = vcombine.low %v4489, %v4490
    %v4498 = vunpack.c.l.s4 1966171168
    %v4499 = vunpack.c.0.s8 %v4498
    %v4500 = vlaneseq
    %v4501 = vshrl.u32 %v4500, 7
    %v4502 = vsub.s32 %v4499, %v4501
    %v4503 = vrot.slane %v4495, %v4502
    %v4505 = vunpack.c.l.s4 1966171168
    %v4506 = vunpack.c.0.s8 %v4505
    %v4507 = vlaneseq
    %v4508 = vshrl.u32 %v4507, 7
    %v4509 = vsub.s32 %v4506, %v4508
    %v4510 = vrot.slane %v4496, %v4509
    %v4511 = vcombine.low %v4503, %v4510
    %v4513 = vunpack.c.l.s4 1966171168
    %v4514 = vunpack.c.0.s8 %v4513
    %v4515 = vlaneseq
    %v4516 = vshrl.u32 %v4515, 7
    %v4517 = vsub.s32 %v4514, %v4516
    %v4518 = vrot.slane %v4511, %v4517
    %v4520 = vsub.f32 %v2715, %v4518
    %v4521 = vmul.f32 %v4168, %v4470
    %v4522 = vmul.f32 %v4170, %v4474
    %v4523 = vmul.f32 %v4340, %v4478
    %v4524 = vmul.f32 %v4342, %v4482
    %v4525 = vmul.f32 %v4172, %v4470
    %v4526 = vmul.f32 %v4174, %v4474
    %v4527 = vmul.f32 %v4344, %v4478
    %v4528 = vmul.f32 %v4346, %v4482
    %v4530 = vlaneseq
    %v4531 = vshrl.u32 %v4530, 7
    %v4532 = vsub.s32 0, %v4531
    %v4533 = vrot.slane %v4520, %v4532
    %v4534 = vlaneseq
    %v4535 = vshrl.u32 %v4534, 7
    %v4536 = vsub.s32 1, %v4535
    %v4537 = vrot.slane %v4520, %v4536
    %v4538 = vlaneseq
    %v4539 = vshrl.u32 %v4538, 7
    %v4540 = vsub.s32 2, %v4539
    %v4541 = vrot.slane %v4520, %v4540
    %v4542 = vlaneseq
    %v4543 = vshrl.u32 %v4542, 7
    %v4544 = vsub.s32 3, %v4543
    %v4545 = vrot.slane %v4520, %v4544
    %v4550 = vadd.f32 %v4521, %v4533
    %v4551 = vadd.f32 %v4522, %v4537
    %v4552 = vadd.f32 %v4523, %v4541
    %v4553 = vadd.f32 %v4524, %v4545
    %v4554 = vadd.f32 %v4525, %v4533
    %v4555 = vadd.f32 %v4526, %v4537
    %v4556 = vadd.f32 %v4527, %v4541
    %v4557 = vadd.f32 %v4528, %v4545
    %v4558 = vmul.f32 %v4550, 0.01
    %v4559 = vmul.f32 %v4551, 0.01
    %v4560 = vmul.f32 %v4552, 0.01
    %v4561 = vmul.f32 %v4553, 0.01
    %v4562 = vmul.f32 %v4554, 0.01
    %v4563 = vmul.f32 %v4555, 0.01
    %v4564 = vmul.f32 %v4556, 0.01
    %v4565 = vmul.f32 %v4557, 0.01
    %v4566 = vmax.f32 %v4550, %v4558
    %v4567 = vmax.f32 %v4551, %v4559
    %v4568 = vmax.f32 %v4552, %v4560
    %v4569 = vmax.f32 %v4553, %v4561
    %v4570 = vmax.f32 %v4554, %v4562
    %v4571 = vmax.f32 %v4555, %v4563
    %v4572 = vmax.f32 %v4556, %v4564
    %v4573 = vmax.f32 %v4557, %v4565
    %s4574 = smul.u32 4, 64
    %s4575 = smul.u32 %s4574, 1
    %s4576 = sshll.u32 %s4575, 4
    %4577 = dma.done %s69, %s4576
    %v4578 = vld [vmem:[#allocation3] sm:$0xf]
    %v4579 = vld [vmem:[#allocation3 + $0x4] sm:$0xf]
    %v4580 = vld [vmem:[#allocation3 + $0x8] sm:$0xf]
    %v4581 = vld [vmem:[#allocation3 + $0xc] sm:$0xf]
    %v4582 = vld [vmem:[#allocation3 + $0x10] sm:$0xf]
    %v4583 = vld [vmem:[#allocation3 + $0x14] sm:$0xf]
    %v4584 = vld [vmem:[#allocation3 + $0x18] sm:$0xf]
    %v4585 = vld [vmem:[#allocation3 + $0x1c] sm:$0xf]
    %v4586 = vld [vmem:[#allocation3 + $0x20] sm:$0xf]
    %v4587 = vld [vmem:[#allocation3 + $0x24] sm:$0xf]
    %v4588 = vld [vmem:[#allocation3 + $0x28] sm:$0xf]
    %v4589 = vld [vmem:[#allocation3 + $0x2c] sm:$0xf]
    %v4590 = vld [vmem:[#allocation3 + $0x30] sm:$0xf]
    %v4591 = vld [vmem:[#allocation3 + $0x34] sm:$0xf]
    %v4592 = vld [vmem:[#allocation3 + $0x38] sm:$0xf]
    %v4593 = vld [vmem:[#allocation3 + $0x3c] sm:$0xf]
    %v4594 = vld [vmem:[#allocation3 + $0x40] sm:$0xf]
    %v4595 = vld [vmem:[#allocation3 + $0x44] sm:$0xf]
    %v4596 = vld [vmem:[#allocation3 + $0x48] sm:$0xf]
    %v4597 = vld [vmem:[#allocation3 + $0x4c] sm:$0xf]
    %v4598 = vld [vmem:[#allocation3 + $0x50] sm:$0xf]
    %v4599 = vld [vmem:[#allocation3 + $0x54] sm:$0xf]
    %v4600 = vld [vmem:[#allocation3 + $0x58] sm:$0xf]
    %v4601 = vld [vmem:[#allocation3 + $0x5c] sm:$0xf]
    %v4602 = vld [vmem:[#allocation3 + $0x60] sm:$0xf]
    %v4603 = vld [vmem:[#allocation3 + $0x64] sm:$0xf]
    %v4604 = vld [vmem:[#allocation3 + $0x68] sm:$0xf]
    %v4605 = vld [vmem:[#allocation3 + $0x6c] sm:$0xf]
    %v4606 = vld [vmem:[#allocation3 + $0x70] sm:$0xf]
    %v4607 = vld [vmem:[#allocation3 + $0x74] sm:$0xf]
    %v4608 = vld [vmem:[#allocation3 + $0x78] sm:$0xf]
    %v4609 = vld [vmem:[#allocation3 + $0x7c] sm:$0xf]
    %v4610 = vld [vmem:[#allocation3 + $0x80] sm:$0xf]
    %v4611 = vld [vmem:[#allocation3 + $0x84] sm:$0xf]
    %v4612 = vld [vmem:[#allocation3 + $0x88] sm:$0xf]
    %v4613 = vld [vmem:[#allocation3 + $0x8c] sm:$0xf]
    %v4614 = vld [vmem:[#allocation3 + $0x90] sm:$0xf]
    %v4615 = vld [vmem:[#allocation3 + $0x94] sm:$0xf]
    %v4616 = vld [vmem:[#allocation3 + $0x98] sm:$0xf]
    %v4617 = vld [vmem:[#allocation3 + $0x9c] sm:$0xf]
    %v4618 = vld [vmem:[#allocation3 + $0xa0] sm:$0xf]
    %v4619 = vld [vmem:[#allocation3 + $0xa4] sm:$0xf]
    %v4620 = vld [vmem:[#allocation3 + $0xa8] sm:$0xf]
    %v4621 = vld [vmem:[#allocation3 + $0xac] sm:$0xf]
    %v4622 = vld [vmem:[#allocation3 + $0xb0] sm:$0xf]
    %v4623 = vld [vmem:[#allocation3 + $0xb4] sm:$0xf]
    %v4624 = vld [vmem:[#allocation3 + $0xb8] sm:$0xf]
    %v4625 = vld [vmem:[#allocation3 + $0xbc] sm:$0xf]
    %v4626 = vld [vmem:[#allocation3 + $0xc0] sm:$0xf]
    %v4627 = vld [vmem:[#allocation3 + $0xc4] sm:$0xf]
    %v4628 = vld [vmem:[#allocation3 + $0xc8] sm:$0xf]
    %v4629 = vld [vmem:[#allocation3 + $0xcc] sm:$0xf]
    %v4630 = vld [vmem:[#allocation3 + $0xd0] sm:$0xf]
    %v4631 = vld [vmem:[#allocation3 + $0xd4] sm:$0xf]
    %v4632 = vld [vmem:[#allocation3 + $0xd8] sm:$0xf]
    %v4633 = vld [vmem:[#allocation3 + $0xdc] sm:$0xf]
    %v4634 = vld [vmem:[#allocation3 + $0xe0] sm:$0xf]
    %v4635 = vld [vmem:[#allocation3 + $0xe4] sm:$0xf]
    %v4636 = vld [vmem:[#allocation3 + $0xe8] sm:$0xf]
    %v4637 = vld [vmem:[#allocation3 + $0xec] sm:$0xf]
    %v4638 = vld [vmem:[#allocation3 + $0xf0] sm:$0xf]
    %v4639 = vld [vmem:[#allocation3 + $0xf4] sm:$0xf]
    %v4640 = vld [vmem:[#allocation3 + $0xf8] sm:$0xf]
    %v4641 = vld [vmem:[#allocation3 + $0xfc] sm:$0xf]
    %v4642 = vld [vmem:[#allocation11 + $0x4] ss:$0 sm:$0xff]
    %v4643 = vld [vmem:[#allocation11 + $0x5] ss:$0 sm:$0xff]
    %v4644 = vpack.c.bf16 %v4570, %v4566
    %v4645 = vpack.c.bf16 %v4571, %v4567
    %v4646 = vpack.c.bf16 %v4572, %v4568
    %v4647 = vpack.c.bf16 %v4573, %v4569
    %v4712 = vunpack.c.l.b16 %v4578
    %v4713 = vunpack.c.l.b16 %v4579
    %v4714 = vunpack.c.l.b16 %v4580
    %v4715 = vunpack.c.l.b16 %v4581
    %v4716 = vunpack.c.l.b16 %v4582
    %v4717 = vunpack.c.l.b16 %v4583
    %v4718 = vunpack.c.l.b16 %v4584
    %v4719 = vunpack.c.l.b16 %v4585
    %v4720 = vunpack.c.l.b16 %v4586
    %v4721 = vunpack.c.l.b16 %v4587
    %v4722 = vunpack.c.l.b16 %v4588
    %v4723 = vunpack.c.l.b16 %v4589
    %v4724 = vunpack.c.l.b16 %v4590
    %v4725 = vunpack.c.l.b16 %v4591
    %v4726 = vunpack.c.l.b16 %v4592
    %v4727 = vunpack.c.l.b16 %v4593
    %v4728 = vunpack.c.l.b16 %v4594
    %v4729 = vunpack.c.l.b16 %v4595
    %v4730 = vunpack.c.l.b16 %v4596
    %v4731 = vunpack.c.l.b16 %v4597
    %v4732 = vunpack.c.l.b16 %v4598
    %v4733 = vunpack.c.l.b16 %v4599
    %v4734 = vunpack.c.l.b16 %v4600
    %v4735 = vunpack.c.l.b16 %v4601
    %v4736 = vunpack.c.l.b16 %v4602
    %v4737 = vunpack.c.l.b16 %v4603
    %v4738 = vunpack.c.l.b16 %v4604
    %v4739 = vunpack.c.l.b16 %v4605
    %v4740 = vunpack.c.l.b16 %v4606
    %v4741 = vunpack.c.l.b16 %v4607
    %v4742 = vunpack.c.l.b16 %v4608
    %v4743 = vunpack.c.l.b16 %v4609
    %v4744 = vunpack.c.l.b16 %v4610
    %v4745 = vunpack.c.l.b16 %v4611
    %v4746 = vunpack.c.l.b16 %v4612
    %v4747 = vunpack.c.l.b16 %v4613
    %v4748 = vunpack.c.l.b16 %v4614
    %v4749 = vunpack.c.l.b16 %v4615
    %v4750 = vunpack.c.l.b16 %v4616
    %v4751 = vunpack.c.l.b16 %v4617
    %v4752 = vunpack.c.l.b16 %v4618
    %v4753 = vunpack.c.l.b16 %v4619
    %v4754 = vunpack.c.l.b16 %v4620
    %v4755 = vunpack.c.l.b16 %v4621
    %v4756 = vunpack.c.l.b16 %v4622
    %v4757 = vunpack.c.l.b16 %v4623
    %v4758 = vunpack.c.l.b16 %v4624
    %v4759 = vunpack.c.l.b16 %v4625
    %v4760 = vunpack.c.l.b16 %v4626
    %v4761 = vunpack.c.l.b16 %v4627
    %v4762 = vunpack.c.l.b16 %v4628
    %v4763 = vunpack.c.l.b16 %v4629
    %v4764 = vunpack.c.l.b16 %v4630
    %v4765 = vunpack.c.l.b16 %v4631
    %v4766 = vunpack.c.l.b16 %v4632
    %v4767 = vunpack.c.l.b16 %v4633
    %v4768 = vunpack.c.l.b16 %v4634
    %v4769 = vunpack.c.l.b16 %v4635
    %v4770 = vunpack.c.l.b16 %v4636
    %v4771 = vunpack.c.l.b16 %v4637
    %v4772 = vunpack.c.l.b16 %v4638
    %v4773 = vunpack.c.l.b16 %v4639
    %v4774 = vunpack.c.l.b16 %v4640
    %v4775 = vunpack.c.l.b16 %v4641
    %v4776 = vpack.c.b16 %v4713, %v4712
    %v4777 = vpack.c.b16 %v4715, %v4714
    %v4778 = vpack.c.b16 %v4717, %v4716
    %v4779 = vpack.c.b16 %v4719, %v4718
    %v4780 = vpack.c.b16 %v4721, %v4720
    %v4781 = vpack.c.b16 %v4723, %v4722
    %v4782 = vpack.c.b16 %v4725, %v4724
    %v4783 = vpack.c.b16 %v4727, %v4726
    %v4784 = vpack.c.b16 %v4729, %v4728
    %v4785 = vpack.c.b16 %v4731, %v4730
    %v4786 = vpack.c.b16 %v4733, %v4732
    %v4787 = vpack.c.b16 %v4735, %v4734
    %v4788 = vpack.c.b16 %v4737, %v4736
    %v4789 = vpack.c.b16 %v4739, %v4738
    %v4790 = vpack.c.b16 %v4741, %v4740
    %v4791 = vpack.c.b16 %v4743, %v4742
    %v4792 = vpack.c.b16 %v4745, %v4744
    %v4793 = vpack.c.b16 %v4747, %v4746
    %v4794 = vpack.c.b16 %v4749, %v4748
    %v4795 = vpack.c.b16 %v4751, %v4750
    %v4796 = vpack.c.b16 %v4753, %v4752
    %v4797 = vpack.c.b16 %v4755, %v4754
    %v4798 = vpack.c.b16 %v4757, %v4756
    %v4799 = vpack.c.b16 %v4759, %v4758
    %v4800 = vpack.c.b16 %v4761, %v4760
    %v4801 = vpack.c.b16 %v4763, %v4762
    %v4802 = vpack.c.b16 %v4765, %v4764
    %v4803 = vpack.c.b16 %v4767, %v4766
    %v4804 = vpack.c.b16 %v4769, %v4768
    %v4805 = vpack.c.b16 %v4771, %v4770
    %v4806 = vpack.c.b16 %v4773, %v4772
    %v4807 = vpack.c.b16 %v4775, %v4774
    %4840 = vmatprep.subr.bf16.mxu0 0
    %4841 = vmatpush1.bf16.msra.mxu0 %v4783
    %4842 = vmatprep.subr.bf16.mxu0 0
    %4843 = vmatpush1.bf16.msra.mxu0 %v4782
    %4844 = vmatprep.subr.bf16.mxu0 0
    %4845 = vmatpush1.bf16.msra.mxu0 %v4781
    %4846 = vmatprep.subr.bf16.mxu0 0
    %4847 = vmatpush1.bf16.msra.mxu0 %v4780
    %4848 = vmatprep.subr.bf16.mxu0 0
    %4849 = vmatpush1.bf16.msra.mxu0 %v4779
    %4850 = vmatprep.subr.bf16.mxu0 0
    %4851 = vmatpush1.bf16.msra.mxu0 %v4778
    %4852 = vmatprep.subr.bf16.mxu0 0
    %4853 = vmatpush1.bf16.msra.mxu0 %v4777
    %4854 = vmatprep.subr.bf16.mxu0 0
    %4855 = vmatpush1.bf16.msra.mxu0 %v4776
    %4856 = vmatprep.subr.bf16.mxu0 0
    %4857 = vmatpush2.bf16.msra.mxu0 %v4791
    %4858 = vmatprep.subr.bf16.mxu0 0
    %4859 = vmatpush2.bf16.msra.mxu0 %v4790
    %4860 = vmatprep.subr.bf16.mxu0 0
    %4861 = vmatpush2.bf16.msra.mxu0 %v4789
    %4862 = vmatprep.subr.bf16.mxu0 0
    %4863 = vmatpush2.bf16.msra.mxu0 %v4788
    %4864 = vmatprep.subr.bf16.mxu0 0
    %4865 = vmatpush2.bf16.msra.mxu0 %v4787
    %4866 = vmatprep.subr.bf16.mxu0 0
    %4867 = vmatpush2.bf16.msra.mxu0 %v4786
    %4868 = vmatprep.subr.bf16.mxu0 0
    %4869 = vmatpush2.bf16.msra.mxu0 %v4785
    %4870 = vmatprep.subr.bf16.mxu0 0
    %4871 = vmatpush2.bf16.msra.mxu0 %v4784
    %4872 = vmatprep.mubr.bf16.mxu0 %v4645
    %4873 = vmatmul.mubr.bf16.gmra.mxu0 %v4644
    %v4874 = vpop.f32.mrf.mxu0
    %v4875 = vadd.f32 0.0, %v4874
    %v4876 = vpop.f32.mrf.mxu0
    %v4877 = vpop.f32.mrf.mxu0
    %v4878 = vadd.f32 0.0, %v4877
    %v4879 = vpop.f32.mrf.mxu0
    %4880 = vdwg.mxu0
    %4881 = vmatprep.subr.bf16.mxu0 0
    %4882 = vmatpush1.bf16.msra.mxu0 %v4799
    %4883 = vmatprep.subr.bf16.mxu0 0
    %4884 = vmatpush1.bf16.msra.mxu0 %v4798
    %4885 = vmatprep.subr.bf16.mxu0 0
    %4886 = vmatpush1.bf16.msra.mxu0 %v4797
    %4887 = vmatprep.subr.bf16.mxu0 0
    %4888 = vmatpush1.bf16.msra.mxu0 %v4796
    %4889 = vmatprep.subr.bf16.mxu0 0
    %4890 = vmatpush1.bf16.msra.mxu0 %v4795
    %4891 = vmatprep.subr.bf16.mxu0 0
    %4892 = vmatpush1.bf16.msra.mxu0 %v4794
    %4893 = vmatprep.subr.bf16.mxu0 0
    %4894 = vmatpush1.bf16.msra.mxu0 %v4793
    %4895 = vmatprep.subr.bf16.mxu0 0
    %4896 = vmatpush1.bf16.msra.mxu0 %v4792
    %4897 = vmatprep.subr.bf16.mxu0 0
    %4898 = vmatpush2.bf16.msra.mxu0 %v4807
    %4899 = vmatprep.subr.bf16.mxu0 0
    %4900 = vmatpush2.bf16.msra.mxu0 %v4806
    %4901 = vmatprep.subr.bf16.mxu0 0
    %4902 = vmatpush2.bf16.msra.mxu0 %v4805
    %4903 = vmatprep.subr.bf16.mxu0 0
    %4904 = vmatpush2.bf16.msra.mxu0 %v4804
    %4905 = vmatprep.subr.bf16.mxu0 0
    %4906 = vmatpush2.bf16.msra.mxu0 %v4803
    %4907 = vmatprep.subr.bf16.mxu0 0
    %4908 = vmatpush2.bf16.msra.mxu0 %v4802
    %4909 = vmatprep.subr.bf16.mxu0 0
    %4910 = vmatpush2.bf16.msra.mxu0 %v4801
    %4911 = vmatprep.subr.bf16.mxu0 0
    %4912 = vmatpush2.bf16.msra.mxu0 %v4800
    %4913 = vmatprep.mubr.bf16.mxu0 %v4647
    %4914 = vmatmul.mubr.bf16.gmra.mxu0 %v4646
    %v4915 = vpop.f32.mrf.mxu0
    %v4916 = vadd.f32 %v4875, %v4915
    %v4917 = vpop.f32.mrf.mxu0
    %v4918 = vpop.f32.mrf.mxu0
    %v4919 = vadd.f32 %v4878, %v4918
    %v4920 = vpop.f32.mrf.mxu0
    %4921 = vdwg.mxu0
    %v4922 = vadd.f32 %v4916, %v4919
    %v4923 = vrot.slane %v4922, 4
    %v4924 = vadd.f32 %v4922, %v4923
    %v4925 = vrot.slane %v4924, 2
    %v4926 = vadd.f32 %v4924, %v4925
    %v4927 = vrot.slane %v4926, 1
    %v4928 = vadd.f32 %v4926, %v4927
    %v4929 = vmul.f32 %v4928, 0.0625
    %v4930 = vmul.f32 %v4916, %v4916
    %v4931 = vmul.f32 %v4919, %v4919
    %v4932 = vadd.f32 %v4930, %v4931
    %v4933 = vrot.slane %v4932, 4
    %v4934 = vadd.f32 %v4932, %v4933
    %v4935 = vrot.slane %v4934, 2
    %v4936 = vadd.f32 %v4934, %v4935
    %v4937 = vrot.slane %v4936, 1
    %v4938 = vadd.f32 %v4936, %v4937
    %v4939 = vmul.f32 %v4938, 0.0625
    %v4940 = vmul.f32 %v4929, %v4929
    %v4941 = vsub.f32 %v4939, %v4940
    %v4942 = vadd.f32 %v4941, 1e-05
    %v4943 = vrsqrt.pop %v4942
    %v4944 = vmul.f32 %v4642, %v4943
    %v4945 = vmul.f32 %v4929, %v4944
    %v4946 = vsub.f32 %v4643, %v4945
    %v4947 = vmul.f32 %v4916, %v4944
    %v4948 = vmul.f32 %v4919, %v4944
    %v4949 = vadd.f32 %v4947, %v4946
    %v4950 = vadd.f32 %v4948, %v4946
    %v4951 = vmul.f32 %v4949, 0.01
    %v4952 = vmul.f32 %v4950, 0.01
    %v4953 = vmax.f32 %v4949, %v4951
    %v4954 = vmax.f32 %v4950, %v4952
    %s4955 = smul.u32 4, 16
    %s4956 = smul.u32 %s4955, 1
    %s4957 = sshll.u32 %s4956, 4
    %4958 = dma.done %s81, %s4957
    %v4959 = vpack.c.bf16 %v4954, %v4953
    %v4960 = vld [vmem:[#allocation4] sm:$0xf]
    %v4961 = vld [vmem:[#allocation4 + $0x4] sm:$0xf]
    %v4962 = vld [vmem:[#allocation4 + $0x8] sm:$0xf]
    %v4963 = vld [vmem:[#allocation4 + $0xc] sm:$0xf]
    %v4964 = vld [vmem:[#allocation4 + $0x10] sm:$0xf]
    %v4965 = vld [vmem:[#allocation4 + $0x14] sm:$0xf]
    %v4966 = vld [vmem:[#allocation4 + $0x18] sm:$0xf]
    %v4967 = vld [vmem:[#allocation4 + $0x1c] sm:$0xf]
    %v4968 = vld [vmem:[#allocation4 + $0x20] sm:$0xf]
    %v4969 = vld [vmem:[#allocation4 + $0x24] sm:$0xf]
    %v4970 = vld [vmem:[#allocation4 + $0x28] sm:$0xf]
    %v4971 = vld [vmem:[#allocation4 + $0x2c] sm:$0xf]
    %v4972 = vld [vmem:[#allocation4 + $0x30] sm:$0xf]
    %v4973 = vld [vmem:[#allocation4 + $0x34] sm:$0xf]
    %v4974 = vld [vmem:[#allocation4 + $0x38] sm:$0xf]
    %v4975 = vld [vmem:[#allocation4 + $0x3c] sm:$0xf]
    %v4976 = vld [vmem:[#allocation11 + $0x6] ss:$0 sm:$0xff]
    %v4993 = vunpack.c.l.b16 %v4960
    %v4994 = vunpack.c.l.b16 %v4961
    %v4995 = vunpack.c.l.b16 %v4962
    %v4996 = vunpack.c.l.b16 %v4963
    %v4997 = vunpack.c.l.b16 %v4964
    %v4998 = vunpack.c.l.b16 %v4965
    %v4999 = vunpack.c.l.b16 %v4966
    %v5000 = vunpack.c.l.b16 %v4967
    %v5001 = vunpack.c.l.b16 %v4968
    %v5002 = vunpack.c.l.b16 %v4969
    %v5003 = vunpack.c.l.b16 %v4970
    %v5004 = vunpack.c.l.b16 %v4971
    %v5005 = vunpack.c.l.b16 %v4972
    %v5006 = vunpack.c.l.b16 %v4973
    %v5007 = vunpack.c.l.b16 %v4974
    %v5008 = vunpack.c.l.b16 %v4975
    %v5009 = vpack.c.b16 %v4994, %v4993
    %v5010 = vpack.c.b16 %v4996, %v4995
    %v5011 = vpack.c.b16 %v4998, %v4997
    %v5012 = vpack.c.b16 %v5000, %v4999
    %v5013 = vpack.c.b16 %v5002, %v5001
    %v5014 = vpack.c.b16 %v5004, %v5003
    %v5015 = vpack.c.b16 %v5006, %v5005
    %v5016 = vpack.c.b16 %v5008, %v5007
    %5025 = vmatprep.subr.bf16.mxu0 0
    %5026 = vmatpush1.bf16.msra.mxu0 %v5016
    %5027 = vmatprep.subr.bf16.mxu0 0
    %5028 = vmatpush1.bf16.msra.mxu0 %v5015
    %5029 = vmatprep.subr.bf16.mxu0 0
    %5030 = vmatpush1.bf16.msra.mxu0 %v5014
    %5031 = vmatprep.subr.bf16.mxu0 0
    %5032 = vmatpush1.bf16.msra.mxu0 %v5013
    %5033 = vmatprep.subr.bf16.mxu0 0
    %5034 = vmatpush1.bf16.msra.mxu0 %v5012
    %5035 = vmatprep.subr.bf16.mxu0 0
    %5036 = vmatpush1.bf16.msra.mxu0 %v5011
    %5037 = vmatprep.subr.bf16.mxu0 0
    %5038 = vmatpush1.bf16.msra.mxu0 %v5010
    %5039 = vmatprep.subr.bf16.mxu0 0
    %5040 = vmatpush1.bf16.msra.mxu0 %v5009
    %5041 = vmatprep.subr.bf16.mxu0 0
    %5042 = vmatpush2.bf16.msra.mxu0 0
    %5043 = vmatprep.subr.bf16.mxu0 0
    %5044 = vmatpush2.bf16.msra.mxu0 0
    %5045 = vmatprep.subr.bf16.mxu0 0
    %5046 = vmatpush2.bf16.msra.mxu0 0
    %5047 = vmatprep.subr.bf16.mxu0 0
    %5048 = vmatpush2.bf16.msra.mxu0 0
    %5049 = vmatprep.subr.bf16.mxu0 0
    %5050 = vmatpush2.bf16.msra.mxu0 0
    %5051 = vmatprep.subr.bf16.mxu0 0
    %5052 = vmatpush2.bf16.msra.mxu0 0
    %5053 = vmatprep.subr.bf16.mxu0 0
    %5054 = vmatpush2.bf16.msra.mxu0 0
    %5055 = vmatprep.subr.bf16.mxu0 0
    %5056 = vmatpush2.bf16.msra.mxu0 0
    %5057 = vmatprep.mubr.bf16.mxu0 0
    %5058 = vmatmul.mubr.bf16.gmra.mxu0 %v4959
    %v5059 = vpop.f32.mrf.mxu0
    %v5060 = vadd.f32 %v4976, %v5059
    %v5061 = vpop.f32.mrf.mxu0
    %v5062 = vpop.f32.mrf.mxu0
    %v5063 = vadd.f32 %v4976, %v5062
    %v5064 = vpop.f32.mrf.mxu0
    %5065 = vdwg.mxu0
    %5066 = vmax.xlane.f32.xlu0 %v5060
    %v5067 = vpop.xlane.xlu0 %5066
    %5068 = vmax.xlane.f32.xlu0 %v5063
    %v5069 = vpop.xlane.xlu0 %5068
    %v5070 = vsub.f32 %v5060, %v5067
    %v5071 = vsub.f32 %v5063, %v5069
    %v5072 = vmul.f32 %v5070, 1.442695
    %v5073 = vpow.pop %v5072
    %v5074 = vmul.f32 %v5071, 1.442695
    %v5075 = vpow.pop %v5074
    %5076 = vadd.xlane.f32.xlu0 %v5073
    %v5077 = vpop.xlane.xlu0 %5076
    %5078 = vadd.xlane.f32.xlu0 %v5075
    %v5079 = vpop.xlane.xlu0 %5078
    %v5080 = vrcp.pop %v5077
    %v5081 = vrcp.pop %v5079
    %v5082 = vmul.f32 %v5073, %v5080
    %v5083 = vmul.f32 %v5075, %v5081
    %5084 = vst [vmem:[#allocation12] sm:$0xff] %v5082
    %5085 = vst [vmem:[#allocation12 + $0x8] sm:$0xff] %v5083
    // Predicated region
    $region38: #{tpu_custom_call.1} parent=1 // pred_check
      _
    $region39: #{tpu_custom_call.1} parent=1 // pred_check_branch
      %5087 = sbr.rel (0) target = $region41
    $region40: #{tpu_custom_call.1} parent=1 // pred_region
      %s5089 = ssub.s32 256, 256
      %5090 = vsyncadd [#allocation8], %s5089
      %s5091 = sshll.u32 [#allocation12], 4
      %s5092 = int_to_ptr.vmem [resolvable:$true] %s5091
      %5097 = dma.vmem_to_hbm [thread:$0]  %s5092, 256, %s6, [#allocation8], 128, 128, 8
    $region41: #{tpu_custom_call.1} parent=1 // pred_fallthru
      _
    // Predicated region
    $region42: #{tpu_custom_call.1} parent=1 // pred_check
      _
    $region43: #{tpu_custom_call.1} parent=1 // pred_check_branch
      %5099 = sbr.rel (0) target = $region45
    $region44: #{tpu_custom_call.1} parent=1 // pred_region
      %5100 = dma.done [#allocation8], 256
    $region45: #{tpu_custom_call.1} parent=1 // pred_fallthru
      _
    %5101 = vsyncpa [#allocation7], 1
    %5102 = vsyncpa [#allocation10], 1
    %5103 = vsyncpa [#allocation8], 1
  %5104 = vsyncmov [#allocation5]
  %s5105 = vpop.sfrf %5104
  %p5106 = scmp.eq.s32.totalorder %s5105, 0
  %p5107 = pneg %p5106
  %5109 = shalt.err (%p5107)
  %s5110 = scalar_lea.sflag [#allocation5], 1
  %5111 = vsyncmov %s5110
  %s5112 = vpop.sfrf %5111
  %p5113 = scmp.eq.s32.totalorder %s5112, 0
  %p5114 = pneg %p5113
  %5116 = shalt.err (%p5114)
  %s5117 = scalar_lea.sflag [#allocation5], 2
  %5118 = vsyncmov %s5117
  %s5119 = vpop.sfrf %5118
  %p5120 = scmp.eq.s32.totalorder %s5119, 0
  %p5121 = pneg %p5120
  %5123 = shalt.err (%p5121)

</llo_original>
